<compile_context>
chip_gen: v5e
topology: v5e:2x2
jax: 0.10.0
libtpu: 0.0.40
codegen_flags: <defaults>
</compile_context>

<pallas_src>
import functools
import math

import jax
import jax.numpy as jnp
from jax.experimental import pallas as pl
from jax.experimental.pallas import tpu as pltpu

EPS = 1e-5        # torch.nn.LayerNorm default eps
NEG_INF = -1e30   # additive causal mask value (finite -> no NaN hazard)
MIB = 1 << 20


def _round_up(n, m):
    return ((n + m - 1) // m) * m


def _layernorm(x, gamma, beta):
    # x: (..., C) f32, gamma/beta: (1, C) f32 (broadcast from the right)
    mu = jnp.mean(x, axis=-1, keepdims=True)
    var = jnp.mean(jnp.square(x - mu), axis=-1, keepdims=True)
    return (x - mu) * jax.lax.rsqrt(var + EPS) * gamma + beta


# --------------------------------------------------------------------------
# Fused transformer blocks (+ final LayerNorm)
# --------------------------------------------------------------------------
def gpt_blocks_kernel(n_head,
                      mask_ref, x_ref,
                      g1_ref, b1_ref, wqkv_ref, wp_ref, bp_ref,
                      g2_ref, b2_ref, w1_ref, bf1_ref, w2_ref, bf2_ref,
                      gf_ref, bf_ref,
                      o_ref, acc_ref):
    """grid = (B // B_chunk, n_layer); layer axis innermost ("arbitrary").
    acc_ref is a VMEM scratch holding the f32 activation resident across
    layers; o_ref (bf16, ln_f-normalized) is written only at the last layer."""
    layer = pl.program_id(1)
    n_layer = pl.num_programs(1)

    @pl.when(layer == 0)
    def _():
        acc_ref[...] = x_ref[...]        # fresh embeddings for this batch chunk

    x = acc_ref[...]                     # (Bc, T, C) f32, resident across layers
    Bc, T, C = x.shape
    hs = C // n_head
    scale = hs ** -0.5
    mask = mask_ref[...]                 # (T, T) additive causal mask, f32

    # ---------------- self-attention branch (pre-LN) ----------------
    h = _layernorm(x, g1_ref[0], b1_ref[0]).astype(jnp.bfloat16).reshape(Bc * T, C)
    # fused QKV projection on the whole (Bc*T, C) slab: one wide MXU pass
    qkv = jnp.dot(h, wqkv_ref[0], preferred_element_type=jnp.float32)  # (Bc*T, 3C)
    q = qkv[:, 0 * C:1 * C] * scale      # fold 1/sqrt(hs) into q
    k = qkv[:, 1 * C:2 * C]
    v = qkv[:, 2 * C:3 * C]

    def to_heads(a2d, b):                # row b: (T, C) -> (n_head, T, hs) bf16
        a = a2d[b * T:(b + 1) * T, :]
        return jnp.transpose(a.reshape(T, n_head, hs), (1, 0, 2)).astype(jnp.bfloat16)

    # TODO(synk): for long context (T ~ 1024+) chunk the KV axis with an
    # online softmax instead of materializing full (n_head, T, T) scores
    # (required to fit v7x's 64 MiB VMEM).
    outs = []
    for b in range(Bc):                  # short static loop over batch rows
        qh, kh, vh = to_heads(q, b), to_heads(k, b), to_heads(v, b)
        s = jnp.einsum('hqd,hkd->hqk', qh, kh,
                       preferred_element_type=jnp.float32)            # (h, T, T)
        s = s + mask[None, :, :]
        m = jnp.max(s, axis=-1, keepdims=True)
        p = jnp.exp(s - m)                                             # EUP
        p = p * pl.reciprocal(jnp.sum(p, axis=-1, keepdims=True), approx=True)
        att = jnp.einsum('hqk,hkd->hqd', p.astype(jnp.bfloat16), vh,
                         preferred_element_type=jnp.float32)           # (h, T, hs)
        outs.append(jnp.transpose(att, (1, 0, 2)).reshape(T, C))
    att_all = jnp.concatenate(outs, axis=0) if Bc > 1 else outs[0]     # (Bc*T, C)

    sa = jnp.dot(att_all.astype(jnp.bfloat16), wp_ref[0],
                 preferred_element_type=jnp.float32) + bp_ref[0]
    x = x + sa.reshape(Bc, T, C)                                       # residual

    # ---------------- feed-forward branch (pre-LN) ----------------
    h2 = _layernorm(x, g2_ref[0], b2_ref[0]).astype(jnp.bfloat16).reshape(Bc * T, C)
    ff = jnp.dot(h2, w1_ref[0], preferred_element_type=jnp.float32) + bf1_ref[0]
    ff = jnp.maximum(ff, 0.0).astype(jnp.bfloat16)                     # ReLU
    ff = jnp.dot(ff, w2_ref[0], preferred_element_type=jnp.float32) + bf2_ref[0]
    x = x + ff.reshape(Bc, T, C)                                       # residual

    acc_ref[...] = x                     # stays resident for the next layer

    @pl.when(layer == n_layer - 1)
    def _():
        # fused final LayerNorm; emit bf16 so lm_head input DMA is halved
        # and ln_f is computed exactly once per token.
        o_ref[...] = _layernorm(x, gf_ref[...], bf_ref[...]).astype(jnp.bfloat16)


def run_blocks(x, mask, blk_params, final_ln, n_head, n_layer, b_chunk=None):
    """x: (B, T, C) f32; blk_params: per-layer arrays stacked on axis 0.
    Returns the ln_f-normalized activation in bf16, shape (B, T, C)."""
    B, T, C = x.shape
    if b_chunk is None:
        b_chunk = B                      # single chunk: weights stream once/layer.
    assert B % b_chunk == 0              # (use >=2 chunks on v7x to feed both TCs)
    n_bc = B // b_chunk
    gf, bf = final_ln

    def wspec(p):
        # one layer's slice per grid step; double-buffered along the layer
        # axis so layer l+1 weights DMA while layer l computes.
        # (on v5e, if DMA is exposed, pipeline_mode=pl.Buffered(3) has headroom)
        return pl.BlockSpec((1,) + p.shape[1:], lambda bc, l: (l, 0, 0))

    # explicit VMEM budget sized from the working set (clamped for v7x's 64 MiB)
    weight_bytes = sum(int(math.prod(p.shape[1:])) * p.dtype.itemsize
                       for p in blk_params)
    act_bytes = b_chunk * T * C * 4
    attn_bytes = b_chunk * n_head * T * T * 4
    est = (2 * weight_bytes              # double-buffered per-layer weights
           + 2 * act_bytes               # input block + resident accumulator
           + 8 * act_bytes               # qkv / ffwd intermediates (rough)
           + 3 * attn_bytes              # scores / probs temporaries
           + 2 * b_chunk * T * C * 2)    # bf16 output block
    vmem_limit = int(min(max(est * 3 // 2, 32 * MIB), 64 * MIB))

    return pl.pallas_call(
        functools.partial(gpt_blocks_kernel, n_head),
        out_shape=jax.ShapeDtypeStruct((B, T, C), jnp.bfloat16),
        grid=(n_bc, n_layer),
        in_specs=[pl.BlockSpec((T, T), lambda bc, l: (0, 0)),            # causal mask
                  pl.BlockSpec((b_chunk, T, C), lambda bc, l: (bc, 0, 0))]
                 + [wspec(p) for p in blk_params]
                 + [pl.BlockSpec((1, C), lambda bc, l: (0, 0)),          # ln_f gamma
                    pl.BlockSpec((1, C), lambda bc, l: (0, 0))],         # ln_f beta
        out_specs=pl.BlockSpec((b_chunk, T, C), lambda bc, l: (bc, 0, 0)),
        scratch_shapes=[pltpu.VMEM((b_chunk, T, C), jnp.float32)],
        compiler_params=pltpu.CompilerParams(
            dimension_semantics=("parallel", "arbitrary"),
            vmem_limit_bytes=vmem_limit),
    )(mask, x, *blk_params, gf, bf)


# --------------------------------------------------------------------------
# lm_head (input already ln_f-normalized, bf16)
# --------------------------------------------------------------------------
def lm_head_kernel(x_ref, wlm_ref, blm_ref, o_ref):
    o_ref[...] = (jnp.dot(x_ref[...], wlm_ref[...],
                          preferred_element_type=jnp.float32) + blm_ref[...])


def run_lm_head(xn, head_params, vocab_size):
    wlm, blm = head_params               # wlm: (C, V_pad) bf16, blm: (1, V_pad) f32
    B, T, C = xn.shape
    V_pad = wlm.shape[1]

    BT = B * T
    TILE_M = min(512, _round_up(BT, 8))
    M_pad = _round_up(BT, TILE_M)
    xm = xn.reshape(BT, C)
    if M_pad != BT:
        xm = jnp.pad(xm, ((0, M_pad - BT), (0, 0)))

    TILE_V = 128
    for cand in (2048, 1024, 512, 256, 128):
        if V_pad % cand == 0:
            TILE_V = cand
            break

    # explicit VMEM budget (double-buffered blocks), clamped for v7x
    est = 2 * (TILE_M * C * 2 + C * TILE_V * 2 + TILE_M * TILE_V * 4) + 2 * TILE_V * 4
    vmem_limit = int(min(max(est * 2, 32 * MIB), 64 * MIB))

    # vocab axis OUTER, row axis INNER: each (C, TILE_V) weight tile is loaded
    # exactly once; only the small bf16 activation slab is revisited.
    logits = pl.pallas_call(
        lm_head_kernel,
        out_shape=jax.ShapeDtypeStruct((M_pad, V_pad), jnp.float32),
        grid=(V_pad // TILE_V, M_pad // TILE_M),
        in_specs=[
            pl.BlockSpec((TILE_M, C), lambda v, m: (m, 0)),
            pl.BlockSpec((C, TILE_V), lambda v, m: (0, v)),
            pl.BlockSpec((1, TILE_V), lambda v, m: (0, v)),
        ],
        out_specs=pl.BlockSpec((TILE_M, TILE_V), lambda v, m: (m, v)),
        compiler_params=pltpu.CompilerParams(
            dimension_semantics=("parallel", "parallel"),
            vmem_limit_bytes=vmem_limit),
    )(xm, wlm, blm)
    return logits[:BT, :vocab_size].reshape(B, T, vocab_size)


# --------------------------------------------------------------------------
# Parameters & forward
# --------------------------------------------------------------------------
def init_params(key, *, vocab_size, block_size, n_embd, n_head, n_layer):
    """Deterministic synthetic init mirroring _init_weights:
       Linear/Embedding weights ~ N(0, 0.02), biases zero, LayerNorm g=1 b=0.
       Matmul weights stored bf16 and pre-transposed as (in, out); per-layer
       weights stacked with a leading n_layer axis for the fused-blocks kernel."""
    C = n_embd
    k_tok, k_pos, k_qkv, k_proj, k_w1, k_w2, k_lm = jax.random.split(key, 7)

    def nrm(k, shape, dtype=jnp.bfloat16):
        return (0.02 * jax.random.normal(k, shape, dtype=jnp.float32)).astype(dtype)

    V_pad = _round_up(vocab_size, 128)                 # lane-dense lm_head output
    wlm = jnp.zeros((C, V_pad), jnp.bfloat16).at[:, :vocab_size].set(
        nrm(k_lm, (C, vocab_size)))

    blocks = [
        jnp.ones((n_layer, 1, C), jnp.float32),        # ln1 gamma
        jnp.zeros((n_layer, 1, C), jnp.float32),       # ln1 beta
        nrm(k_qkv, (n_layer, C, 3 * C)),               # fused Wqkv (bf16) [Q|K|V]
        nrm(k_proj, (n_layer, C, C)),                  # Wproj (bf16)
        jnp.zeros((n_layer, 1, C), jnp.float32),       # bproj
        jnp.ones((n_layer, 1, C), jnp.float32),        # ln2 gamma
        jnp.zeros((n_layer, 1, C), jnp.float32),       # ln2 beta
        nrm(k_w1, (n_layer, C, 4 * C)),                # ffwd W1 (bf16)
        jnp.zeros((n_layer, 1, 4 * C), jnp.float32),   # ffwd b1
        nrm(k_w2, (n_layer, 4 * C, C)),                # ffwd W2 (bf16)
        jnp.zeros((n_layer, 1, C), jnp.float32),       # ffwd b2
    ]
    final_ln = (jnp.ones((1, C), jnp.float32),         # ln_f gamma
                jnp.zeros((1, C), jnp.float32))        # ln_f beta
    lm_head = (wlm,                                    # lm_head W (bf16, padded)
               jnp.zeros((1, V_pad), jnp.float32))     # lm_head b (padded)
    return {"n_head": n_head, "n_layer": n_layer, "vocab_size": vocab_size,
            "tok_emb": nrm(k_tok, (vocab_size, C), jnp.float32),
            "pos_emb": nrm(k_pos, (block_size, C), jnp.float32),
            "blocks": blocks, "final_ln": final_ln, "lm_head": lm_head}


def gpt_forward(idx, params):
    """idx: (B, T) int32 token ids. Returns (logits (B,T,V), loss=None)."""
    B, T = idx.shape
    tok_emb = jnp.take(params["tok_emb"], idx, axis=0)    # (B, T, C) JAX-glue gather
    pos_emb = params["pos_emb"][:T]
    x = (tok_emb + pos_emb[None, :, :]).astype(jnp.float32)

    # additive causal mask, built once in the wrapper (hoisted out of the kernel)
    t = jnp.arange(T)
    mask = jnp.where(t[:, None] >= t[None, :], 0.0, NEG_INF).astype(jnp.float32)

    xn = run_blocks(x, mask, params["blocks"], params["final_ln"],
                    params["n_head"], params["n_layer"])
    logits = run_lm_head(xn, params["lm_head"], params["vocab_size"])
    # TODO(synk): cross-entropy loss path (targets is not None) not implemented here.
    return logits, None


if __name__ == "__main__":
    # small config consistent with the module's structure
    vocab_size = 65     # e.g. Shakespeare char vocab
    n_embd = 128        # lane-aligned C so QKV slices stay on 128-lane boundaries
    n_head = 4
    n_layer = 2
    block_size = 16
    B, T = 2, 8

    key = jax.random.PRNGKey(0)
    pkey, dkey = jax.random.split(key)
    params = init_params(pkey, vocab_size=vocab_size, block_size=block_size,
                         n_embd=n_embd, n_head=n_head, n_layer=n_layer)
    idx = jax.random.randint(dkey, (B, T), 0, vocab_size, dtype=jnp.int32)

    logits, loss = gpt_forward(idx, params)
    logits = jax.block_until_ready(logits)
    assert logits.shape == (B, T, vocab_size)
    assert bool(jnp.all(jnp.isfinite(logits)))
    print("KERNEL_OK")
</pallas_src>

<mosaic_0001>
module attributes {stable_mosaic.version = 11 : i64} {
  func.func @gpt_blocks_kernel(%arg0: i32, %arg1: i32, %arg2: memref<8x8xf32, #tpu.memory_space<vmem>>, %arg3: memref<2x8x128xf32, #tpu.memory_space<vmem>>, %arg4: memref<1x1x128xf32, #tpu.memory_space<vmem>>, %arg5: memref<1x1x128xf32, #tpu.memory_space<vmem>>, %arg6: memref<1x128x384xbf16, #tpu.memory_space<vmem>>, %arg7: memref<1x128x128xbf16, #tpu.memory_space<vmem>>, %arg8: memref<1x1x128xf32, #tpu.memory_space<vmem>>, %arg9: memref<1x1x128xf32, #tpu.memory_space<vmem>>, %arg10: memref<1x1x128xf32, #tpu.memory_space<vmem>>, %arg11: memref<1x128x512xbf16, #tpu.memory_space<vmem>>, %arg12: memref<1x1x512xf32, #tpu.memory_space<vmem>>, %arg13: memref<1x512x128xbf16, #tpu.memory_space<vmem>>, %arg14: memref<1x1x128xf32, #tpu.memory_space<vmem>>, %arg15: memref<1x128xf32, #tpu.memory_space<vmem>>, %arg16: memref<1x128xf32, #tpu.memory_space<vmem>>, %arg17: memref<2x8x128xbf16, #tpu.memory_space<vmem>>, %arg18: memref<2x8x128xf32, #tpu.memory_space<vmem>>) attributes {dimension_semantics = [#tpu.dimension_semantics<parallel>, #tpu.dimension_semantics<arbitrary>], iteration_bounds = array<i64: 1, 2>, scalar_prefetch = 0 : i64, scratch_operands = 1 : i64, tpu.core_type = #tpu.core_type<tc>, window_params = [{pipeline_mode = #tpu.pipeline_mode<synchronous>, transform_indices = @transform_0, window_bounds = array<i64: 8, 8>}, {transform_indices = @transform_1, window_bounds = array<i64: 2, 8, 128>}, {transform_indices = @transform_2, window_bounds = array<i64: 1, 1, 128>}, {transform_indices = @transform_3, window_bounds = array<i64: 1, 1, 128>}, {transform_indices = @transform_4, window_bounds = array<i64: 1, 128, 384>}, {transform_indices = @transform_5, window_bounds = array<i64: 1, 128, 128>}, {transform_indices = @transform_6, window_bounds = array<i64: 1, 1, 128>}, {transform_indices = @transform_7, window_bounds = array<i64: 1, 1, 128>}, {transform_indices = @transform_8, window_bounds = array<i64: 1, 1, 128>}, {transform_indices = @transform_9, window_bounds = array<i64: 1, 128, 512>}, {transform_indices = @transform_10, window_bounds = array<i64: 1, 1, 512>}, {transform_indices = @transform_11, window_bounds = array<i64: 1, 512, 128>}, {transform_indices = @transform_12, window_bounds = array<i64: 1, 1, 128>}, {pipeline_mode = #tpu.pipeline_mode<synchronous>, transform_indices = @transform_13, window_bounds = array<i64: 1, 128>}, {pipeline_mode = #tpu.pipeline_mode<synchronous>, transform_indices = @transform_14, window_bounds = array<i64: 1, 128>}, {transform_indices = @transform_15, window_bounds = array<i64: 2, 8, 128>}]} {
    %c0_i32 = arith.constant 0 : i32
    %0 = arith.cmpi eq, %arg1, %c0_i32 : i32
    %1 = arith.extui %0 : i1 to i32
    %c0_i32_0 = arith.constant 0 : i32
    %2 = arith.cmpi ne, %1, %c0_i32_0 : i32
    scf.if %2 {
      %c0_65 = arith.constant 0 : index
      %c0_66 = arith.constant 0 : index
      %c0_67 = arith.constant 0 : index
      %167 = vector.load %arg3[%c0_65, %c0_66, %c0_67] : memref<2x8x128xf32, #tpu.memory_space<vmem>>, vector<2x8x128xf32>
      %c0_68 = arith.constant 0 : index
      %c0_69 = arith.constant 0 : index
      %c0_70 = arith.constant 0 : index
      %168 = vector.load %arg18[%c0_68, %c0_69, %c0_70] : memref<2x8x128xf32, #tpu.memory_space<vmem>>, vector<2x8x128xf32>
      tpu.vector_store %arg18[%c0_68, %c0_69, %c0_70], %167 {strides = array<i32>} : memref<2x8x128xf32, #tpu.memory_space<vmem>>, vector<2x8x128xf32>,
    } else {
    }
    %c0 = arith.constant 0 : index
    %c0_1 = arith.constant 0 : index
    %c0_2 = arith.constant 0 : index
    %3 = vector.load %arg18[%c0, %c0_1, %c0_2] : memref<2x8x128xf32, #tpu.memory_space<vmem>>, vector<2x8x128xf32>
    %c0_3 = arith.constant 0 : index
    %c0_4 = arith.constant 0 : index
    %4 = vector.load %arg2[%c0_3, %c0_4] : memref<8x8xf32, #tpu.memory_space<vmem>>, vector<8x8xf32>
    %c0_5 = arith.constant 0 : index
    %c0_6 = arith.constant 0 : index
    %c0_7 = arith.constant 0 : index
    %5 = vector.load %arg4[%c0_5, %c0_6, %c0_7] : memref<1x1x128xf32, #tpu.memory_space<vmem>>, vector<1x1x128xf32>
    %6 = vector.shape_cast %5 : vector<1x1x128xf32> to vector<1x128xf32>
    %c0_8 = arith.constant 0 : index
    %c0_9 = arith.constant 0 : index
    %c0_10 = arith.constant 0 : index
    %7 = vector.load %arg5[%c0_8, %c0_9, %c0_10] : memref<1x1x128xf32, #tpu.memory_space<vmem>>, vector<1x1x128xf32>
    %8 = vector.shape_cast %7 : vector<1x1x128xf32> to vector<1x128xf32>
    %cst = arith.constant dense<0.000000e+00> : vector<2x8xf32>
    %9 = vector.multi_reduction <add>, %3, %cst [2] : vector<2x8x128xf32> to vector<2x8xf32>
    %10 = vector.shape_cast %9 : vector<2x8xf32> to vector<2x8x1xf32>
    %cst_11 = arith.constant 1.280000e+02 : f32
    %11 = vector.broadcast %cst_11 : f32 to vector<2x8x1xf32>
    %12 = arith.divf %10, %11 : vector<2x8x1xf32>
    %13 = vector.broadcast %12 : vector<2x8x1xf32> to vector<2x8x128xf32>
    %14 = arith.subf %3, %13 : vector<2x8x128xf32>
    %15 = arith.mulf %14, %14 : vector<2x8x128xf32>
    %cst_12 = arith.constant dense<0.000000e+00> : vector<2x8xf32>
    %16 = vector.multi_reduction <add>, %15, %cst_12 [2] : vector<2x8x128xf32> to vector<2x8xf32>
    %17 = vector.shape_cast %16 : vector<2x8xf32> to vector<2x8x1xf32>
    %cst_13 = arith.constant 1.280000e+02 : f32
    %18 = vector.broadcast %cst_13 : f32 to vector<2x8x1xf32>
    %19 = arith.divf %17, %18 : vector<2x8x1xf32>
    %20 = vector.broadcast %12 : vector<2x8x1xf32> to vector<2x8x128xf32>
    %21 = arith.subf %3, %20 : vector<2x8x128xf32>
    %cst_14 = arith.constant 9.99999974E-6 : f32
    %22 = vector.broadcast %cst_14 : f32 to vector<2x8x1xf32>
    %23 = arith.addf %19, %22 : vector<2x8x1xf32>
    %24 = math.rsqrt %23 : vector<2x8x1xf32>
    %25 = vector.broadcast %24 : vector<2x8x1xf32> to vector<2x8x128xf32>
    %26 = arith.mulf %21, %25 : vector<2x8x128xf32>
    %27 = vector.shape_cast %6 : vector<1x128xf32> to vector<1x1x128xf32>
    %28 = vector.broadcast %27 : vector<1x1x128xf32> to vector<2x8x128xf32>
    %29 = arith.mulf %26, %28 : vector<2x8x128xf32>
    %30 = vector.shape_cast %8 : vector<1x128xf32> to vector<1x1x128xf32>
    %31 = vector.broadcast %30 : vector<1x1x128xf32> to vector<2x8x128xf32>
    %32 = arith.addf %29, %31 : vector<2x8x128xf32>
    %33 = arith.truncf %32 : vector<2x8x128xf32> to vector<2x8x128xbf16>
    %34 = vector.shape_cast %33 : vector<2x8x128xbf16> to vector<16x128xbf16>
    %c0_15 = arith.constant 0 : index
    %c0_16 = arith.constant 0 : index
    %c0_17 = arith.constant 0 : index
    %35 = vector.load %arg6[%c0_15, %c0_16, %c0_17] : memref<1x128x384xbf16, #tpu.memory_space<vmem>>, vector<1x128x384xbf16>
    %36 = vector.shape_cast %35 : vector<1x128x384xbf16> to vector<128x384xbf16>
    %cst_18 = arith.constant dense<0.000000e+00> : vector<16x384xf32>
    %37 = tpu.matmul %34, %36, %cst_18 {dimension_numbers = #tpu.dot_dimension_numbers<[1], [0], [0], [1], [0, 0, 1, 1], [], []>} : vector<16x128xbf16>, vector<128x384xbf16>, vector<16x384xf32> -> vector<16x384xf32>
    %38 = vector.extract_strided_slice %37 {offsets = [0, 0], sizes = [16, 128], strides = [1, 1]} : vector<16x384xf32> to vector<16x128xf32>
    %cst_19 = arith.constant 0.176776692 : f32
    %39 = vector.broadcast %cst_19 : f32 to vector<16x128xf32>
    %40 = arith.mulf %38, %39 : vector<16x128xf32>
    %41 = vector.extract_strided_slice %37 {offsets = [0, 128], sizes = [16, 128], strides = [1, 1]} : vector<16x384xf32> to vector<16x128xf32>
    %42 = vector.extract_strided_slice %37 {offsets = [0, 256], sizes = [16, 128], strides = [1, 1]} : vector<16x384xf32> to vector<16x128xf32>
    %43 = vector.extract_strided_slice %40 {offsets = [0, 0], sizes = [8, 128], strides = [1, 1]} : vector<16x128xf32> to vector<8x128xf32>
    %44 = vector.shape_cast %43 : vector<8x128xf32> to vector<8x4x32xf32>
    %45 = tpu.transpose %44, [1, 0, 2] : vector<8x4x32xf32> -> vector<4x8x32xf32>
    %46 = arith.truncf %45 : vector<4x8x32xf32> to vector<4x8x32xbf16>
    %47 = vector.extract_strided_slice %41 {offsets = [0, 0], sizes = [8, 128], strides = [1, 1]} : vector<16x128xf32> to vector<8x128xf32>
    %48 = vector.shape_cast %47 : vector<8x128xf32> to vector<8x4x32xf32>
    %49 = tpu.transpose %48, [1, 0, 2] : vector<8x4x32xf32> -> vector<4x8x32xf32>
    %50 = arith.truncf %49 : vector<4x8x32xf32> to vector<4x8x32xbf16>
    %51 = vector.extract_strided_slice %42 {offsets = [0, 0], sizes = [8, 128], strides = [1, 1]} : vector<16x128xf32> to vector<8x128xf32>
    %52 = vector.shape_cast %51 : vector<8x128xf32> to vector<8x4x32xf32>
    %53 = tpu.transpose %52, [1, 0, 2] : vector<8x4x32xf32> -> vector<4x8x32xf32>
    %54 = arith.truncf %53 : vector<4x8x32xf32> to vector<4x8x32xbf16>
    "tpu.trace_start"() <{level = 10 : i32, message = "hqd,hkd->hqk"}> : () -> ()
    %cst_20 = arith.constant dense<0.000000e+00> : vector<4x8x8xf32>
    %55 = tpu.matmul %46, %50, %cst_20 {dimension_numbers = #tpu.dot_dimension_numbers<[2], [2], [1], [1], [0, 0, 0, 1, 1, 1], [0], [0]>} : vector<4x8x32xbf16>, vector<4x8x32xbf16>, vector<4x8x8xf32> -> vector<4x8x8xf32>
    "tpu.trace_stop"() : () -> ()
    %56 = vector.shape_cast %4 : vector<8x8xf32> to vector<1x8x8xf32>
    %57 = vector.broadcast %56 : vector<1x8x8xf32> to vector<4x8x8xf32>
    %58 = arith.addf %55, %57 : vector<4x8x8xf32>
    %cst_21 = arith.constant dense<0xFF800000> : vector<4x8xf32>
    %59 = vector.multi_reduction <maximumf>, %58, %cst_21 [2] : vector<4x8x8xf32> to vector<4x8xf32>
    %60 = vector.shape_cast %59 : vector<4x8xf32> to vector<4x8x1xf32>
    %61 = vector.broadcast %60 : vector<4x8x1xf32> to vector<4x8x8xf32>
    %62 = arith.subf %58, %61 : vector<4x8x8xf32>
    %63 = math.exp %62 : vector<4x8x8xf32>
    %cst_22 = arith.constant dense<0.000000e+00> : vector<4x8xf32>
    %64 = vector.multi_reduction <add>, %63, %cst_22 [2] : vector<4x8x8xf32> to vector<4x8xf32>
    %65 = vector.shape_cast %64 : vector<4x8xf32> to vector<4x8x1xf32>
    %66 = tpu.reciprocal %65 {approx = true} : vector<4x8x1xf32> -> vector<4x8x1xf32>
    %67 = vector.broadcast %66 : vector<4x8x1xf32> to vector<4x8x8xf32>
    %68 = arith.mulf %63, %67 : vector<4x8x8xf32>
    %69 = arith.truncf %68 : vector<4x8x8xf32> to vector<4x8x8xbf16>
    "tpu.trace_start"() <{level = 10 : i32, message = "hqk,hkd->hqd"}> : () -> ()
    %cst_23 = arith.constant dense<0.000000e+00> : vector<4x8x32xf32>
    %70 = tpu.matmul %69, %54, %cst_23 {dimension_numbers = #tpu.dot_dimension_numbers<[2], [1], [1], [2], [0, 0, 0, 1, 1, 2], [0], [0]>} : vector<4x8x8xbf16>, vector<4x8x32xbf16>, vector<4x8x32xf32> -> vector<4x8x32xf32>
    "tpu.trace_stop"() : () -> ()
    %71 = tpu.transpose %70, [1, 0, 2] : vector<4x8x32xf32> -> vector<8x4x32xf32>
    %72 = vector.shape_cast %71 : vector<8x4x32xf32> to vector<8x128xf32>
    %73 = vector.extract_strided_slice %40 {offsets = [8, 0], sizes = [8, 128], strides = [1, 1]} : vector<16x128xf32> to vector<8x128xf32>
    %74 = vector.shape_cast %73 : vector<8x128xf32> to vector<8x4x32xf32>
    %75 = tpu.transpose %74, [1, 0, 2] : vector<8x4x32xf32> -> vector<4x8x32xf32>
    %76 = arith.truncf %75 : vector<4x8x32xf32> to vector<4x8x32xbf16>
    %77 = vector.extract_strided_slice %41 {offsets = [8, 0], sizes = [8, 128], strides = [1, 1]} : vector<16x128xf32> to vector<8x128xf32>
    %78 = vector.shape_cast %77 : vector<8x128xf32> to vector<8x4x32xf32>
    %79 = tpu.transpose %78, [1, 0, 2] : vector<8x4x32xf32> -> vector<4x8x32xf32>
    %80 = arith.truncf %79 : vector<4x8x32xf32> to vector<4x8x32xbf16>
    %81 = vector.extract_strided_slice %42 {offsets = [8, 0], sizes = [8, 128], strides = [1, 1]} : vector<16x128xf32> to vector<8x128xf32>
    %82 = vector.shape_cast %81 : vector<8x128xf32> to vector<8x4x32xf32>
    %83 = tpu.transpose %82, [1, 0, 2] : vector<8x4x32xf32> -> vector<4x8x32xf32>
    %84 = arith.truncf %83 : vector<4x8x32xf32> to vector<4x8x32xbf16>
    "tpu.trace_start"() <{level = 10 : i32, message = "hqd,hkd->hqk"}> : () -> ()
    %cst_24 = arith.constant dense<0.000000e+00> : vector<4x8x8xf32>
    %85 = tpu.matmul %76, %80, %cst_24 {dimension_numbers = #tpu.dot_dimension_numbers<[2], [2], [1], [1], [0, 0, 0, 1, 1, 1], [0], [0]>} : vector<4x8x32xbf16>, vector<4x8x32xbf16>, vector<4x8x8xf32> -> vector<4x8x8xf32>
    "tpu.trace_stop"() : () -> ()
    %86 = vector.shape_cast %4 : vector<8x8xf32> to vector<1x8x8xf32>
    %87 = vector.broadcast %86 : vector<1x8x8xf32> to vector<4x8x8xf32>
    %88 = arith.addf %85, %87 : vector<4x8x8xf32>
    %cst_25 = arith.constant dense<0xFF800000> : vector<4x8xf32>
    %89 = vector.multi_reduction <maximumf>, %88, %cst_25 [2] : vector<4x8x8xf32> to vector<4x8xf32>
    %90 = vector.shape_cast %89 : vector<4x8xf32> to vector<4x8x1xf32>
    %91 = vector.broadcast %90 : vector<4x8x1xf32> to vector<4x8x8xf32>
    %92 = arith.subf %88, %91 : vector<4x8x8xf32>
    %93 = math.exp %92 : vector<4x8x8xf32>
    %cst_26 = arith.constant dense<0.000000e+00> : vector<4x8xf32>
    %94 = vector.multi_reduction <add>, %93, %cst_26 [2] : vector<4x8x8xf32> to vector<4x8xf32>
    %95 = vector.shape_cast %94 : vector<4x8xf32> to vector<4x8x1xf32>
    %96 = tpu.reciprocal %95 {approx = true} : vector<4x8x1xf32> -> vector<4x8x1xf32>
    %97 = vector.broadcast %96 : vector<4x8x1xf32> to vector<4x8x8xf32>
    %98 = arith.mulf %93, %97 : vector<4x8x8xf32>
    %99 = arith.truncf %98 : vector<4x8x8xf32> to vector<4x8x8xbf16>
    "tpu.trace_start"() <{level = 10 : i32, message = "hqk,hkd->hqd"}> : () -> ()
    %cst_27 = arith.constant dense<0.000000e+00> : vector<4x8x32xf32>
    %100 = tpu.matmul %99, %84, %cst_27 {dimension_numbers = #tpu.dot_dimension_numbers<[2], [1], [1], [2], [0, 0, 0, 1, 1, 2], [0], [0]>} : vector<4x8x8xbf16>, vector<4x8x32xbf16>, vector<4x8x32xf32> -> vector<4x8x32xf32>
    "tpu.trace_stop"() : () -> ()
    %101 = tpu.transpose %100, [1, 0, 2] : vector<4x8x32xf32> -> vector<8x4x32xf32>
    %102 = vector.shape_cast %101 : vector<8x4x32xf32> to vector<8x128xf32>
    %103 = tpu.concatenate %72, %102 in 0 : vector<8x128xf32>, vector<8x128xf32> -> vector<16x128xf32>
    %104 = arith.truncf %103 : vector<16x128xf32> to vector<16x128xbf16>
    %c0_28 = arith.constant 0 : index
    %c0_29 = arith.constant 0 : index
    %c0_30 = arith.constant 0 : index
    %105 = vector.load %arg7[%c0_28, %c0_29, %c0_30] : memref<1x128x128xbf16, #tpu.memory_space<vmem>>, vector<1x128x128xbf16>
    %106 = vector.shape_cast %105 : vector<1x128x128xbf16> to vector<128x128xbf16>
    %cst_31 = arith.constant dense<0.000000e+00> : vector<16x128xf32>
    %107 = tpu.matmul %104, %106, %cst_31 {dimension_numbers = #tpu.dot_dimension_numbers<[1], [0], [0], [1], [0, 0, 1, 1], [], []>} : vector<16x128xbf16>, vector<128x128xbf16>, vector<16x128xf32> -> vector<16x128xf32>
    %c0_32 = arith.constant 0 : index
    %c0_33 = arith.constant 0 : index
    %c0_34 = arith.constant 0 : index
    %108 = vector.load %arg8[%c0_32, %c0_33, %c0_34] : memref<1x1x128xf32, #tpu.memory_space<vmem>>, vector<1x1x128xf32>
    %109 = vector.shape_cast %108 : vector<1x1x128xf32> to vector<1x128xf32>
    %110 = vector.broadcast %109 : vector<1x128xf32> to vector<16x128xf32>
    %111 = arith.addf %107, %110 : vector<16x128xf32>
    %112 = vector.shape_cast %111 : vector<16x128xf32> to vector<2x8x128xf32>
    %113 = arith.addf %3, %112 : vector<2x8x128xf32>
    %c0_35 = arith.constant 0 : index
    %c0_36 = arith.constant 0 : index
    %c0_37 = arith.constant 0 : index
    %114 = vector.load %arg9[%c0_35, %c0_36, %c0_37] : memref<1x1x128xf32, #tpu.memory_space<vmem>>, vector<1x1x128xf32>
    %115 = vector.shape_cast %114 : vector<1x1x128xf32> to vector<1x128xf32>
    %c0_38 = arith.constant 0 : index
    %c0_39 = arith.constant 0 : index
    %c0_40 = arith.constant 0 : index
    %116 = vector.load %arg10[%c0_38, %c0_39, %c0_40] : memref<1x1x128xf32, #tpu.memory_space<vmem>>, vector<1x1x128xf32>
    %117 = vector.shape_cast %116 : vector<1x1x128xf32> to vector<1x128xf32>
    %cst_41 = arith.constant dense<0.000000e+00> : vector<2x8xf32>
    %118 = vector.multi_reduction <add>, %113, %cst_41 [2] : vector<2x8x128xf32> to vector<2x8xf32>
    %119 = vector.shape_cast %118 : vector<2x8xf32> to vector<2x8x1xf32>
    %cst_42 = arith.constant 1.280000e+02 : f32
    %120 = vector.broadcast %cst_42 : f32 to vector<2x8x1xf32>
    %121 = arith.divf %119, %120 : vector<2x8x1xf32>
    %122 = vector.broadcast %121 : vector<2x8x1xf32> to vector<2x8x128xf32>
    %123 = arith.subf %113, %122 : vector<2x8x128xf32>
    %124 = arith.mulf %123, %123 : vector<2x8x128xf32>
    %cst_43 = arith.constant dense<0.000000e+00> : vector<2x8xf32>
    %125 = vector.multi_reduction <add>, %124, %cst_43 [2] : vector<2x8x128xf32> to vector<2x8xf32>
    %126 = vector.shape_cast %125 : vector<2x8xf32> to vector<2x8x1xf32>
    %cst_44 = arith.constant 1.280000e+02 : f32
    %127 = vector.broadcast %cst_44 : f32 to vector<2x8x1xf32>
    %128 = arith.divf %126, %127 : vector<2x8x1xf32>
    %129 = vector.broadcast %121 : vector<2x8x1xf32> to vector<2x8x128xf32>
    %130 = arith.subf %113, %129 : vector<2x8x128xf32>
    %cst_45 = arith.constant 9.99999974E-6 : f32
    %131 = vector.broadcast %cst_45 : f32 to vector<2x8x1xf32>
    %132 = arith.addf %128, %131 : vector<2x8x1xf32>
    %133 = math.rsqrt %132 : vector<2x8x1xf32>
    %134 = vector.broadcast %133 : vector<2x8x1xf32> to vector<2x8x128xf32>
    %135 = arith.mulf %130, %134 : vector<2x8x128xf32>
    %136 = vector.shape_cast %115 : vector<1x128xf32> to vector<1x1x128xf32>
    %137 = vector.broadcast %136 : vector<1x1x128xf32> to vector<2x8x128xf32>
    %138 = arith.mulf %135, %137 : vector<2x8x128xf32>
    %139 = vector.shape_cast %117 : vector<1x128xf32> to vector<1x1x128xf32>
    %140 = vector.broadcast %139 : vector<1x1x128xf32> to vector<2x8x128xf32>
    %141 = arith.addf %138, %140 : vector<2x8x128xf32>
    %142 = arith.truncf %141 : vector<2x8x128xf32> to vector<2x8x128xbf16>
    %143 = vector.shape_cast %142 : vector<2x8x128xbf16> to vector<16x128xbf16>
    %c0_46 = arith.constant 0 : index
    %c0_47 = arith.constant 0 : index
    %c0_48 = arith.constant 0 : index
    %144 = vector.load %arg11[%c0_46, %c0_47, %c0_48] : memref<1x128x512xbf16, #tpu.memory_space<vmem>>, vector<1x128x512xbf16>
    %145 = vector.shape_cast %144 : vector<1x128x512xbf16> to vector<128x512xbf16>
    %cst_49 = arith.constant dense<0.000000e+00> : vector<16x512xf32>
    %146 = tpu.matmul %143, %145, %cst_49 {dimension_numbers = #tpu.dot_dimension_numbers<[1], [0], [0], [1], [0, 0, 1, 1], [], []>} : vector<16x128xbf16>, vector<128x512xbf16>, vector<16x512xf32> -> vector<16x512xf32>
    %c0_50 = arith.constant 0 : index
    %c0_51 = arith.constant 0 : index
    %c0_52 = arith.constant 0 : index
    %147 = vector.load %arg12[%c0_50, %c0_51, %c0_52] : memref<1x1x512xf32, #tpu.memory_space<vmem>>, vector<1x1x512xf32>
    %148 = vector.shape_cast %147 : vector<1x1x512xf32> to vector<1x512xf32>
    %149 = vector.broadcast %148 : vector<1x512xf32> to vector<16x512xf32>
    %150 = arith.addf %146, %149 : vector<16x512xf32>
    %cst_53 = arith.constant 0.000000e+00 : f32
    %151 = vector.broadcast %cst_53 : f32 to vector<16x512xf32>
    %152 = arith.maximumf %150, %151 : vector<16x512xf32>
    %153 = arith.truncf %152 : vector<16x512xf32> to vector<16x512xbf16>
    %c0_54 = arith.constant 0 : index
    %c0_55 = arith.constant 0 : index
    %c0_56 = arith.constant 0 : index
    %154 = vector.load %arg13[%c0_54, %c0_55, %c0_56] : memref<1x512x128xbf16, #tpu.memory_space<vmem>>, vector<1x512x128xbf16>
    %155 = vector.shape_cast %154 : vector<1x512x128xbf16> to vector<512x128xbf16>
    %cst_57 = arith.constant dense<0.000000e+00> : vector<16x128xf32>
    %156 = tpu.matmul %153, %155, %cst_57 {dimension_numbers = #tpu.dot_dimension_numbers<[1], [0], [0], [1], [0, 0, 1, 1], [], []>} : vector<16x512xbf16>, vector<512x128xbf16>, vector<16x128xf32> -> vector<16x128xf32>
    %c0_58 = arith.constant 0 : index
    %c0_59 = arith.constant 0 : index
    %c0_60 = arith.constant 0 : index
    %157 = vector.load %arg14[%c0_58, %c0_59, %c0_60] : memref<1x1x128xf32, #tpu.memory_space<vmem>>, vector<1x1x128xf32>
    %158 = vector.shape_cast %157 : vector<1x1x128xf32> to vector<1x128xf32>
    %159 = vector.broadcast %158 : vector<1x128xf32> to vector<16x128xf32>
    %160 = arith.addf %156, %159 : vector<16x128xf32>
    %161 = vector.shape_cast %160 : vector<16x128xf32> to vector<2x8x128xf32>
    %162 = arith.addf %113, %161 : vector<2x8x128xf32>
    %c0_61 = arith.constant 0 : index
    %c0_62 = arith.constant 0 : index
    %c0_63 = arith.constant 0 : index
    %163 = vector.load %arg18[%c0_61, %c0_62, %c0_63] : memref<2x8x128xf32, #tpu.memory_space<vmem>>, vector<2x8x128xf32>
    tpu.vector_store %arg18[%c0_61, %c0_62, %c0_63], %162 {strides = array<i32>} : memref<2x8x128xf32, #tpu.memory_space<vmem>>, vector<2x8x128xf32>,
    %c1_i32 = arith.constant 1 : i32
    %164 = arith.cmpi eq, %arg1, %c1_i32 : i32
    %165 = arith.extui %164 : i1 to i32
    %c0_i32_64 = arith.constant 0 : i32
    %166 = arith.cmpi ne, %165, %c0_i32_64 : i32
    scf.if %166 {
      %c0_65 = arith.constant 0 : index
      %c0_66 = arith.constant 0 : index
      %167 = vector.load %arg15[%c0_65, %c0_66] : memref<1x128xf32, #tpu.memory_space<vmem>>, vector<1x128xf32>
      %c0_67 = arith.constant 0 : index
      %c0_68 = arith.constant 0 : index
      %168 = vector.load %arg16[%c0_67, %c0_68] : memref<1x128xf32, #tpu.memory_space<vmem>>, vector<1x128xf32>
      %cst_69 = arith.constant dense<0.000000e+00> : vector<2x8xf32>
      %169 = vector.multi_reduction <add>, %162, %cst_69 [2] : vector<2x8x128xf32> to vector<2x8xf32>
      %170 = vector.shape_cast %169 : vector<2x8xf32> to vector<2x8x1xf32>
      %cst_70 = arith.constant 1.280000e+02 : f32
      %171 = vector.broadcast %cst_70 : f32 to vector<2x8x1xf32>
      %172 = arith.divf %170, %171 : vector<2x8x1xf32>
      %173 = vector.broadcast %172 : vector<2x8x1xf32> to vector<2x8x128xf32>
      %174 = arith.subf %162, %173 : vector<2x8x128xf32>
      %175 = arith.mulf %174, %174 : vector<2x8x128xf32>
      %cst_71 = arith.constant dense<0.000000e+00> : vector<2x8xf32>
      %176 = vector.multi_reduction <add>, %175, %cst_71 [2] : vector<2x8x128xf32> to vector<2x8xf32>
      %177 = vector.shape_cast %176 : vector<2x8xf32> to vector<2x8x1xf32>
      %cst_72 = arith.constant 1.280000e+02 : f32
      %178 = vector.broadcast %cst_72 : f32 to vector<2x8x1xf32>
      %179 = arith.divf %177, %178 : vector<2x8x1xf32>
      %180 = vector.broadcast %172 : vector<2x8x1xf32> to vector<2x8x128xf32>
      %181 = arith.subf %162, %180 : vector<2x8x128xf32>
      %cst_73 = arith.constant 9.99999974E-6 : f32
      %182 = vector.broadcast %cst_73 : f32 to vector<2x8x1xf32>
      %183 = arith.addf %179, %182 : vector<2x8x1xf32>
      %184 = math.rsqrt %183 : vector<2x8x1xf32>
      %185 = vector.broadcast %184 : vector<2x8x1xf32> to vector<2x8x128xf32>
      %186 = arith.mulf %181, %185 : vector<2x8x128xf32>
      %187 = vector.shape_cast %167 : vector<1x128xf32> to vector<1x1x128xf32>
      %188 = vector.broadcast %187 : vector<1x1x128xf32> to vector<2x8x128xf32>
      %189 = arith.mulf %186, %188 : vector<2x8x128xf32>
      %190 = vector.shape_cast %168 : vector<1x128xf32> to vector<1x1x128xf32>
      %191 = vector.broadcast %190 : vector<1x1x128xf32> to vector<2x8x128xf32>
      %192 = arith.addf %189, %191 : vector<2x8x128xf32>
      %193 = arith.truncf %192 : vector<2x8x128xf32> to vector<2x8x128xbf16>
      %c0_74 = arith.constant 0 : index
      %c0_75 = arith.constant 0 : index
      %c0_76 = arith.constant 0 : index
      %194 = vector.load %arg17[%c0_74, %c0_75, %c0_76] : memref<2x8x128xbf16, #tpu.memory_space<vmem>>, vector<2x8x128xbf16>
      tpu.vector_store %arg17[%c0_74, %c0_75, %c0_76], %193 {strides = array<i32>} : memref<2x8x128xbf16, #tpu.memory_space<vmem>>, vector<2x8x128xbf16>,
    } else {
    }
    return
  }
  func.func @transform_0(%arg0: i32, %arg1: i32) -> (i32, i32) {
    %c0_i32 = arith.constant 0 : i32
    %c0_i32_0 = arith.constant 0 : i32
    %c0_i32_1 = arith.constant 0 : i32
    return %c0_i32, %c0_i32_0 : i32, i32
  }
  func.func @transform_1(%arg0: i32, %arg1: i32) -> (i32, i32, i32) {
    %c0_i32 = arith.constant 0 : i32
    %c0_i32_0 = arith.constant 0 : i32
    %c0_i32_1 = arith.constant 0 : i32
    return %arg0, %c0_i32, %c0_i32_0 : i32, i32, i32
  }
  func.func @transform_2(%arg0: i32, %arg1: i32) -> (i32, i32, i32) {
    %c0_i32 = arith.constant 0 : i32
    %c0_i32_0 = arith.constant 0 : i32
    %c0_i32_1 = arith.constant 0 : i32
    return %arg1, %c0_i32, %c0_i32_0 : i32, i32, i32
  }
  func.func @transform_3(%arg0: i32, %arg1: i32) -> (i32, i32, i32) {
    %c0_i32 = arith.constant 0 : i32
    %c0_i32_0 = arith.constant 0 : i32
    %c0_i32_1 = arith.constant 0 : i32
    return %arg1, %c0_i32, %c0_i32_0 : i32, i32, i32
  }
  func.func @transform_4(%arg0: i32, %arg1: i32) -> (i32, i32, i32) {
    %c0_i32 = arith.constant 0 : i32
    %c0_i32_0 = arith.constant 0 : i32
    %c0_i32_1 = arith.constant 0 : i32
    return %arg1, %c0_i32, %c0_i32_0 : i32, i32, i32
  }
  func.func @transform_5(%arg0: i32, %arg1: i32) -> (i32, i32, i32) {
    %c0_i32 = arith.constant 0 : i32
    %c0_i32_0 = arith.constant 0 : i32
    %c0_i32_1 = arith.constant 0 : i32
    return %arg1, %c0_i32, %c0_i32_0 : i32, i32, i32
  }
  func.func @transform_6(%arg0: i32, %arg1: i32) -> (i32, i32, i32) {
    %c0_i32 = arith.constant 0 : i32
    %c0_i32_0 = arith.constant 0 : i32
    %c0_i32_1 = arith.constant 0 : i32
    return %arg1, %c0_i32, %c0_i32_0 : i32, i32, i32
  }
  func.func @transform_7(%arg0: i32, %arg1: i32) -> (i32, i32, i32) {
    %c0_i32 = arith.constant 0 : i32
    %c0_i32_0 = arith.constant 0 : i32
    %c0_i32_1 = arith.constant 0 : i32
    return %arg1, %c0_i32, %c0_i32_0 : i32, i32, i32
  }
  func.func @transform_8(%arg0: i32, %arg1: i32) -> (i32, i32, i32) {
    %c0_i32 = arith.constant 0 : i32
    %c0_i32_0 = arith.constant 0 : i32
    %c0_i32_1 = arith.constant 0 : i32
    return %arg1, %c0_i32, %c0_i32_0 : i32, i32, i32
  }
  func.func @transform_9(%arg0: i32, %arg1: i32) -> (i32, i32, i32) {
    %c0_i32 = arith.constant 0 : i32
    %c0_i32_0 = arith.constant 0 : i32
    %c0_i32_1 = arith.constant 0 : i32
    return %arg1, %c0_i32, %c0_i32_0 : i32, i32, i32
  }
  func.func @transform_10(%arg0: i32, %arg1: i32) -> (i32, i32, i32) {
    %c0_i32 = arith.constant 0 : i32
    %c0_i32_0 = arith.constant 0 : i32
    %c0_i32_1 = arith.constant 0 : i32
    return %arg1, %c0_i32, %c0_i32_0 : i32, i32, i32
  }
  func.func @transform_11(%arg0: i32, %arg1: i32) -> (i32, i32, i32) {
    %c0_i32 = arith.constant 0 : i32
    %c0_i32_0 = arith.constant 0 : i32
    %c0_i32_1 = arith.constant 0 : i32
    return %arg1, %c0_i32, %c0_i32_0 : i32, i32, i32
  }
  func.func @transform_12(%arg0: i32, %arg1: i32) -> (i32, i32, i32) {
    %c0_i32 = arith.constant 0 : i32
    %c0_i32_0 = arith.constant 0 : i32
    %c0_i32_1 = arith.constant 0 : i32
    return %arg1, %c0_i32, %c0_i32_0 : i32, i32, i32
  }
  func.func @transform_13(%arg0: i32, %arg1: i32) -> (i32, i32) {
    %c0_i32 = arith.constant 0 : i32
    %c0_i32_0 = arith.constant 0 : i32
    %c0_i32_1 = arith.constant 0 : i32
    return %c0_i32, %c0_i32_0 : i32, i32
  }
  func.func @transform_14(%arg0: i32, %arg1: i32) -> (i32, i32) {
    %c0_i32 = arith.constant 0 : i32
    %c0_i32_0 = arith.constant 0 : i32
    %c0_i32_1 = arith.constant 0 : i32
    return %c0_i32, %c0_i32_0 : i32, i32
  }
  func.func @transform_15(%arg0: i32, %arg1: i32) -> (i32, i32, i32) {
    %c0_i32 = arith.constant 0 : i32
    %c0_i32_0 = arith.constant 0 : i32
    %c0_i32_1 = arith.constant 0 : i32
    return %arg0, %c0_i32, %c0_i32_0 : i32, i32, i32
  }
}

</mosaic_0001>

<llo_original>
// kernel: tpu_custom_call.1
$region0: #{tpu_custom_call.1}
  #allocation0 [shape = 'u32[]', space=smem, size = 0x4, offset = 0x4, fixed_abs, tag = 'smem constant byte address 0x4 - core index']
  #allocation1 [shape = 'u32[72,128]{1,0:T(1,128)}', space=vmem, size = 0x9000, scoped, tag = 'internal scratch']
  #allocation2 [shape = 'f32[2,8,128]{2,1,0:T(8,128)}', space=vmem, size = 0x2000, scoped, tag = 'scratch operand']
  %s0 = inlined_call_operand.hbm [shape: f32[8,8], index: 0, kind: input, shape index: {}]
  %s1 = inlined_call_operand.hbm [shape: f32[2,8,128], index: 1, kind: input, shape index: {}]
  %s2 = inlined_call_operand.hbm [shape: f32[2,1,128], index: 2, kind: input, shape index: {}]
  %s3 = inlined_call_operand.hbm [shape: f32[2,1,128], index: 3, kind: input, shape index: {}]
  %s4 = inlined_call_operand.hbm [shape: bf16[2,128,384], index: 4, kind: input, shape index: {}]
  %s5 = inlined_call_operand.hbm [shape: bf16[2,128,128], index: 5, kind: input, shape index: {}]
  %s6 = inlined_call_operand.hbm [shape: f32[2,1,128], index: 6, kind: input, shape index: {}]
  %s7 = inlined_call_operand.hbm [shape: f32[2,1,128], index: 7, kind: input, shape index: {}]
  %s8 = inlined_call_operand.hbm [shape: f32[2,1,128], index: 8, kind: input, shape index: {}]
  %s9 = inlined_call_operand.hbm [shape: bf16[2,128,512], index: 9, kind: input, shape index: {}]
  %s10 = inlined_call_operand.vmem [shape: f32[2,1,512], index: 10, kind: input, shape index: {}]
  %s11 = inlined_call_operand.hbm [shape: bf16[2,512,128], index: 11, kind: input, shape index: {}]
  %s12 = inlined_call_operand.vmem [shape: f32[2,1,128], index: 12, kind: input, shape index: {}]
  %s13 = inlined_call_operand.vmem [shape: f32[1,128], index: 13, kind: input, shape index: {}]
  %s14 = inlined_call_operand.vmem [shape: f32[1,128], index: 14, kind: input, shape index: {}]
  %s15 = inlined_call_operand.hbm [shape: bf16[2,8,128], index: 15, kind: output, shape index: {}]
  %s16 = sld [smem:[#allocation0]]
  $region145: #{tpu_custom_call.1} parent=0
    _
  %s18 = ssub.s32 1, %s16
  %s19 = scalar_select 0, %s18, %s16
  $region1: #{tpu_custom_call.1} parent=0
    #allocation3 [shape = 'u8[4096]{0}', space=vmem, size = 0x1000, scoped, tag = 'input window, operand 0, single buffered']
    #allocation4 [shape = 's32[2]{0}', space=sflag, size = 0x8, scoped, tag = 'scoped memory for tpu_custom_call.1']
    #allocation5 [shape = 's32[2]{0}', space=sflag, size = 0x8, scoped, tag = 'scoped memory for tpu_custom_call.1']
    #allocation6 [shape = 'u8[8192]{0}', space=vmem, size = 0x2000, scoped, tag = 'input window, operand 1, single buffered']
    #allocation7 [shape = 's32[1]{0}', space=sflag, size = 0x4, scoped, tag = 'scoped memory for tpu_custom_call.1']
    #allocation8 [shape = 'u8[1024]{0}', space=vmem, size = 0x400, scoped, tag = 'input window, operand 2']
    #allocation9 [shape = 'u8[1024]{0}', space=vmem, size = 0x400, scoped, tag = 'input window, operand 3']
    #allocation10 [shape = 'u8[196608]{0}', space=vmem, size = 0x30000, scoped, tag = 'input window, operand 4']
    #allocation11 [shape = 'u8[65536]{0}', space=vmem, size = 0x10000, scoped, tag = 'input window, operand 5']
    #allocation12 [shape = 'u8[1024]{0}', space=vmem, size = 0x400, scoped, tag = 'input window, operand 6']
    #allocation13 [shape = 'u8[1024]{0}', space=vmem, size = 0x400, scoped, tag = 'input window, operand 7']
    #allocation14 [shape = 'u8[1024]{0}', space=vmem, size = 0x400, scoped, tag = 'input window, operand 8']
    #allocation15 [shape = 'u8[262144]{0}', space=vmem, size = 0x40000, scoped, tag = 'input window, operand 9']
    #allocation16 [shape = 'u8[262144]{0}', space=vmem, size = 0x40000, scoped, tag = 'input window, operand 11']
    #allocation17 [shape = 'u8[4096]{0}', space=vmem, size = 0x1000, scoped, tag = 'output window, operand 0, single buffered']
    %20 = vsyncpa [#allocation4], 0
    %21 = vsyncpa [#allocation7], 0
    %22 = vsyncpa [#allocation5], 0
    loop: start=0, step=1, limit=4
    $region2: #{tpu_custom_call.1} parent=1 // loop_pre_header
      _
    $region3: #{tpu_custom_call.1} parent=1 // loop_header
      %s24 = sphi 0, %s28
      %p25 = scmp.ge.s32.totalorder %s24, 4
      %s31 = sphi 0, %s43
      %s32 = sphi 0, %s39
      %s33 = sphi 0, %s31
      %s34 = sphi 0, %s32
      %s35 = sphi 0, %s33
      %s36 = sphi 0, %s34
      %s44 = sphi 0, %s44
      %s46 = sphi 0, %s44
      %s47 = sphi 0, %s46
      %s61 = sphi 0, %s47
      %s67 = sphi 0, %s69
      %s70 = sphi 0, %s67
      %s71 = sphi 0, %s70
      %s87 = sphi 0, %s71
      %s93 = sphi 0, %s95
      %s96 = sphi 0, %s93
      %s97 = sphi 0, %s96
      %s113 = sphi 0, %s97
      %s119 = sphi 0, %s121
      %s122 = sphi 0, %s119
      %s123 = sphi 0, %s122
      %s139 = sphi 0, %s123
      %s145 = sphi 0, %s147
      %s148 = sphi 0, %s145
      %s149 = sphi 0, %s148
      %s165 = sphi 0, %s149
      %s171 = sphi 0, %s173
      %s174 = sphi 0, %s171
      %s175 = sphi 0, %s174
      %s191 = sphi 0, %s175
      %s197 = sphi 0, %s199
      %s200 = sphi 0, %s197
      %s201 = sphi 0, %s200
      %s217 = sphi 0, %s201
      %s223 = sphi 0, %s225
      %s226 = sphi 0, %s223
      %s227 = sphi 0, %s226
      %s243 = sphi 0, %s227
      %s249 = sphi 0, %s251
      %s252 = sphi 0, %s249
      %s253 = sphi 0, %s252
      %s269 = sphi 0, %s253
      %s275 = sphi 0, %s277
      %s278 = sphi 0, %s275
      %s279 = sphi 0, %s278
      %s295 = sphi 0, %s279
      %s301 = sphi 0, %s303
      %s304 = sphi 0, %s301
      %s305 = sphi 0, %s304
      %s321 = sphi 0, %s305
      %s327 = sphi 0, %s329
      %s330 = sphi 0, %s327
      %s331 = sphi 0, %s330
      %s347 = sphi 0, %s331
      %s353 = sphi 0, %s355
      %s356 = sphi 0, %s353
      %s357 = sphi 0, %s356
      %s373 = sphi 0, %s357
      %s377 = sphi 0, %s377
      %s379 = sphi 0, %s377
      %s380 = sphi 0, %s379
      %s394 = sphi 0, %s380
      %s398 = sphi 0, %s398
      %s400 = sphi 0, %s398
      %s401 = sphi 0, %s400
      %s415 = sphi 0, %s401
      %s421 = sphi 0, %s423
      %s424 = sphi 0, %s421
      %s425 = sphi 0, %s424
      %s441 = sphi 0, %s425
    $region4: #{tpu_custom_call.1} parent=1 // loop_header_branch
      %27 = sbr.rel (%p25) target = $region8
    $region5: #{tpu_custom_call.1} parent=1 // loop_body
      %s29 = ssub.s32 %s24, 1
      %s30 = ssub.s32 %s24, 2
      %s37 = sadd.s32 1, %s32
      %p38 = scmp.ge.s32.totalorder %s37, 2
      %s39 = scalar_select %p38, 0, %s37
      %s40 = sadd.s32 1, %s31
      %s41 = scalar_select %p38, %s40, %s31
      %p42 = scmp.ge.s32.totalorder %s41, 1
      %s43 = scalar_select %p42, 0, %s41
      %s45 = sadd.s32 %s44, 1
      %p48 = scmp.eq.s32.totalorder %s24, 1
      %p49 = scmp.ne.s32.totalorder %s44, %s46
      %p50 = scmp.eq.s32.totalorder %s24, 0
      %p51 = por %p49, %p50
      %p52 = scmp.ne.s32.totalorder %s44, %s46
      %p53 = scmp.eq.s32.totalorder %s29, 1
      %p54 = por %p52, %p53
      %p55 = scmp.ne.s32.totalorder %s46, %s47
      %p56 = scmp.eq.s32.totalorder %s29, 0
      %p57 = por %p55, %p56
      %p58 = scmp.ne.s32.totalorder %s46, %s47
      %p59 = scmp.eq.s32.totalorder %s30, 1
      %p60 = por %p58, %p59
      %p62 = scmp.ne.s32.totalorder %s47, %s61
      %p63 = scmp.eq.s32.totalorder %s30, 0
      %p64 = por %p62, %p63
      %s65 = ssub.s32 %s31, %s43
      %p66 = scmp.eq.s32.totalorder %s65, 0
      %s68 = sadd.s32 %s67, 1
      %s69 = scalar_select %p66, %s67, %s68
      %p72 = pneg %p66
      %p73 = scmp.eq.s32.totalorder %s24, 1
      %p74 = por %p72, %p73
      %p75 = scmp.ne.s32.totalorder %s67, %s70
      %p76 = scmp.eq.s32.totalorder %s24, 0
      %p77 = por %p75, %p76
      %p78 = scmp.ne.s32.totalorder %s67, %s70
      %p79 = scmp.eq.s32.totalorder %s29, 1
      %p80 = por %p78, %p79
      %p81 = scmp.ne.s32.totalorder %s70, %s71
      %p82 = scmp.eq.s32.totalorder %s29, 0
      %p83 = por %p81, %p82
      %p84 = scmp.ne.s32.totalorder %s70, %s71
      %p85 = scmp.eq.s32.totalorder %s30, 1
      %p86 = por %p84, %p85
      %p88 = scmp.ne.s32.totalorder %s71, %s87
      %p89 = scmp.eq.s32.totalorder %s30, 0
      %p90 = por %p88, %p89
      %s91 = ssub.s32 %s32, %s39
      %p92 = scmp.eq.s32.totalorder %s91, 0
      %s94 = sadd.s32 %s93, 1
      %s95 = scalar_select %p92, %s93, %s94
      %p98 = pneg %p92
      %p99 = scmp.eq.s32.totalorder %s24, 1
      %p100 = por %p98, %p99
      %p101 = scmp.ne.s32.totalorder %s93, %s96
      %p102 = scmp.eq.s32.totalorder %s24, 0
      %p103 = por %p101, %p102
      %p104 = scmp.ne.s32.totalorder %s93, %s96
      %p105 = scmp.eq.s32.totalorder %s29, 1
      %p106 = por %p104, %p105
      %p107 = scmp.ne.s32.totalorder %s96, %s97
      %p108 = scmp.eq.s32.totalorder %s29, 0
      %p109 = por %p107, %p108
      %p110 = scmp.ne.s32.totalorder %s96, %s97
      %p111 = scmp.eq.s32.totalorder %s30, 1
      %p112 = por %p110, %p111
      %p114 = scmp.ne.s32.totalorder %s97, %s113
      %p115 = scmp.eq.s32.totalorder %s30, 0
      %p116 = por %p114, %p115
      %s117 = ssub.s32 %s32, %s39
      %p118 = scmp.eq.s32.totalorder %s117, 0
      %s120 = sadd.s32 %s119, 1
      %s121 = scalar_select %p118, %s119, %s120
      %p124 = pneg %p118
      %p125 = scmp.eq.s32.totalorder %s24, 1
      %p126 = por %p124, %p125
      %p127 = scmp.ne.s32.totalorder %s119, %s122
      %p128 = scmp.eq.s32.totalorder %s24, 0
      %p129 = por %p127, %p128
      %p130 = scmp.ne.s32.totalorder %s119, %s122
      %p131 = scmp.eq.s32.totalorder %s29, 1
      %p132 = por %p130, %p131
      %p133 = scmp.ne.s32.totalorder %s122, %s123
      %p134 = scmp.eq.s32.totalorder %s29, 0
      %p135 = por %p133, %p134
      %p136 = scmp.ne.s32.totalorder %s122, %s123
      %p137 = scmp.eq.s32.totalorder %s30, 1
      %p138 = por %p136, %p137
      %p140 = scmp.ne.s32.totalorder %s123, %s139
      %p141 = scmp.eq.s32.totalorder %s30, 0
      %p142 = por %p140, %p141
      %s143 = ssub.s32 %s32, %s39
      %p144 = scmp.eq.s32.totalorder %s143, 0
      %s146 = sadd.s32 %s145, 1
      %s147 = scalar_select %p144, %s145, %s146
      %p150 = pneg %p144
      %p151 = scmp.eq.s32.totalorder %s24, 1
      %p152 = por %p150, %p151
      %p153 = scmp.ne.s32.totalorder %s145, %s148
      %p154 = scmp.eq.s32.totalorder %s24, 0
      %p155 = por %p153, %p154
      %p156 = scmp.ne.s32.totalorder %s145, %s148
      %p157 = scmp.eq.s32.totalorder %s29, 1
      %p158 = por %p156, %p157
      %p159 = scmp.ne.s32.totalorder %s148, %s149
      %p160 = scmp.eq.s32.totalorder %s29, 0
      %p161 = por %p159, %p160
      %p162 = scmp.ne.s32.totalorder %s148, %s149
      %p163 = scmp.eq.s32.totalorder %s30, 1
      %p164 = por %p162, %p163
      %p166 = scmp.ne.s32.totalorder %s149, %s165
      %p167 = scmp.eq.s32.totalorder %s30, 0
      %p168 = por %p166, %p167
      %s169 = ssub.s32 %s32, %s39
      %p170 = scmp.eq.s32.totalorder %s169, 0
      %s172 = sadd.s32 %s171, 1
      %s173 = scalar_select %p170, %s171, %s172
      %p176 = pneg %p170
      %p177 = scmp.eq.s32.totalorder %s24, 1
      %p178 = por %p176, %p177
      %p179 = scmp.ne.s32.totalorder %s171, %s174
      %p180 = scmp.eq.s32.totalorder %s24, 0
      %p181 = por %p179, %p180
      %p182 = scmp.ne.s32.totalorder %s171, %s174
      %p183 = scmp.eq.s32.totalorder %s29, 1
      %p184 = por %p182, %p183
      %p185 = scmp.ne.s32.totalorder %s174, %s175
      %p186 = scmp.eq.s32.totalorder %s29, 0
      %p187 = por %p185, %p186
      %p188 = scmp.ne.s32.totalorder %s174, %s175
      %p189 = scmp.eq.s32.totalorder %s30, 1
      %p190 = por %p188, %p189
      %p192 = scmp.ne.s32.totalorder %s175, %s191
      %p193 = scmp.eq.s32.totalorder %s30, 0
      %p194 = por %p192, %p193
      %s195 = ssub.s32 %s32, %s39
      %p196 = scmp.eq.s32.totalorder %s195, 0
      %s198 = sadd.s32 %s197, 1
      %s199 = scalar_select %p196, %s197, %s198
      %p202 = pneg %p196
      %p203 = scmp.eq.s32.totalorder %s24, 1
      %p204 = por %p202, %p203
      %p205 = scmp.ne.s32.totalorder %s197, %s200
      %p206 = scmp.eq.s32.totalorder %s24, 0
      %p207 = por %p205, %p206
      %p208 = scmp.ne.s32.totalorder %s197, %s200
      %p209 = scmp.eq.s32.totalorder %s29, 1
      %p210 = por %p208, %p209
      %p211 = scmp.ne.s32.totalorder %s200, %s201
      %p212 = scmp.eq.s32.totalorder %s29, 0
      %p213 = por %p211, %p212
      %p214 = scmp.ne.s32.totalorder %s200, %s201
      %p215 = scmp.eq.s32.totalorder %s30, 1
      %p216 = por %p214, %p215
      %p218 = scmp.ne.s32.totalorder %s201, %s217
      %p219 = scmp.eq.s32.totalorder %s30, 0
      %p220 = por %p218, %p219
      %s221 = ssub.s32 %s32, %s39
      %p222 = scmp.eq.s32.totalorder %s221, 0
      %s224 = sadd.s32 %s223, 1
      %s225 = scalar_select %p222, %s223, %s224
      %p228 = pneg %p222
      %p229 = scmp.eq.s32.totalorder %s24, 1
      %p230 = por %p228, %p229
      %p231 = scmp.ne.s32.totalorder %s223, %s226
      %p232 = scmp.eq.s32.totalorder %s24, 0
      %p233 = por %p231, %p232
      %p234 = scmp.ne.s32.totalorder %s223, %s226
      %p235 = scmp.eq.s32.totalorder %s29, 1
      %p236 = por %p234, %p235
      %p237 = scmp.ne.s32.totalorder %s226, %s227
      %p238 = scmp.eq.s32.totalorder %s29, 0
      %p239 = por %p237, %p238
      %p240 = scmp.ne.s32.totalorder %s226, %s227
      %p241 = scmp.eq.s32.totalorder %s30, 1
      %p242 = por %p240, %p241
      %p244 = scmp.ne.s32.totalorder %s227, %s243
      %p245 = scmp.eq.s32.totalorder %s30, 0
      %p246 = por %p244, %p245
      %s247 = ssub.s32 %s32, %s39
      %p248 = scmp.eq.s32.totalorder %s247, 0
      %s250 = sadd.s32 %s249, 1
      %s251 = scalar_select %p248, %s249, %s250
      %p254 = pneg %p248
      %p255 = scmp.eq.s32.totalorder %s24, 1
      %p256 = por %p254, %p255
      %p257 = scmp.ne.s32.totalorder %s249, %s252
      %p258 = scmp.eq.s32.totalorder %s24, 0
      %p259 = por %p257, %p258
      %p260 = scmp.ne.s32.totalorder %s249, %s252
      %p261 = scmp.eq.s32.totalorder %s29, 1
      %p262 = por %p260, %p261
      %p263 = scmp.ne.s32.totalorder %s252, %s253
      %p264 = scmp.eq.s32.totalorder %s29, 0
      %p265 = por %p263, %p264
      %p266 = scmp.ne.s32.totalorder %s252, %s253
      %p267 = scmp.eq.s32.totalorder %s30, 1
      %p268 = por %p266, %p267
      %p270 = scmp.ne.s32.totalorder %s253, %s269
      %p271 = scmp.eq.s32.totalorder %s30, 0
      %p272 = por %p270, %p271
      %s273 = ssub.s32 %s32, %s39
      %p274 = scmp.eq.s32.totalorder %s273, 0
      %s276 = sadd.s32 %s275, 1
      %s277 = scalar_select %p274, %s275, %s276
      %p280 = pneg %p274
      %p281 = scmp.eq.s32.totalorder %s24, 1
      %p282 = por %p280, %p281
      %p283 = scmp.ne.s32.totalorder %s275, %s278
      %p284 = scmp.eq.s32.totalorder %s24, 0
      %p285 = por %p283, %p284
      %p286 = scmp.ne.s32.totalorder %s275, %s278
      %p287 = scmp.eq.s32.totalorder %s29, 1
      %p288 = por %p286, %p287
      %p289 = scmp.ne.s32.totalorder %s278, %s279
      %p290 = scmp.eq.s32.totalorder %s29, 0
      %p291 = por %p289, %p290
      %p292 = scmp.ne.s32.totalorder %s278, %s279
      %p293 = scmp.eq.s32.totalorder %s30, 1
      %p294 = por %p292, %p293
      %p296 = scmp.ne.s32.totalorder %s279, %s295
      %p297 = scmp.eq.s32.totalorder %s30, 0
      %p298 = por %p296, %p297
      %s299 = ssub.s32 %s32, %s39
      %p300 = scmp.eq.s32.totalorder %s299, 0
      %s302 = sadd.s32 %s301, 1
      %s303 = scalar_select %p300, %s301, %s302
      %p306 = pneg %p300
      %p307 = scmp.eq.s32.totalorder %s24, 1
      %p308 = por %p306, %p307
      %p309 = scmp.ne.s32.totalorder %s301, %s304
      %p310 = scmp.eq.s32.totalorder %s24, 0
      %p311 = por %p309, %p310
      %p312 = scmp.ne.s32.totalorder %s301, %s304
      %p313 = scmp.eq.s32.totalorder %s29, 1
      %p314 = por %p312, %p313
      %p315 = scmp.ne.s32.totalorder %s304, %s305
      %p316 = scmp.eq.s32.totalorder %s29, 0
      %p317 = por %p315, %p316
      %p318 = scmp.ne.s32.totalorder %s304, %s305
      %p319 = scmp.eq.s32.totalorder %s30, 1
      %p320 = por %p318, %p319
      %p322 = scmp.ne.s32.totalorder %s305, %s321
      %p323 = scmp.eq.s32.totalorder %s30, 0
      %p324 = por %p322, %p323
      %s325 = ssub.s32 %s32, %s39
      %p326 = scmp.eq.s32.totalorder %s325, 0
      %s328 = sadd.s32 %s327, 1
      %s329 = scalar_select %p326, %s327, %s328
      %p332 = pneg %p326
      %p333 = scmp.eq.s32.totalorder %s24, 1
      %p334 = por %p332, %p333
      %p335 = scmp.ne.s32.totalorder %s327, %s330
      %p336 = scmp.eq.s32.totalorder %s24, 0
      %p337 = por %p335, %p336
      %p338 = scmp.ne.s32.totalorder %s327, %s330
      %p339 = scmp.eq.s32.totalorder %s29, 1
      %p340 = por %p338, %p339
      %p341 = scmp.ne.s32.totalorder %s330, %s331
      %p342 = scmp.eq.s32.totalorder %s29, 0
      %p343 = por %p341, %p342
      %p344 = scmp.ne.s32.totalorder %s330, %s331
      %p345 = scmp.eq.s32.totalorder %s30, 1
      %p346 = por %p344, %p345
      %p348 = scmp.ne.s32.totalorder %s331, %s347
      %p349 = scmp.eq.s32.totalorder %s30, 0
      %p350 = por %p348, %p349
      %s351 = ssub.s32 %s32, %s39
      %p352 = scmp.eq.s32.totalorder %s351, 0
      %s354 = sadd.s32 %s353, 1
      %s355 = scalar_select %p352, %s353, %s354
      %p358 = pneg %p352
      %p359 = scmp.eq.s32.totalorder %s24, 1
      %p360 = por %p358, %p359
      %p361 = scmp.ne.s32.totalorder %s353, %s356
      %p362 = scmp.eq.s32.totalorder %s24, 0
      %p363 = por %p361, %p362
      %p364 = scmp.ne.s32.totalorder %s353, %s356
      %p365 = scmp.eq.s32.totalorder %s29, 1
      %p366 = por %p364, %p365
      %p367 = scmp.ne.s32.totalorder %s356, %s357
      %p368 = scmp.eq.s32.totalorder %s29, 0
      %p369 = por %p367, %p368
      %p370 = scmp.ne.s32.totalorder %s356, %s357
      %p371 = scmp.eq.s32.totalorder %s30, 1
      %p372 = por %p370, %p371
      %p374 = scmp.ne.s32.totalorder %s357, %s373
      %p375 = scmp.eq.s32.totalorder %s30, 0
      %p376 = por %p374, %p375
      %s378 = sadd.s32 %s377, 1
      %p381 = scmp.eq.s32.totalorder %s24, 1
      %p382 = scmp.ne.s32.totalorder %s377, %s379
      %p383 = scmp.eq.s32.totalorder %s24, 0
      %p384 = por %p382, %p383
      %p385 = scmp.ne.s32.totalorder %s377, %s379
      %p386 = scmp.eq.s32.totalorder %s29, 1
      %p387 = por %p385, %p386
      %p388 = scmp.ne.s32.totalorder %s379, %s380
      %p389 = scmp.eq.s32.totalorder %s29, 0
      %p390 = por %p388, %p389
      %p391 = scmp.ne.s32.totalorder %s379, %s380
      %p392 = scmp.eq.s32.totalorder %s30, 1
      %p393 = por %p391, %p392
      %p395 = scmp.ne.s32.totalorder %s380, %s394
      %p396 = scmp.eq.s32.totalorder %s30, 0
      %p397 = por %p395, %p396
      %s399 = sadd.s32 %s398, 1
      %p402 = scmp.eq.s32.totalorder %s24, 1
      %p403 = scmp.ne.s32.totalorder %s398, %s400
      %p404 = scmp.eq.s32.totalorder %s24, 0
      %p405 = por %p403, %p404
      %p406 = scmp.ne.s32.totalorder %s398, %s400
      %p407 = scmp.eq.s32.totalorder %s29, 1
      %p408 = por %p406, %p407
      %p409 = scmp.ne.s32.totalorder %s400, %s401
      %p410 = scmp.eq.s32.totalorder %s29, 0
      %p411 = por %p409, %p410
      %p412 = scmp.ne.s32.totalorder %s400, %s401
      %p413 = scmp.eq.s32.totalorder %s30, 1
      %p414 = por %p412, %p413
      %p416 = scmp.ne.s32.totalorder %s401, %s415
      %p417 = scmp.eq.s32.totalorder %s30, 0
      %p418 = por %p416, %p417
      %s419 = ssub.s32 %s31, %s43
      %p420 = scmp.eq.s32.totalorder %s419, 0
      %s422 = sadd.s32 %s421, 1
      %s423 = scalar_select %p420, %s421, %s422
      %p426 = pneg %p420
      %p427 = scmp.eq.s32.totalorder %s24, 1
      %p428 = por %p426, %p427
      %p429 = scmp.ne.s32.totalorder %s421, %s424
      %p430 = scmp.eq.s32.totalorder %s24, 0
      %p431 = por %p429, %p430
      %p432 = scmp.ne.s32.totalorder %s421, %s424
      %p433 = scmp.eq.s32.totalorder %s29, 1
      %p434 = por %p432, %p433
      %p435 = scmp.ne.s32.totalorder %s424, %s425
      %p436 = scmp.eq.s32.totalorder %s29, 0
      %p437 = por %p435, %p436
      %p438 = scmp.ne.s32.totalorder %s424, %s425
      %p439 = scmp.eq.s32.totalorder %s30, 1
      %p440 = por %p438, %p439
      %p442 = scmp.ne.s32.totalorder %s425, %s441
      %p443 = scmp.eq.s32.totalorder %s30, 0
      %p444 = por %p442, %p443
      %p445 = scmp.le.s32.totalorder 1, %s24
      %p446 = scmp.lt.s32.totalorder %s24, 3
      %p447 = pnand %p445, %p446
      %p448 = pneg %p447
      // Predicated region
      $region9: #{tpu_custom_call.1} parent=5 // pred_check
        _
      $region10: #{tpu_custom_call.1} parent=5 // pred_check_branch
        %450 = sbr.rel (%p447) target = $region12
      $region11: #{tpu_custom_call.1} parent=5 // pred_region
        %s451 = ssub.s32 %s24, 1
        // Predicated region
        $region13: #{tpu_custom_call.1} parent=11 // pred_check
          %p452 = pneg %p57
        $region14: #{tpu_custom_call.1} parent=11 // pred_check_branch
          %454 = sbr.rel (%p452) target = $region16
        $region15: #{tpu_custom_call.1} parent=11 // pred_region
          %456 = vsyncadd [#allocation4], 0
          %s458 = sshll.u32 %s0, 4
          %s459 = int_to_ptr.hbm [resolvable:$true] %s458
          %s460 = sshll.u32 [#allocation3], 4
          %s461 = int_to_ptr.vmem [resolvable:$true] %s460
          %463 = dma.hbm_to_vmem [thread:$0]  %s459, 128, %s461, [#allocation4]
        $region16: #{tpu_custom_call.1} parent=11 // pred_fallthru
          _
        // Predicated region
        $region17: #{tpu_custom_call.1} parent=11 // pred_check
          %p464 = pneg %p83
        $region18: #{tpu_custom_call.1} parent=11 // pred_check_branch
          %466 = sbr.rel (%p464) target = $region20
        $region19: #{tpu_custom_call.1} parent=11 // pred_region
          %s467 = smul.u32 2, %s33
          %469 = vsyncadd [#allocation7], 0
          %s470 = smul.addr %s467, 8
          %s471 = scalar_lea.hbm %s1, %s470
          %s472 = sshll.u32 %s471, 4
          %s473 = int_to_ptr.hbm [resolvable:$true] %s472
          %s474 = sshll.u32 [#allocation6], 4
          %s475 = int_to_ptr.vmem [resolvable:$true] %s474
          %480 = dma.hbm_to_vmem [thread:$0]  %s473, 256, %s475, [#allocation7], 128, 128, 8
        $region20: #{tpu_custom_call.1} parent=11 // pred_fallthru
          _
        // Predicated region
        $region21: #{tpu_custom_call.1} parent=11 // pred_check
          %p481 = pneg %p390
        $region22: #{tpu_custom_call.1} parent=11 // pred_check_branch
          %483 = sbr.rel (%p481) target = $region24
        $region23: #{tpu_custom_call.1} parent=11 // pred_region
          _
        $region24: #{tpu_custom_call.1} parent=11 // pred_fallthru
          _
        // Predicated region
        $region25: #{tpu_custom_call.1} parent=11 // pred_check
          %p484 = pneg %p411
        $region26: #{tpu_custom_call.1} parent=11 // pred_check_branch
          %486 = sbr.rel (%p484) target = $region28
        $region27: #{tpu_custom_call.1} parent=11 // pred_region
          _
        $region28: #{tpu_custom_call.1} parent=11 // pred_fallthru
          _
      $region12: #{tpu_custom_call.1} parent=5 // pred_fallthru
        _
      %p487 = scmp.lt.s32.totalorder %s24, 2
      // Predicated region
      $region29: #{tpu_custom_call.1} parent=5 // pred_check
        %p488 = pneg %p487
      $region30: #{tpu_custom_call.1} parent=5 // pred_check_branch
        %490 = sbr.rel (%p488) target = $region32
      $region31: #{tpu_custom_call.1} parent=5 // pred_region
        // Predicated region
        $region33: #{tpu_custom_call.1} parent=31 // pred_check
          %p491 = pneg %p103
        $region34: #{tpu_custom_call.1} parent=31 // pred_check_branch
          %493 = sbr.rel (%p491) target = $region36
        $region35: #{tpu_custom_call.1} parent=31 // pred_region
          %s494 = sand.u32 %s24, 1
          %s495 = scalar_lea.sflag [#allocation4], %s494
          %s496 = sand.u32 %s93, 1
          %s497 = scalar_lea.vmem [#allocation8], %s496
          %499 = vsyncadd %s495, 0
          %s500 = scalar_lea.hbm %s2, %s32
          %s502 = sshll.u32 %s500, 4
          %s503 = int_to_ptr.hbm [resolvable:$true] %s502
          %s504 = sshll.u32 %s497, 4
          %s505 = int_to_ptr.vmem [resolvable:$true] %s504
          %507 = dma.hbm_to_vmem [thread:$0]  %s503, 16, %s505, %s495
        $region36: #{tpu_custom_call.1} parent=31 // pred_fallthru
          _
        // Predicated region
        $region37: #{tpu_custom_call.1} parent=31 // pred_check
          %p508 = pneg %p129
        $region38: #{tpu_custom_call.1} parent=31 // pred_check_branch
          %510 = sbr.rel (%p508) target = $region40
        $region39: #{tpu_custom_call.1} parent=31 // pred_region
          %s511 = sand.u32 %s24, 1
          %s512 = scalar_lea.sflag [#allocation4], %s511
          %s513 = sand.u32 %s119, 1
          %s514 = scalar_lea.vmem [#allocation9], %s513
          %516 = vsyncadd %s512, 0
          %s517 = scalar_lea.hbm %s3, %s32
          %s519 = sshll.u32 %s517, 4
          %s520 = int_to_ptr.hbm [resolvable:$true] %s519
          %s521 = sshll.u32 %s514, 4
          %s522 = int_to_ptr.vmem [resolvable:$true] %s521
          %524 = dma.hbm_to_vmem [thread:$0]  %s520, 16, %s522, %s512
        $region40: #{tpu_custom_call.1} parent=31 // pred_fallthru
          _
        // Predicated region
        $region41: #{tpu_custom_call.1} parent=31 // pred_check
          %p525 = pneg %p155
        $region42: #{tpu_custom_call.1} parent=31 // pred_check_branch
          %527 = sbr.rel (%p525) target = $region44
        $region43: #{tpu_custom_call.1} parent=31 // pred_region
          %s528 = sand.u32 %s24, 1
          %s529 = scalar_lea.sflag [#allocation4], %s528
          %s530 = sand.u32 %s145, 1
          %s531 = smul.addr %s530, 192
          %s532 = scalar_lea.vmem [#allocation10], %s531
          %534 = vsyncadd %s529, 0
          %s535 = smul.addr %s32, 48
          %s536 = smul.addr %s535, 4
          %s537 = scalar_lea.hbm %s4, %s536
          %s538 = sshll.u32 %s537, 4
          %s539 = int_to_ptr.hbm [resolvable:$true] %s538
          %s540 = sshll.u32 %s532, 4
          %s541 = int_to_ptr.vmem [resolvable:$true] %s540
          %546 = dma.hbm_to_vmem [thread:$0]  %s539, 3072, %s541, %s529, 192, 192, 12
        $region44: #{tpu_custom_call.1} parent=31 // pred_fallthru
          _
        // Predicated region
        $region45: #{tpu_custom_call.1} parent=31 // pred_check
          %p547 = pneg %p181
        $region46: #{tpu_custom_call.1} parent=31 // pred_check_branch
          %549 = sbr.rel (%p547) target = $region48
        $region47: #{tpu_custom_call.1} parent=31 // pred_region
          %s550 = sand.u32 %s24, 1
          %s551 = scalar_lea.sflag [#allocation4], %s550
          %s552 = sand.u32 %s171, 1
          %s553 = smul.addr %s552, 64
          %s554 = scalar_lea.vmem [#allocation11], %s553
          %556 = vsyncadd %s551, 0
          %s557 = smul.addr %s32, 16
          %s558 = smul.addr %s557, 4
          %s559 = scalar_lea.hbm %s5, %s558
          %s560 = sshll.u32 %s559, 4
          %s561 = int_to_ptr.hbm [resolvable:$true] %s560
          %s562 = sshll.u32 %s554, 4
          %s563 = int_to_ptr.vmem [resolvable:$true] %s562
          %568 = dma.hbm_to_vmem [thread:$0]  %s561, 1024, %s563, %s551, 64, 64, 4
        $region48: #{tpu_custom_call.1} parent=31 // pred_fallthru
          _
        // Predicated region
        $region49: #{tpu_custom_call.1} parent=31 // pred_check
          %p569 = pneg %p207
        $region50: #{tpu_custom_call.1} parent=31 // pred_check_branch
          %571 = sbr.rel (%p569) target = $region52
        $region51: #{tpu_custom_call.1} parent=31 // pred_region
          %s572 = sand.u32 %s24, 1
          %s573 = scalar_lea.sflag [#allocation4], %s572
          %s574 = sand.u32 %s197, 1
          %s575 = scalar_lea.vmem [#allocation12], %s574
          %577 = vsyncadd %s573, 0
          %s578 = scalar_lea.hbm %s6, %s32
          %s580 = sshll.u32 %s578, 4
          %s581 = int_to_ptr.hbm [resolvable:$true] %s580
          %s582 = sshll.u32 %s575, 4
          %s583 = int_to_ptr.vmem [resolvable:$true] %s582
          %585 = dma.hbm_to_vmem [thread:$0]  %s581, 16, %s583, %s573
        $region52: #{tpu_custom_call.1} parent=31 // pred_fallthru
          _
        // Predicated region
        $region53: #{tpu_custom_call.1} parent=31 // pred_check
          %p586 = pneg %p233
        $region54: #{tpu_custom_call.1} parent=31 // pred_check_branch
          %588 = sbr.rel (%p586) target = $region56
        $region55: #{tpu_custom_call.1} parent=31 // pred_region
          %s589 = sand.u32 %s24, 1
          %s590 = scalar_lea.sflag [#allocation4], %s589
          %s591 = sand.u32 %s223, 1
          %s592 = scalar_lea.vmem [#allocation13], %s591
          %594 = vsyncadd %s590, 0
          %s595 = scalar_lea.hbm %s7, %s32
          %s597 = sshll.u32 %s595, 4
          %s598 = int_to_ptr.hbm [resolvable:$true] %s597
          %s599 = sshll.u32 %s592, 4
          %s600 = int_to_ptr.vmem [resolvable:$true] %s599
          %602 = dma.hbm_to_vmem [thread:$0]  %s598, 16, %s600, %s590
        $region56: #{tpu_custom_call.1} parent=31 // pred_fallthru
          _
        // Predicated region
        $region57: #{tpu_custom_call.1} parent=31 // pred_check
          %p603 = pneg %p259
        $region58: #{tpu_custom_call.1} parent=31 // pred_check_branch
          %605 = sbr.rel (%p603) target = $region60
        $region59: #{tpu_custom_call.1} parent=31 // pred_region
          %s606 = sand.u32 %s24, 1
          %s607 = scalar_lea.sflag [#allocation4], %s606
          %s608 = sand.u32 %s249, 1
          %s609 = scalar_lea.vmem [#allocation14], %s608
          %611 = vsyncadd %s607, 0
          %s612 = scalar_lea.hbm %s8, %s32
          %s614 = sshll.u32 %s612, 4
          %s615 = int_to_ptr.hbm [resolvable:$true] %s614
          %s616 = sshll.u32 %s609, 4
          %s617 = int_to_ptr.vmem [resolvable:$true] %s616
          %619 = dma.hbm_to_vmem [thread:$0]  %s615, 16, %s617, %s607
        $region60: #{tpu_custom_call.1} parent=31 // pred_fallthru
          _
        // Predicated region
        $region61: #{tpu_custom_call.1} parent=31 // pred_check
          %p620 = pneg %p285
        $region62: #{tpu_custom_call.1} parent=31 // pred_check_branch
          %622 = sbr.rel (%p620) target = $region64
        $region63: #{tpu_custom_call.1} parent=31 // pred_region
          %s623 = sand.u32 %s24, 1
          %s624 = scalar_lea.sflag [#allocation4], %s623
          %s625 = sand.u32 %s275, 1
          %s626 = smul.addr %s625, 256
          %s627 = scalar_lea.vmem [#allocation15], %s626
          %629 = vsyncadd %s624, 0
          %s630 = smul.addr %s32, 64
          %s631 = smul.addr %s630, 4
          %s632 = scalar_lea.hbm %s9, %s631
          %s633 = sshll.u32 %s632, 4
          %s634 = int_to_ptr.hbm [resolvable:$true] %s633
          %s635 = sshll.u32 %s627, 4
          %s636 = int_to_ptr.vmem [resolvable:$true] %s635
          %641 = dma.hbm_to_vmem [thread:$0]  %s634, 4096, %s636, %s624, 256, 256, 16
        $region64: #{tpu_custom_call.1} parent=31 // pred_fallthru
          _
        // Predicated region
        $region65: #{tpu_custom_call.1} parent=31 // pred_check
          %p642 = pneg %p311
        $region66: #{tpu_custom_call.1} parent=31 // pred_check_branch
          %644 = sbr.rel (%p642) target = $region68
        $region67: #{tpu_custom_call.1} parent=31 // pred_region
          %p645 = scmp.lt.s32.totalorder %s32, 1
          %s646 = scalar_select %p645, %s32, 1
          %s647 = smul.addr %s646, 4
          %s648 = scalar_lea.vmem %s10, %s647
        $region68: #{tpu_custom_call.1} parent=31 // pred_fallthru
          _
        // Predicated region
        $region69: #{tpu_custom_call.1} parent=31 // pred_check
          %p649 = pneg %p337
        $region70: #{tpu_custom_call.1} parent=31 // pred_check_branch
          %651 = sbr.rel (%p649) target = $region72
        $region71: #{tpu_custom_call.1} parent=31 // pred_region
          %s652 = sand.u32 %s24, 1
          %s653 = scalar_lea.sflag [#allocation4], %s652
          %s654 = sand.u32 %s327, 1
          %s655 = smul.addr %s654, 256
          %s656 = scalar_lea.vmem [#allocation16], %s655
          %658 = vsyncadd %s653, 0
          %s659 = smul.addr %s32, 64
          %s660 = smul.addr %s659, 4
          %s661 = scalar_lea.hbm %s11, %s660
          %s662 = sshll.u32 %s661, 4
          %s663 = int_to_ptr.hbm [resolvable:$true] %s662
          %s664 = sshll.u32 %s656, 4
          %s665 = int_to_ptr.vmem [resolvable:$true] %s664
          %670 = dma.hbm_to_vmem [thread:$0]  %s663, 4096, %s665, %s653, 64, 64, 4
        $region72: #{tpu_custom_call.1} parent=31 // pred_fallthru
          _
        // Predicated region
        $region73: #{tpu_custom_call.1} parent=31 // pred_check
          %p671 = pneg %p363
        $region74: #{tpu_custom_call.1} parent=31 // pred_check_branch
          %673 = sbr.rel (%p671) target = $region76
        $region75: #{tpu_custom_call.1} parent=31 // pred_region
          %p674 = scmp.lt.s32.totalorder %s32, 1
          %s675 = scalar_select %p674, %s32, 1
          %s676 = scalar_lea.vmem %s12, %s675
        $region76: #{tpu_custom_call.1} parent=31 // pred_fallthru
          _
      $region32: #{tpu_custom_call.1} parent=5 // pred_fallthru
        _
      %p677 = scmp.le.s32.totalorder 1, %s24
      %p678 = scmp.lt.s32.totalorder %s24, 3
      %p679 = pnand %p677, %p678
      %p680 = pneg %p679
      // Predicated region
      $region77: #{tpu_custom_call.1} parent=5 // pred_check
        _
      $region78: #{tpu_custom_call.1} parent=5 // pred_check_branch
        %682 = sbr.rel (%p679) target = $region80
      $region79: #{tpu_custom_call.1} parent=5 // pred_region
        %s683 = ssub.s32 %s24, 1
        // Predicated region
        $region81: #{tpu_custom_call.1} parent=79 // pred_check
          %p684 = pneg %p57
        $region82: #{tpu_custom_call.1} parent=79 // pred_check_branch
          %686 = sbr.rel (%p684) target = $region84
        $region83: #{tpu_custom_call.1} parent=79 // pred_region
          %688 = dma.done [#allocation4], 128
        $region84: #{tpu_custom_call.1} parent=79 // pred_fallthru
          _
        // Predicated region
        $region85: #{tpu_custom_call.1} parent=79 // pred_check
          %p689 = pneg %p83
        $region86: #{tpu_custom_call.1} parent=79 // pred_check_branch
          %691 = sbr.rel (%p689) target = $region88
        $region87: #{tpu_custom_call.1} parent=79 // pred_region
          %693 = dma.done [#allocation7], 256
        $region88: #{tpu_custom_call.1} parent=79 // pred_fallthru
          _
        %s694 = sand.u32 %s29, 1
        %s695 = scalar_lea.sflag [#allocation4], %s694
        %s696 = sand.u32 %s96, 1
        %s697 = scalar_lea.vmem [#allocation8], %s696
        // Predicated region
        $region89: #{tpu_custom_call.1} parent=79 // pred_check
          %p698 = pneg %p109
        $region90: #{tpu_custom_call.1} parent=79 // pred_check_branch
          %700 = sbr.rel (%p698) target = $region92
        $region91: #{tpu_custom_call.1} parent=79 // pred_region
          %702 = dma.done %s695, 16
        $region92: #{tpu_custom_call.1} parent=79 // pred_fallthru
          _
        %s703 = sand.u32 %s29, 1
        %s704 = scalar_lea.sflag [#allocation4], %s703
        %s705 = sand.u32 %s122, 1
        %s706 = scalar_lea.vmem [#allocation9], %s705
        // Predicated region
        $region93: #{tpu_custom_call.1} parent=79 // pred_check
          %p707 = pneg %p135
        $region94: #{tpu_custom_call.1} parent=79 // pred_check_branch
          %709 = sbr.rel (%p707) target = $region96
        $region95: #{tpu_custom_call.1} parent=79 // pred_region
          %711 = dma.done %s704, 16
        $region96: #{tpu_custom_call.1} parent=79 // pred_fallthru
          _
        %s712 = sand.u32 %s29, 1
        %s713 = scalar_lea.sflag [#allocation4], %s712
        %s714 = sand.u32 %s148, 1
        %s715 = smul.addr %s714, 192
        %s716 = scalar_lea.vmem [#allocation10], %s715
        // Predicated region
        $region97: #{tpu_custom_call.1} parent=79 // pred_check
          %p717 = pneg %p161
        $region98: #{tpu_custom_call.1} parent=79 // pred_check_branch
          %719 = sbr.rel (%p717) target = $region100
        $region99: #{tpu_custom_call.1} parent=79 // pred_region
          %721 = dma.done %s713, 3072
        $region100: #{tpu_custom_call.1} parent=79 // pred_fallthru
          _
        %s722 = sand.u32 %s29, 1
        %s723 = scalar_lea.sflag [#allocation4], %s722
        %s724 = sand.u32 %s174, 1
        %s725 = smul.addr %s724, 64
        %s726 = scalar_lea.vmem [#allocation11], %s725
        // Predicated region
        $region101: #{tpu_custom_call.1} parent=79 // pred_check
          %p727 = pneg %p187
        $region102: #{tpu_custom_call.1} parent=79 // pred_check_branch
          %729 = sbr.rel (%p727) target = $region104
        $region103: #{tpu_custom_call.1} parent=79 // pred_region
          %731 = dma.done %s723, 1024
        $region104: #{tpu_custom_call.1} parent=79 // pred_fallthru
          _
        %s732 = sand.u32 %s29, 1
        %s733 = scalar_lea.sflag [#allocation4], %s732
        %s734 = sand.u32 %s200, 1
        %s735 = scalar_lea.vmem [#allocation12], %s734
        // Predicated region
        $region105: #{tpu_custom_call.1} parent=79 // pred_check
          %p736 = pneg %p213
        $region106: #{tpu_custom_call.1} parent=79 // pred_check_branch
          %738 = sbr.rel (%p736) target = $region108
        $region107: #{tpu_custom_call.1} parent=79 // pred_region
          %740 = dma.done %s733, 16
        $region108: #{tpu_custom_call.1} parent=79 // pred_fallthru
          _
        %s741 = sand.u32 %s29, 1
        %s742 = scalar_lea.sflag [#allocation4], %s741
        %s743 = sand.u32 %s226, 1
        %s744 = scalar_lea.vmem [#allocation13], %s743
        // Predicated region
        $region109: #{tpu_custom_call.1} parent=79 // pred_check
          %p745 = pneg %p239
        $region110: #{tpu_custom_call.1} parent=79 // pred_check_branch
          %747 = sbr.rel (%p745) target = $region112
        $region111: #{tpu_custom_call.1} parent=79 // pred_region
          %749 = dma.done %s742, 16
        $region112: #{tpu_custom_call.1} parent=79 // pred_fallthru
          _
        %s750 = sand.u32 %s29, 1
        %s751 = scalar_lea.sflag [#allocation4], %s750
        %s752 = sand.u32 %s252, 1
        %s753 = scalar_lea.vmem [#allocation14], %s752
        // Predicated region
        $region113: #{tpu_custom_call.1} parent=79 // pred_check
          %p754 = pneg %p265
        $region114: #{tpu_custom_call.1} parent=79 // pred_check_branch
          %756 = sbr.rel (%p754) target = $region116
        $region115: #{tpu_custom_call.1} parent=79 // pred_region
          %758 = dma.done %s751, 16
        $region116: #{tpu_custom_call.1} parent=79 // pred_fallthru
          _
        %s759 = sand.u32 %s29, 1
        %s760 = scalar_lea.sflag [#allocation4], %s759
        %s761 = sand.u32 %s278, 1
        %s762 = smul.addr %s761, 256
        %s763 = scalar_lea.vmem [#allocation15], %s762
        // Predicated region
        $region117: #{tpu_custom_call.1} parent=79 // pred_check
          %p764 = pneg %p291
        $region118: #{tpu_custom_call.1} parent=79 // pred_check_branch
          %766 = sbr.rel (%p764) target = $region120
        $region119: #{tpu_custom_call.1} parent=79 // pred_region
          %768 = dma.done %s760, 4096
        $region120: #{tpu_custom_call.1} parent=79 // pred_fallthru
          _
        %s769 = sand.u32 %s29, 1
        %s770 = scalar_lea.sflag [#allocation4], %s769
        %s771 = sand.u32 %s330, 1
        %s772 = smul.addr %s771, 256
        %s773 = scalar_lea.vmem [#allocation16], %s772
        // Predicated region
        $region121: #{tpu_custom_call.1} parent=79 // pred_check
          %p774 = pneg %p343
        $region122: #{tpu_custom_call.1} parent=79 // pred_check_branch
          %776 = sbr.rel (%p774) target = $region124
        $region123: #{tpu_custom_call.1} parent=79 // pred_region
          %778 = dma.done %s770, 4096
        $region124: #{tpu_custom_call.1} parent=79 // pred_fallthru
          _
        %p779 = pneg %p57
        %p780 = pneg %p54
        %p781 = pneg %p83
        %p782 = pneg %p80
        %s783 = sand.u32 %s29, 1
        %s784 = scalar_lea.sflag [#allocation4], %s783
        %s785 = sand.u32 %s96, 1
        %s786 = scalar_lea.vmem [#allocation8], %s785
        %p787 = pneg %p109
        %p788 = pneg %p106
        %s789 = sand.u32 %s29, 1
        %s790 = scalar_lea.sflag [#allocation4], %s789
        %s791 = sand.u32 %s122, 1
        %s792 = scalar_lea.vmem [#allocation9], %s791
        %p793 = pneg %p135
        %p794 = pneg %p132
        %s795 = sand.u32 %s29, 1
        %s796 = scalar_lea.sflag [#allocation4], %s795
        %s797 = sand.u32 %s148, 1
        %s798 = smul.addr %s797, 192
        %s799 = scalar_lea.vmem [#allocation10], %s798
        %p800 = pneg %p161
        %p801 = pneg %p158
        %s802 = sand.u32 %s29, 1
        %s803 = scalar_lea.sflag [#allocation4], %s802
        %s804 = sand.u32 %s174, 1
        %s805 = smul.addr %s804, 64
        %s806 = scalar_lea.vmem [#allocation11], %s805
        %p807 = pneg %p187
        %p808 = pneg %p184
        %s809 = sand.u32 %s29, 1
        %s810 = scalar_lea.sflag [#allocation4], %s809
        %s811 = sand.u32 %s200, 1
        %s812 = scalar_lea.vmem [#allocation12], %s811
        %p813 = pneg %p213
        %p814 = pneg %p210
        %s815 = sand.u32 %s29, 1
        %s816 = scalar_lea.sflag [#allocation4], %s815
        %s817 = sand.u32 %s226, 1
        %s818 = scalar_lea.vmem [#allocation13], %s817
        %p819 = pneg %p239
        %p820 = pneg %p236
        %s821 = sand.u32 %s29, 1
        %s822 = scalar_lea.sflag [#allocation4], %s821
        %s823 = sand.u32 %s252, 1
        %s824 = scalar_lea.vmem [#allocation14], %s823
        %p825 = pneg %p265
        %p826 = pneg %p262
        %s827 = sand.u32 %s29, 1
        %s828 = scalar_lea.sflag [#allocation4], %s827
        %s829 = sand.u32 %s278, 1
        %s830 = smul.addr %s829, 256
        %s831 = scalar_lea.vmem [#allocation15], %s830
        %p832 = pneg %p291
        %p833 = pneg %p288
        %p834 = scmp.lt.s32.totalorder %s34, 1
        %s835 = scalar_select %p834, %s34, 1
        %s836 = smul.addr %s835, 4
        %s837 = scalar_lea.vmem %s10, %s836
        %p838 = pneg %p317
        %p839 = pneg %p314
        %s840 = sand.u32 %s29, 1
        %s841 = scalar_lea.sflag [#allocation4], %s840
        %s842 = sand.u32 %s330, 1
        %s843 = smul.addr %s842, 256
        %s844 = scalar_lea.vmem [#allocation16], %s843
        %p845 = pneg %p343
        %p846 = pneg %p340
        %p847 = scmp.lt.s32.totalorder %s34, 1
        %s848 = scalar_select %p847, %s34, 1
        %s849 = scalar_lea.vmem %s12, %s848
        %p850 = pneg %p369
        %p851 = pneg %p366
        %p852 = pneg %p390
        %p853 = pneg %p387
        %p854 = pneg %p411
        %p855 = pneg %p408
        %p856 = pneg %p437
        %p857 = pneg %p434
        %s858 = smul.u32 2, %s33
        %p859 = scmp.lt.s32.totalorder %s34, 1
        %s860 = scalar_select %p859, %s34, 1
        %s861 = smul.addr %s860, 4
        %s862 = scalar_lea.vmem %s10, %s861
        %p863 = scmp.lt.s32.totalorder %s34, 1
        %s864 = scalar_select %p863, %s34, 1
        %s865 = scalar_lea.vmem %s12, %s864
        %s866 = smul.u32 2, %s33
        %p868 = scmp.eq.s32.totalorder %s34, 0
        // Predicated region
        $region125: #{tpu_custom_call.1} parent=79 // pred_check
          %p869 = pneg %p868
        $region126: #{tpu_custom_call.1} parent=79 // pred_check_branch
          %871 = sbr.rel (%p869) target = $region128
        $region127: #{tpu_custom_call.1} parent=79 // pred_region
          %v872 = vld [vmem:[#allocation6] sm:$0xff]
          %v873 = vld [vmem:[#allocation6 + $0x8] sm:$0xff]
          %874 = vst [vmem:[#allocation2] sm:$0xff] %v872
          %875 = vst [vmem:[#allocation2 + $0x8] sm:$0xff] %v873
        $region128: #{tpu_custom_call.1} parent=79 // pred_fallthru
          _
        %v876 = vld [vmem:[#allocation2] sm:$0xff]
        %v877 = vld [vmem:[#allocation2 + $0x8] sm:$0xff]
        %v878 = vld [vmem:[#allocation3] sm:$0xff]
        %v879 = vld [vmem:[%s697] sm:$0x1]
        %v880 = vld [vmem:[%s706] sm:$0x1]
        %881 = vadd.xlane.f32.xlu0 %v876
        %v882 = vpop.xlane.xlu0 %881
        %883 = vadd.xlane.f32.xlu0 %v877
        %v884 = vpop.xlane.xlu0 %883
        %v885 = vrcp.pop 128.0
        %v886 = vmul.f32 128.0, %v885
        %v887 = vsub.f32 1.0, %v886
        %v888 = vmul.f32 %v885, %v887
        %v889 = vadd.f32 %v885, %v888
        %vm890 = vweird.f32 %v885
        %v891 = vsel %vm890, %v885, %v889
        %v892 = vmul.f32 %v882, %v891
        %v893 = vmul.f32 %v884, %v891
        %v894 = vsub.f32 %v876, %v892
        %v895 = vsub.f32 %v877, %v893
        %v896 = vmul.f32 %v894, %v894
        %v897 = vmul.f32 %v895, %v895
        %898 = vadd.xlane.f32.xlu0 %v896
        %v899 = vpop.xlane.xlu0 %898
        %900 = vadd.xlane.f32.xlu0 %v897
        %v901 = vpop.xlane.xlu0 %900
        %v902 = vmul.f32 %v899, %v891
        %v903 = vmul.f32 %v901, %v891
        %v904 = vadd.f32 %v902, 1e-05
        %v905 = vadd.f32 %v903, 1e-05
        %v906 = vrsqrt.pop %v904
        %v907 = vmul.f32 %v906, %v904
        %v908 = vmul.f32 %v907, %v906
        %v909 = vmul.f32 0.5, %v908
        %v910 = vsub.f32 1.5, %v909
        %v911 = vmul.f32 %v906, %v910
        %vm912 = vweird.f32 %v904
        %vm913 = vweird.f32 %v906
        %vm914 = vmor %vm912, %vm913
        %v915 = vsel %vm914, %v906, %v911
        %v916 = vrsqrt.pop %v905
        %v917 = vmul.f32 %v916, %v905
        %v918 = vmul.f32 %v917, %v916
        %v919 = vmul.f32 0.5, %v918
        %v920 = vsub.f32 1.5, %v919
        %v921 = vmul.f32 %v916, %v920
        %vm922 = vweird.f32 %v905
        %vm923 = vweird.f32 %v916
        %vm924 = vmor %vm922, %vm923
        %v925 = vsel %vm924, %v916, %v921
        %v926 = vmul.f32 %v894, %v915
        %v927 = vmul.f32 %v895, %v925
        %v929 = vperm.slane %v879, 0
        %v931 = vmul.f32 %v926, %v929
        %v932 = vmul.f32 %v927, %v929
        %v934 = vperm.slane %v880, 0
        %v936 = vadd.f32 %v931, %v934
        %v937 = vadd.f32 %v932, %v934
        %v938 = vpack.c.bf16 %v936, %v936
        %v939 = vpack.c.bf16 %v937, %v937
        %v940 = vld [vmem:[%s716] sm:$0xff]
        %v941 = vld [vmem:[%s716 + $0x8] sm:$0xf]
        %v942 = vld [vmem:[%s716 + $0xc] sm:$0xff]
        %v943 = vld [vmem:[%s716 + $0x14] sm:$0xf]
        %v944 = vld [vmem:[%s716 + $0x18] sm:$0xff]
        %v945 = vld [vmem:[%s716 + $0x20] sm:$0xf]
        %v946 = vld [vmem:[%s716 + $0x24] sm:$0xff]
        %v947 = vld [vmem:[%s716 + $0x2c] sm:$0xf]
        %v948 = vld [vmem:[%s716 + $0x30] sm:$0xff]
        %v949 = vld [vmem:[%s716 + $0x38] sm:$0xf]
        %v950 = vld [vmem:[%s716 + $0x3c] sm:$0xff]
        %v951 = vld [vmem:[%s716 + $0x44] sm:$0xf]
        %v952 = vld [vmem:[%s716 + $0x48] sm:$0xff]
        %v953 = vld [vmem:[%s716 + $0x50] sm:$0xf]
        %v954 = vld [vmem:[%s716 + $0x54] sm:$0xff]
        %v955 = vld [vmem:[%s716 + $0x5c] sm:$0xf]
        %v956 = vld [vmem:[%s716 + $0x60] sm:$0xff]
        %v957 = vld [vmem:[%s716 + $0x68] sm:$0xf]
        %v958 = vld [vmem:[%s716 + $0x6c] sm:$0xff]
        %v959 = vld [vmem:[%s716 + $0x74] sm:$0xf]
        %v960 = vld [vmem:[%s716 + $0x78] sm:$0xff]
        %v961 = vld [vmem:[%s716 + $0x80] sm:$0xf]
        %v962 = vld [vmem:[%s716 + $0x84] sm:$0xff]
        %v963 = vld [vmem:[%s716 + $0x8c] sm:$0xf]
        %v964 = vld [vmem:[%s716 + $0x90] sm:$0xff]
        %v965 = vld [vmem:[%s716 + $0x98] sm:$0xf]
        %v966 = vld [vmem:[%s716 + $0x9c] sm:$0xff]
        %v967 = vld [vmem:[%s716 + $0xa4] sm:$0xf]
        %v968 = vld [vmem:[%s716 + $0xa8] sm:$0xff]
        %v969 = vld [vmem:[%s716 + $0xb0] sm:$0xf]
        %v970 = vld [vmem:[%s716 + $0xb4] sm:$0xff]
        %v971 = vld [vmem:[%s716 + $0xbc] sm:$0xf]
        %v974 = vunpack.c.l.b16 %v938
        %v975 = vunpack.c.l.b16 %v939
        %v976 = vpack.c.b16 %v975, %v974
        %v1010 = vunpack.c.l.b16 %v940
        %v1011 = vunpack.c.h.b16 %v940
        %v1012 = vunpack.c.l.b16 %v941
        %v1013 = vunpack.c.l.b16 %v942
        %v1014 = vunpack.c.h.b16 %v942
        %v1015 = vunpack.c.l.b16 %v943
        %v1016 = vunpack.c.l.b16 %v944
        %v1017 = vunpack.c.h.b16 %v944
        %v1018 = vunpack.c.l.b16 %v945
        %v1019 = vunpack.c.l.b16 %v946
        %v1020 = vunpack.c.h.b16 %v946
        %v1021 = vunpack.c.l.b16 %v947
        %v1022 = vunpack.c.l.b16 %v948
        %v1023 = vunpack.c.h.b16 %v948
        %v1024 = vunpack.c.l.b16 %v949
        %v1025 = vunpack.c.l.b16 %v950
        %v1026 = vunpack.c.h.b16 %v950
        %v1027 = vunpack.c.l.b16 %v951
        %v1028 = vunpack.c.l.b16 %v952
        %v1029 = vunpack.c.h.b16 %v952
        %v1030 = vunpack.c.l.b16 %v953
        %v1031 = vunpack.c.l.b16 %v954
        %v1032 = vunpack.c.h.b16 %v954
        %v1033 = vunpack.c.l.b16 %v955
        %v1034 = vunpack.c.l.b16 %v956
        %v1035 = vunpack.c.h.b16 %v956
        %v1036 = vunpack.c.l.b16 %v957
        %v1037 = vunpack.c.l.b16 %v958
        %v1038 = vunpack.c.h.b16 %v958
        %v1039 = vunpack.c.l.b16 %v959
        %v1040 = vunpack.c.l.b16 %v960
        %v1041 = vunpack.c.h.b16 %v960
        %v1042 = vunpack.c.l.b16 %v961
        %v1043 = vunpack.c.l.b16 %v962
        %v1044 = vunpack.c.h.b16 %v962
        %v1045 = vunpack.c.l.b16 %v963
        %v1046 = vunpack.c.l.b16 %v964
        %v1047 = vunpack.c.h.b16 %v964
        %v1048 = vunpack.c.l.b16 %v965
        %v1049 = vunpack.c.l.b16 %v966
        %v1050 = vunpack.c.h.b16 %v966
        %v1051 = vunpack.c.l.b16 %v967
        %v1052 = vunpack.c.l.b16 %v968
        %v1053 = vunpack.c.h.b16 %v968
        %v1054 = vunpack.c.l.b16 %v969
        %v1055 = vunpack.c.l.b16 %v970
        %v1056 = vunpack.c.h.b16 %v970
        %v1057 = vunpack.c.l.b16 %v971
        %v1058 = vpack.c.b16 %v1013, %v1010
        %v1059 = vpack.c.b16 %v1014, %v1011
        %v1060 = vpack.c.b16 %v1015, %v1012
        %v1061 = vpack.c.b16 %v1019, %v1016
        %v1062 = vpack.c.b16 %v1020, %v1017
        %v1063 = vpack.c.b16 %v1021, %v1018
        %v1064 = vpack.c.b16 %v1025, %v1022
        %v1065 = vpack.c.b16 %v1026, %v1023
        %v1066 = vpack.c.b16 %v1027, %v1024
        %v1067 = vpack.c.b16 %v1031, %v1028
        %v1068 = vpack.c.b16 %v1032, %v1029
        %v1069 = vpack.c.b16 %v1033, %v1030
        %v1070 = vpack.c.b16 %v1037, %v1034
        %v1071 = vpack.c.b16 %v1038, %v1035
        %v1072 = vpack.c.b16 %v1039, %v1036
        %v1073 = vpack.c.b16 %v1043, %v1040
        %v1074 = vpack.c.b16 %v1044, %v1041
        %v1075 = vpack.c.b16 %v1045, %v1042
        %v1076 = vpack.c.b16 %v1049, %v1046
        %v1077 = vpack.c.b16 %v1050, %v1047
        %v1078 = vpack.c.b16 %v1051, %v1048
        %v1079 = vpack.c.b16 %v1055, %v1052
        %v1080 = vpack.c.b16 %v1056, %v1053
        %v1081 = vpack.c.b16 %v1057, %v1054
        %1106 = vmatpush.bf16.msra.mxu0 %v1079
        %1107 = vmatpush.bf16.msra.mxu0 %v1076
        %1108 = vmatpush.bf16.msra.mxu0 %v1073
        %1109 = vmatpush.bf16.msra.mxu0 %v1070
        %1110 = vmatpush.bf16.msra.mxu0 %v1067
        %1111 = vmatpush.bf16.msra.mxu0 %v1064
        %1112 = vmatpush.bf16.msra.mxu0 %v1061
        %1113 = vmatpush.bf16.msra.mxu0 %v1058
        %1114 = vmatmul.bf16.gmra.mxu0 %v976
        %v1115 = vpop.f32.mrf.mxu0
        %v1116 = vadd.f32 0.0, %v1115
        %v1117 = vpop.f32.mrf.mxu0
        %v1118 = vadd.f32 0.0, %v1117
        %1119 = vdwg.mxu0
        %1120 = vmatpush.bf16.msra.mxu0 %v1080
        %1121 = vmatpush.bf16.msra.mxu0 %v1077
        %1122 = vmatpush.bf16.msra.mxu0 %v1074
        %1123 = vmatpush.bf16.msra.mxu0 %v1071
        %1124 = vmatpush.bf16.msra.mxu0 %v1068
        %1125 = vmatpush.bf16.msra.mxu0 %v1065
        %1126 = vmatpush.bf16.msra.mxu0 %v1062
        %1127 = vmatpush.bf16.msra.mxu0 %v1059
        %1128 = vmatmul.bf16.gmra.mxu0 %v976
        %v1129 = vpop.f32.mrf.mxu0
        %v1130 = vadd.f32 0.0, %v1129
        %v1131 = vpop.f32.mrf.mxu0
        %v1132 = vadd.f32 0.0, %v1131
        %1133 = vdwg.mxu0
        %1134 = vmatpush.bf16.msra.mxu0 %v1081
        %1135 = vmatpush.bf16.msra.mxu0 %v1078
        %1136 = vmatpush.bf16.msra.mxu0 %v1075
        %1137 = vmatpush.bf16.msra.mxu0 %v1072
        %1138 = vmatpush.bf16.msra.mxu0 %v1069
        %1139 = vmatpush.bf16.msra.mxu0 %v1066
        %1140 = vmatpush.bf16.msra.mxu0 %v1063
        %1141 = vmatpush.bf16.msra.mxu0 %v1060
        %1142 = vmatmul.bf16.gmra.mxu0 %v976
        %v1143 = vpop.f32.mrf.mxu0
        %v1144 = vadd.f32 0.0, %v1143
        %v1145 = vpop.f32.mrf.mxu0
        %v1146 = vadd.f32 0.0, %v1145
        %1147 = vdwg.mxu0
        %v1148 = vmul.f32 %v1116, 0.17677669
        %v1149 = vmul.f32 %v1118, 0.17677669
        %1151 = vrot.lane.b32.xlu0 %v1148, 96
        %v1152 = vpop.permute.xlu0 %1151
        %1154 = vrot.lane.b32.xlu0 %v1148, 64
        %v1155 = vpop.permute.xlu0 %1154
        %1157 = vrot.lane.b32.xlu0 %v1148, 32
        %v1158 = vpop.permute.xlu0 %1157
        %v1160 = vrot.slane %v1155, 4
        %vm1161 = vcmask 1047556
        %v1162 = vsel %vm1161, %v1160, %v1148
        %v1163 = vrot.slane %v1148, 4
        %v1164 = vsel %vm1161, %v1155, %v1163
        %v1166 = vunpack.c.l.s4 1983009808
        %v1167 = vunpack.c.0.s8 %v1166
        %v1168 = vperm.slane %v1162, %v1167
        %v1170 = vunpack.c.l.s4 1983009808
        %v1171 = vunpack.c.0.s8 %v1170
        %v1172 = vperm.slane %v1164, %v1171
        %v1173 = vrot.slane %v1158, 4
        %v1174 = vsel %vm1161, %v1173, %v1152
        %v1175 = vrot.slane %v1152, 4
        %v1176 = vsel %vm1161, %v1158, %v1175
        %v1178 = vunpack.c.l.s4 1983009808
        %v1179 = vunpack.c.0.s8 %v1178
        %v1180 = vperm.slane %v1174, %v1179
        %v1182 = vunpack.c.l.s4 1983009808
        %v1183 = vunpack.c.0.s8 %v1182
        %v1184 = vperm.slane %v1176, %v1183
        %v1185 = vrot.slane %v1180, 4
        %v1186 = vsel %vm1161, %v1185, %v1168
        %v1187 = vrot.slane %v1168, 4
        %v1188 = vsel %vm1161, %v1180, %v1187
        %v1190 = vunpack.c.l.s4 1934713408
        %v1191 = vunpack.c.0.s8 %v1190
        %v1192 = vperm.slane %v1186, %v1191
        %v1194 = vunpack.c.l.s4 1934713408
        %v1195 = vunpack.c.0.s8 %v1194
        %v1196 = vperm.slane %v1188, %v1195
        %v1197 = vrot.slane %v1184, 4
        %v1198 = vsel %vm1161, %v1197, %v1172
        %v1199 = vrot.slane %v1172, 4
        %v1200 = vsel %vm1161, %v1184, %v1199
        %v1202 = vunpack.c.l.s4 1934713408
        %v1203 = vunpack.c.0.s8 %v1202
        %v1204 = vperm.slane %v1198, %v1203
        %v1206 = vunpack.c.l.s4 1934713408
        %v1207 = vunpack.c.0.s8 %v1206
        %v1208 = vperm.slane %v1200, %v1207
        %v1209 = vrot.slane %v1192, 4
        %v1210 = vsel %vm1161, 0.0, %v1209
        %v1211 = vrot.slane %v1196, 4
        %v1212 = vsel %vm1161, 0.0, %v1211
        %v1213 = vrot.slane %v1204, 4
        %v1214 = vsel %vm1161, 0.0, %v1213
        %v1215 = vrot.slane %v1208, 4
        %v1216 = vsel %vm1161, 0.0, %v1215
        %v1217 = vsel %vm1161, %v1211, %v1192
        %v1219 = vunpack.c.l.s4 1983009808
        %v1220 = vunpack.c.0.s8 %v1219
        %v1221 = vperm.slane %v1217, %v1220
        %v1222 = vrot.slane %v1212, 4
        %v1223 = vsel %vm1161, %v1222, %v1210
        %v1225 = vunpack.c.l.s4 1983009808
        %v1226 = vunpack.c.0.s8 %v1225
        %v1227 = vperm.slane %v1223, %v1226
        %v1228 = vsel %vm1161, %v1215, %v1204
        %v1230 = vunpack.c.l.s4 1983009808
        %v1231 = vunpack.c.0.s8 %v1230
        %v1232 = vperm.slane %v1228, %v1231
        %v1233 = vrot.slane %v1216, 4
        %v1234 = vsel %vm1161, %v1233, %v1214
        %v1236 = vunpack.c.l.s4 1983009808
        %v1237 = vunpack.c.0.s8 %v1236
        %v1238 = vperm.slane %v1234, %v1237
        %v1239 = vrot.slane %v1227, 4
        %v1240 = vsel %vm1161, %v1239, %v1221
        %v1241 = vrot.slane %v1221, 4
        %v1242 = vsel %vm1161, %v1227, %v1241
        %v1244 = vunpack.c.l.s4 1934713408
        %v1245 = vunpack.c.0.s8 %v1244
        %v1246 = vperm.slane %v1240, %v1245
        %v1248 = vunpack.c.l.s4 1934713408
        %v1249 = vunpack.c.0.s8 %v1248
        %v1250 = vperm.slane %v1242, %v1249
        %v1251 = vrot.slane %v1238, 4
        %v1252 = vsel %vm1161, %v1251, %v1232
        %v1253 = vrot.slane %v1232, 4
        %v1254 = vsel %vm1161, %v1238, %v1253
        %v1256 = vunpack.c.l.s4 1934713408
        %v1257 = vunpack.c.0.s8 %v1256
        %v1258 = vperm.slane %v1252, %v1257
        %v1260 = vunpack.c.l.s4 1934713408
        %v1261 = vunpack.c.0.s8 %v1260
        %v1262 = vperm.slane %v1254, %v1261
        %v1263 = vrot.slane %v1258, 4
        %v1264 = vsel %vm1161, %v1263, %v1246
        %v1265 = vrot.slane %v1246, 4
        %v1266 = vsel %vm1161, %v1258, %v1265
        %v1267 = vrot.slane %v1262, 4
        %v1268 = vsel %vm1161, %v1267, %v1250
        %v1269 = vrot.slane %v1250, 4
        %v1270 = vsel %vm1161, %v1262, %v1269
        %v1271 = vpack.c.bf16 %v1264, %v1264
        %v1272 = vpack.c.bf16 %v1266, %v1266
        %v1273 = vpack.c.bf16 %v1268, %v1268
        %v1274 = vpack.c.bf16 %v1270, %v1270
        %1276 = vrot.lane.b32.xlu0 %v1130, 96
        %v1277 = vpop.permute.xlu0 %1276
        %1279 = vrot.lane.b32.xlu0 %v1130, 64
        %v1280 = vpop.permute.xlu0 %1279
        %1282 = vrot.lane.b32.xlu0 %v1130, 32
        %v1283 = vpop.permute.xlu0 %1282
        %v1285 = vrot.slane %v1280, 4
        %v1286 = vsel %vm1161, %v1285, %v1130
        %v1287 = vrot.slane %v1130, 4
        %v1288 = vsel %vm1161, %v1280, %v1287
        %v1290 = vunpack.c.l.s4 1983009808
        %v1291 = vunpack.c.0.s8 %v1290
        %v1292 = vperm.slane %v1286, %v1291
        %v1294 = vunpack.c.l.s4 1983009808
        %v1295 = vunpack.c.0.s8 %v1294
        %v1296 = vperm.slane %v1288, %v1295
        %v1297 = vrot.slane %v1283, 4
        %v1298 = vsel %vm1161, %v1297, %v1277
        %v1299 = vrot.slane %v1277, 4
        %v1300 = vsel %vm1161, %v1283, %v1299
        %v1302 = vunpack.c.l.s4 1983009808
        %v1303 = vunpack.c.0.s8 %v1302
        %v1304 = vperm.slane %v1298, %v1303
        %v1306 = vunpack.c.l.s4 1983009808
        %v1307 = vunpack.c.0.s8 %v1306
        %v1308 = vperm.slane %v1300, %v1307
        %v1309 = vrot.slane %v1304, 4
        %v1310 = vsel %vm1161, %v1309, %v1292
        %v1311 = vrot.slane %v1292, 4
        %v1312 = vsel %vm1161, %v1304, %v1311
        %v1314 = vunpack.c.l.s4 1934713408
        %v1315 = vunpack.c.0.s8 %v1314
        %v1316 = vperm.slane %v1310, %v1315
        %v1318 = vunpack.c.l.s4 1934713408
        %v1319 = vunpack.c.0.s8 %v1318
        %v1320 = vperm.slane %v1312, %v1319
        %v1321 = vrot.slane %v1308, 4
        %v1322 = vsel %vm1161, %v1321, %v1296
        %v1323 = vrot.slane %v1296, 4
        %v1324 = vsel %vm1161, %v1308, %v1323
        %v1326 = vunpack.c.l.s4 1934713408
        %v1327 = vunpack.c.0.s8 %v1326
        %v1328 = vperm.slane %v1322, %v1327
        %v1330 = vunpack.c.l.s4 1934713408
        %v1331 = vunpack.c.0.s8 %v1330
        %v1332 = vperm.slane %v1324, %v1331
        %v1333 = vrot.slane %v1316, 4
        %v1334 = vsel %vm1161, 0.0, %v1333
        %v1335 = vrot.slane %v1320, 4
        %v1336 = vsel %vm1161, 0.0, %v1335
        %v1337 = vrot.slane %v1328, 4
        %v1338 = vsel %vm1161, 0.0, %v1337
        %v1339 = vrot.slane %v1332, 4
        %v1340 = vsel %vm1161, 0.0, %v1339
        %v1341 = vsel %vm1161, %v1335, %v1316
        %v1343 = vunpack.c.l.s4 1983009808
        %v1344 = vunpack.c.0.s8 %v1343
        %v1345 = vperm.slane %v1341, %v1344
        %v1346 = vrot.slane %v1336, 4
        %v1347 = vsel %vm1161, %v1346, %v1334
        %v1349 = vunpack.c.l.s4 1983009808
        %v1350 = vunpack.c.0.s8 %v1349
        %v1351 = vperm.slane %v1347, %v1350
        %v1352 = vsel %vm1161, %v1339, %v1328
        %v1354 = vunpack.c.l.s4 1983009808
        %v1355 = vunpack.c.0.s8 %v1354
        %v1356 = vperm.slane %v1352, %v1355
        %v1357 = vrot.slane %v1340, 4
        %v1358 = vsel %vm1161, %v1357, %v1338
        %v1360 = vunpack.c.l.s4 1983009808
        %v1361 = vunpack.c.0.s8 %v1360
        %v1362 = vperm.slane %v1358, %v1361
        %v1363 = vrot.slane %v1351, 4
        %v1364 = vsel %vm1161, %v1363, %v1345
        %v1365 = vrot.slane %v1345, 4
        %v1366 = vsel %vm1161, %v1351, %v1365
        %v1368 = vunpack.c.l.s4 1934713408
        %v1369 = vunpack.c.0.s8 %v1368
        %v1370 = vperm.slane %v1364, %v1369
        %v1372 = vunpack.c.l.s4 1934713408
        %v1373 = vunpack.c.0.s8 %v1372
        %v1374 = vperm.slane %v1366, %v1373
        %v1375 = vrot.slane %v1362, 4
        %v1376 = vsel %vm1161, %v1375, %v1356
        %v1377 = vrot.slane %v1356, 4
        %v1378 = vsel %vm1161, %v1362, %v1377
        %v1380 = vunpack.c.l.s4 1934713408
        %v1381 = vunpack.c.0.s8 %v1380
        %v1382 = vperm.slane %v1376, %v1381
        %v1384 = vunpack.c.l.s4 1934713408
        %v1385 = vunpack.c.0.s8 %v1384
        %v1386 = vperm.slane %v1378, %v1385
        %v1387 = vrot.slane %v1382, 4
        %v1388 = vsel %vm1161, %v1387, %v1370
        %v1389 = vrot.slane %v1370, 4
        %v1390 = vsel %vm1161, %v1382, %v1389
        %v1391 = vrot.slane %v1386, 4
        %v1392 = vsel %vm1161, %v1391, %v1374
        %v1393 = vrot.slane %v1374, 4
        %v1394 = vsel %vm1161, %v1386, %v1393
        %v1395 = vpack.c.bf16 %v1388, %v1388
        %v1396 = vpack.c.bf16 %v1390, %v1390
        %v1397 = vpack.c.bf16 %v1392, %v1392
        %v1398 = vpack.c.bf16 %v1394, %v1394
        %1400 = vrot.lane.b32.xlu0 %v1144, 96
        %v1401 = vpop.permute.xlu0 %1400
        %1403 = vrot.lane.b32.xlu0 %v1144, 64
        %v1404 = vpop.permute.xlu0 %1403
        %1406 = vrot.lane.b32.xlu0 %v1144, 32
        %v1407 = vpop.permute.xlu0 %1406
        %v1409 = vrot.slane %v1404, 4
        %v1410 = vsel %vm1161, %v1409, %v1144
        %v1411 = vrot.slane %v1144, 4
        %v1412 = vsel %vm1161, %v1404, %v1411
        %v1414 = vunpack.c.l.s4 1983009808
        %v1415 = vunpack.c.0.s8 %v1414
        %v1416 = vperm.slane %v1410, %v1415
        %v1418 = vunpack.c.l.s4 1983009808
        %v1419 = vunpack.c.0.s8 %v1418
        %v1420 = vperm.slane %v1412, %v1419
        %v1421 = vrot.slane %v1407, 4
        %v1422 = vsel %vm1161, %v1421, %v1401
        %v1423 = vrot.slane %v1401, 4
        %v1424 = vsel %vm1161, %v1407, %v1423
        %v1426 = vunpack.c.l.s4 1983009808
        %v1427 = vunpack.c.0.s8 %v1426
        %v1428 = vperm.slane %v1422, %v1427
        %v1430 = vunpack.c.l.s4 1983009808
        %v1431 = vunpack.c.0.s8 %v1430
        %v1432 = vperm.slane %v1424, %v1431
        %v1433 = vrot.slane %v1428, 4
        %v1434 = vsel %vm1161, %v1433, %v1416
        %v1435 = vrot.slane %v1416, 4
        %v1436 = vsel %vm1161, %v1428, %v1435
        %v1438 = vunpack.c.l.s4 1934713408
        %v1439 = vunpack.c.0.s8 %v1438
        %v1440 = vperm.slane %v1434, %v1439
        %v1442 = vunpack.c.l.s4 1934713408
        %v1443 = vunpack.c.0.s8 %v1442
        %v1444 = vperm.slane %v1436, %v1443
        %v1445 = vrot.slane %v1432, 4
        %v1446 = vsel %vm1161, %v1445, %v1420
        %v1447 = vrot.slane %v1420, 4
        %v1448 = vsel %vm1161, %v1432, %v1447
        %v1450 = vunpack.c.l.s4 1934713408
        %v1451 = vunpack.c.0.s8 %v1450
        %v1452 = vperm.slane %v1446, %v1451
        %v1454 = vunpack.c.l.s4 1934713408
        %v1455 = vunpack.c.0.s8 %v1454
        %v1456 = vperm.slane %v1448, %v1455
        %v1457 = vrot.slane %v1440, 4
        %v1458 = vsel %vm1161, 0.0, %v1457
        %v1459 = vrot.slane %v1444, 4
        %v1460 = vsel %vm1161, 0.0, %v1459
        %v1461 = vrot.slane %v1452, 4
        %v1462 = vsel %vm1161, 0.0, %v1461
        %v1463 = vrot.slane %v1456, 4
        %v1464 = vsel %vm1161, 0.0, %v1463
        %v1465 = vsel %vm1161, %v1459, %v1440
        %v1467 = vunpack.c.l.s4 1983009808
        %v1468 = vunpack.c.0.s8 %v1467
        %v1469 = vperm.slane %v1465, %v1468
        %v1470 = vrot.slane %v1460, 4
        %v1471 = vsel %vm1161, %v1470, %v1458
        %v1473 = vunpack.c.l.s4 1983009808
        %v1474 = vunpack.c.0.s8 %v1473
        %v1475 = vperm.slane %v1471, %v1474
        %v1476 = vsel %vm1161, %v1463, %v1452
        %v1478 = vunpack.c.l.s4 1983009808
        %v1479 = vunpack.c.0.s8 %v1478
        %v1480 = vperm.slane %v1476, %v1479
        %v1481 = vrot.slane %v1464, 4
        %v1482 = vsel %vm1161, %v1481, %v1462
        %v1484 = vunpack.c.l.s4 1983009808
        %v1485 = vunpack.c.0.s8 %v1484
        %v1486 = vperm.slane %v1482, %v1485
        %v1487 = vrot.slane %v1475, 4
        %v1488 = vsel %vm1161, %v1487, %v1469
        %v1489 = vrot.slane %v1469, 4
        %v1490 = vsel %vm1161, %v1475, %v1489
        %v1492 = vunpack.c.l.s4 1934713408
        %v1493 = vunpack.c.0.s8 %v1492
        %v1494 = vperm.slane %v1488, %v1493
        %v1496 = vunpack.c.l.s4 1934713408
        %v1497 = vunpack.c.0.s8 %v1496
        %v1498 = vperm.slane %v1490, %v1497
        %v1499 = vrot.slane %v1486, 4
        %v1500 = vsel %vm1161, %v1499, %v1480
        %v1501 = vrot.slane %v1480, 4
        %v1502 = vsel %vm1161, %v1486, %v1501
        %v1504 = vunpack.c.l.s4 1934713408
        %v1505 = vunpack.c.0.s8 %v1504
        %v1506 = vperm.slane %v1500, %v1505
        %v1508 = vunpack.c.l.s4 1934713408
        %v1509 = vunpack.c.0.s8 %v1508
        %v1510 = vperm.slane %v1502, %v1509
        %v1511 = vrot.slane %v1506, 4
        %v1512 = vsel %vm1161, %v1511, %v1494
        %v1513 = vrot.slane %v1494, 4
        %v1514 = vsel %vm1161, %v1506, %v1513
        %v1515 = vrot.slane %v1510, 4
        %v1516 = vsel %vm1161, %v1515, %v1498
        %v1517 = vrot.slane %v1498, 4
        %v1518 = vsel %vm1161, %v1510, %v1517
        %v1519 = vpack.c.bf16 %v1512, %v1512
        %v1520 = vpack.c.bf16 %v1514, %v1514
        %v1521 = vpack.c.bf16 %v1516, %v1516
        %v1522 = vpack.c.bf16 %v1518, %v1518
        %vm1523 = vcmask 261120
        %v1525 = vsel %vm1523, %v1271, 0
        %v1528 = vsel %vm1523, %v1395, 0
        %1530 = vmatpush.bf16.xpose.msra.mxu0 0
        %1531 = vmatpush.bf16.xpose.msra.mxu0 0
        %1532 = vmatpush.bf16.xpose.msra.mxu0 0
        %1533 = vmatpush.bf16.xpose.msra.mxu0 0
        %1534 = vmatpush.bf16.xpose.msra.mxu0 0
        %1535 = vmatpush.bf16.xpose.msra.mxu0 0
        %1536 = vmatpush.bf16.xpose.msra.mxu0 0
        %1537 = vmatpush.bf16.xpose.msra.mxu0 %v1528
        %1538 = vmatmul.bf16.gmra.mxu0 %v1525
        %v1539 = vpop.f32.mrf.mxu0
        %v1540 = vadd.f32 %v878, %v1539
        %v1541 = vpop.f32.mrf.mxu0
        %1542 = vdwg.mxu0
        %v1544 = vsel %vm1523, %v1272, 0
        %v1547 = vsel %vm1523, %v1396, 0
        %1549 = vmatpush.bf16.xpose.msra.mxu0 0
        %1550 = vmatpush.bf16.xpose.msra.mxu0 0
        %1551 = vmatpush.bf16.xpose.msra.mxu0 0
        %1552 = vmatpush.bf16.xpose.msra.mxu0 0
        %1553 = vmatpush.bf16.xpose.msra.mxu0 0
        %1554 = vmatpush.bf16.xpose.msra.mxu0 0
        %1555 = vmatpush.bf16.xpose.msra.mxu0 0
        %1556 = vmatpush.bf16.xpose.msra.mxu0 %v1547
        %1557 = vmatmul.bf16.gmra.mxu0 %v1544
        %v1558 = vpop.f32.mrf.mxu0
        %v1559 = vadd.f32 %v878, %v1558
        %v1560 = vpop.f32.mrf.mxu0
        %1561 = vdwg.mxu0
        %v1563 = vsel %vm1523, %v1273, 0
        %v1566 = vsel %vm1523, %v1397, 0
        %1568 = vmatpush.bf16.xpose.msra.mxu0 0
        %1569 = vmatpush.bf16.xpose.msra.mxu0 0
        %1570 = vmatpush.bf16.xpose.msra.mxu0 0
        %1571 = vmatpush.bf16.xpose.msra.mxu0 0
        %1572 = vmatpush.bf16.xpose.msra.mxu0 0
        %1573 = vmatpush.bf16.xpose.msra.mxu0 0
        %1574 = vmatpush.bf16.xpose.msra.mxu0 0
        %1575 = vmatpush.bf16.xpose.msra.mxu0 %v1566
        %1576 = vmatmul.bf16.gmra.mxu0 %v1563
        %v1577 = vpop.f32.mrf.mxu0
        %v1578 = vadd.f32 %v878, %v1577
        %v1579 = vpop.f32.mrf.mxu0
        %1580 = vdwg.mxu0
        %v1582 = vsel %vm1523, %v1274, 0
        %v1585 = vsel %vm1523, %v1398, 0
        %1587 = vmatpush.bf16.xpose.msra.mxu0 0
        %1588 = vmatpush.bf16.xpose.msra.mxu0 0
        %1589 = vmatpush.bf16.xpose.msra.mxu0 0
        %1590 = vmatpush.bf16.xpose.msra.mxu0 0
        %1591 = vmatpush.bf16.xpose.msra.mxu0 0
        %1592 = vmatpush.bf16.xpose.msra.mxu0 0
        %1593 = vmatpush.bf16.xpose.msra.mxu0 0
        %1594 = vmatpush.bf16.xpose.msra.mxu0 %v1585
        %1595 = vmatmul.bf16.gmra.mxu0 %v1582
        %v1596 = vpop.f32.mrf.mxu0
        %v1597 = vadd.f32 %v878, %v1596
        %v1598 = vpop.f32.mrf.mxu0
        %1599 = vdwg.mxu0
        %vm1600 = vcmask 64512
        %v1601 = vsel %vm1600, %v1540, -inf
        %1602 = vmax.xlane.f32.xlu0 %v1601
        %v1603 = vpop.xlane.xlu0 %1602
        %v1604 = vsel %vm1600, %v1559, -inf
        %1605 = vmax.xlane.f32.xlu0 %v1604
        %v1606 = vpop.xlane.xlu0 %1605
        %v1607 = vsel %vm1600, %v1578, -inf
        %1608 = vmax.xlane.f32.xlu0 %v1607
        %v1609 = vpop.xlane.xlu0 %1608
        %v1610 = vsel %vm1600, %v1597, -inf
        %1611 = vmax.xlane.f32.xlu0 %v1610
        %v1612 = vpop.xlane.xlu0 %1611
        %v1613 = vsub.f32 %v1540, %v1603
        %v1614 = vsub.f32 %v1559, %v1606
        %v1615 = vsub.f32 %v1578, %v1609
        %v1616 = vsub.f32 %v1597, %v1612
        %v1617 = vmul.f32 %v1613, 1.442695
        %v1618 = vpow.pop %v1617
        %v1619 = vmul.f32 %v1614, 1.442695
        %v1620 = vpow.pop %v1619
        %v1621 = vmul.f32 %v1615, 1.442695
        %v1622 = vpow.pop %v1621
        %v1623 = vmul.f32 %v1616, 1.442695
        %v1624 = vpow.pop %v1623
        %v1625 = vsel %vm1600, %v1618, 0.0
        %1626 = vadd.xlane.f32.xlu0 %v1625
        %v1627 = vpop.xlane.xlu0 %1626
        %v1628 = vsel %vm1600, %v1620, 0.0
        %1629 = vadd.xlane.f32.xlu0 %v1628
        %v1630 = vpop.xlane.xlu0 %1629
        %v1631 = vsel %vm1600, %v1622, 0.0
        %1632 = vadd.xlane.f32.xlu0 %v1631
        %v1633 = vpop.xlane.xlu0 %1632
        %v1634 = vsel %vm1600, %v1624, 0.0
        %1635 = vadd.xlane.f32.xlu0 %v1634
        %v1636 = vpop.xlane.xlu0 %1635
        %v1637 = vrcp.pop %v1627
        %v1638 = vrcp.pop %v1630
        %v1639 = vrcp.pop %v1633
        %v1640 = vrcp.pop %v1636
        %v1641 = vmul.f32 %v1618, %v1637
        %v1642 = vmul.f32 %v1620, %v1638
        %v1643 = vmul.f32 %v1622, %v1639
        %v1644 = vmul.f32 %v1624, %v1640
        %v1645 = vpack.c.bf16 %v1641, %v1641
        %v1646 = vpack.c.bf16 %v1642, %v1642
        %v1647 = vpack.c.bf16 %v1643, %v1643
        %v1648 = vpack.c.bf16 %v1644, %v1644
        %v1650 = vsel %vm1600, %v1645, 0
        %vm1652 = vcmask 1043456
        %v1654 = vsel %vm1652, %v1519, 0
        %1656 = vmatpush.bf16.msra.mxu0 0
        %1657 = vmatpush.bf16.msra.mxu0 0
        %1658 = vmatpush.bf16.msra.mxu0 0
        %1659 = vmatpush.bf16.msra.mxu0 0
        %1660 = vmatpush.bf16.msra.mxu0 0
        %1661 = vmatpush.bf16.msra.mxu0 0
        %1662 = vmatpush.bf16.msra.mxu0 0
        %1663 = vmatpush.bf16.msra.mxu0 %v1654
        %1664 = vmatmul.bf16.gmra.mxu0 %v1650
        %v1665 = vpop.f32.mrf.mxu0
        %v1666 = vadd.f32 0.0, %v1665
        %v1667 = vpop.f32.mrf.mxu0
        %1668 = vdwg.mxu0
        %v1670 = vsel %vm1600, %v1646, 0
        %v1673 = vsel %vm1652, %v1520, 0
        %1675 = vmatpush.bf16.msra.mxu0 0
        %1676 = vmatpush.bf16.msra.mxu0 0
        %1677 = vmatpush.bf16.msra.mxu0 0
        %1678 = vmatpush.bf16.msra.mxu0 0
        %1679 = vmatpush.bf16.msra.mxu0 0
        %1680 = vmatpush.bf16.msra.mxu0 0
        %1681 = vmatpush.bf16.msra.mxu0 0
        %1682 = vmatpush.bf16.msra.mxu0 %v1673
        %1683 = vmatmul.bf16.gmra.mxu0 %v1670
        %v1684 = vpop.f32.mrf.mxu0
        %v1685 = vadd.f32 0.0, %v1684
        %v1686 = vpop.f32.mrf.mxu0
        %1687 = vdwg.mxu0
        %v1689 = vsel %vm1600, %v1647, 0
        %v1692 = vsel %vm1652, %v1521, 0
        %1694 = vmatpush.bf16.msra.mxu0 0
        %1695 = vmatpush.bf16.msra.mxu0 0
        %1696 = vmatpush.bf16.msra.mxu0 0
        %1697 = vmatpush.bf16.msra.mxu0 0
        %1698 = vmatpush.bf16.msra.mxu0 0
        %1699 = vmatpush.bf16.msra.mxu0 0
        %1700 = vmatpush.bf16.msra.mxu0 0
        %1701 = vmatpush.bf16.msra.mxu0 %v1692
        %1702 = vmatmul.bf16.gmra.mxu0 %v1689
        %v1703 = vpop.f32.mrf.mxu0
        %v1704 = vadd.f32 0.0, %v1703
        %v1705 = vpop.f32.mrf.mxu0
        %1706 = vdwg.mxu0
        %v1708 = vsel %vm1600, %v1648, 0
        %v1711 = vsel %vm1652, %v1522, 0
        %1713 = vmatpush.bf16.msra.mxu0 0
        %1714 = vmatpush.bf16.msra.mxu0 0
        %1715 = vmatpush.bf16.msra.mxu0 0
        %1716 = vmatpush.bf16.msra.mxu0 0
        %1717 = vmatpush.bf16.msra.mxu0 0
        %1718 = vmatpush.bf16.msra.mxu0 0
        %1719 = vmatpush.bf16.msra.mxu0 0
        %1720 = vmatpush.bf16.msra.mxu0 %v1711
        %1721 = vmatmul.bf16.gmra.mxu0 %v1708
        %v1722 = vpop.f32.mrf.mxu0
        %v1723 = vadd.f32 0.0, %v1722
        %v1724 = vpop.f32.mrf.mxu0
        %1725 = vdwg.mxu0
        %v1726 = vrot.slane %v1704, 4
        %v1727 = vsel %vm1161, %v1726, %v1666
        %v1728 = vrot.slane %v1666, 4
        %v1729 = vsel %vm1161, %v1704, %v1728
        %v1731 = vunpack.c.l.s4 1983009808
        %v1732 = vunpack.c.0.s8 %v1731
        %v1733 = vperm.slane %v1727, %v1732
        %v1735 = vunpack.c.l.s4 1983009808
        %v1736 = vunpack.c.0.s8 %v1735
        %v1737 = vperm.slane %v1729, %v1736
        %v1738 = vrot.slane %v1723, 4
        %v1739 = vsel %vm1161, %v1738, %v1685
        %v1740 = vrot.slane %v1685, 4
        %v1741 = vsel %vm1161, %v1723, %v1740
        %v1743 = vunpack.c.l.s4 1983009808
        %v1744 = vunpack.c.0.s8 %v1743
        %v1745 = vperm.slane %v1739, %v1744
        %v1747 = vunpack.c.l.s4 1983009808
        %v1748 = vunpack.c.0.s8 %v1747
        %v1749 = vperm.slane %v1741, %v1748
        %v1750 = vrot.slane %v1745, 4
        %v1751 = vsel %vm1161, %v1750, %v1733
        %v1752 = vrot.slane %v1733, 4
        %v1753 = vsel %vm1161, %v1745, %v1752
        %v1755 = vunpack.c.l.s4 1934713408
        %v1756 = vunpack.c.0.s8 %v1755
        %v1757 = vperm.slane %v1751, %v1756
        %v1759 = vunpack.c.l.s4 1934713408
        %v1760 = vunpack.c.0.s8 %v1759
        %v1761 = vperm.slane %v1753, %v1760
        %v1762 = vrot.slane %v1749, 4
        %v1763 = vsel %vm1161, %v1762, %v1737
        %v1764 = vrot.slane %v1737, 4
        %v1765 = vsel %vm1161, %v1749, %v1764
        %v1767 = vunpack.c.l.s4 1934713408
        %v1768 = vunpack.c.0.s8 %v1767
        %v1769 = vperm.slane %v1763, %v1768
        %v1771 = vunpack.c.l.s4 1934713408
        %v1772 = vunpack.c.0.s8 %v1771
        %v1773 = vperm.slane %v1765, %v1772
        %v1774 = vrot.slane %v1757, 4
        %v1775 = vsel %vm1161, 0.0, %v1774
        %v1776 = vrot.slane %v1761, 4
        %v1777 = vsel %vm1161, 0.0, %v1776
        %v1778 = vrot.slane %v1769, 4
        %v1779 = vsel %vm1161, 0.0, %v1778
        %v1780 = vrot.slane %v1773, 4
        %v1781 = vsel %vm1161, 0.0, %v1780
        %v1782 = vsel %vm1161, %v1776, %v1757
        %v1784 = vunpack.c.l.s4 1983009808
        %v1785 = vunpack.c.0.s8 %v1784
        %v1786 = vperm.slane %v1782, %v1785
        %v1787 = vrot.slane %v1777, 4
        %v1788 = vsel %vm1161, %v1787, %v1775
        %v1790 = vunpack.c.l.s4 1983009808
        %v1791 = vunpack.c.0.s8 %v1790
        %v1792 = vperm.slane %v1788, %v1791
        %v1793 = vsel %vm1161, %v1780, %v1769
        %v1795 = vunpack.c.l.s4 1983009808
        %v1796 = vunpack.c.0.s8 %v1795
        %v1797 = vperm.slane %v1793, %v1796
        %v1798 = vrot.slane %v1781, 4
        %v1799 = vsel %vm1161, %v1798, %v1779
        %v1801 = vunpack.c.l.s4 1983009808
        %v1802 = vunpack.c.0.s8 %v1801
        %v1803 = vperm.slane %v1799, %v1802
        %v1804 = vrot.slane %v1792, 4
        %v1805 = vsel %vm1161, %v1804, %v1786
        %v1806 = vrot.slane %v1786, 4
        %v1807 = vsel %vm1161, %v1792, %v1806
        %v1809 = vunpack.c.l.s4 1934713408
        %v1810 = vunpack.c.0.s8 %v1809
        %v1811 = vperm.slane %v1805, %v1810
        %v1813 = vunpack.c.l.s4 1934713408
        %v1814 = vunpack.c.0.s8 %v1813
        %v1815 = vperm.slane %v1807, %v1814
        %v1816 = vrot.slane %v1803, 4
        %v1817 = vsel %vm1161, %v1816, %v1797
        %v1818 = vrot.slane %v1797, 4
        %v1819 = vsel %vm1161, %v1803, %v1818
        %v1821 = vunpack.c.l.s4 1934713408
        %v1822 = vunpack.c.0.s8 %v1821
        %v1823 = vperm.slane %v1817, %v1822
        %v1825 = vunpack.c.l.s4 1934713408
        %v1826 = vunpack.c.0.s8 %v1825
        %v1827 = vperm.slane %v1819, %v1826
        %v1828 = vrot.slane %v1823, 4
        %v1829 = vsel %vm1161, %v1828, %v1811
        %v1830 = vrot.slane %v1811, 4
        %v1831 = vsel %vm1161, %v1823, %v1830
        %v1832 = vrot.slane %v1827, 4
        %v1833 = vsel %vm1161, %v1832, %v1815
        %v1834 = vrot.slane %v1815, 4
        %v1835 = vsel %vm1161, %v1827, %v1834
        %1837 = vrot.lane.b32.xlu0 %v1831, 32
        %v1838 = vpop.permute.xlu0 %1837
        %1841 = vrot.lane.b32.xlu0 %v1833, 64
        %v1842 = vpop.permute.xlu0 %1841
        %1845 = vrot.lane.b32.xlu0 %v1835, 96
        %v1846 = vpop.permute.xlu0 %1845
        %v1848 = vsel %vm1523, %v1829, %v1838
        %vm1849 = vcmask 523264
        %v1850 = vsel %vm1849, %v1848, %v1842
        %vm1851 = vcmask 785408
        %v1852 = vsel %vm1851, %v1850, %v1846
        %1854 = vrot.lane.b32.xlu0 %v1149, 96
        %v1855 = vpop.permute.xlu0 %1854
        %1857 = vrot.lane.b32.xlu0 %v1149, 64
        %v1858 = vpop.permute.xlu0 %1857
        %1860 = vrot.lane.b32.xlu0 %v1149, 32
        %v1861 = vpop.permute.xlu0 %1860
        %v1863 = vrot.slane %v1858, 4
        %v1864 = vsel %vm1161, %v1863, %v1149
        %v1865 = vrot.slane %v1149, 4
        %v1866 = vsel %vm1161, %v1858, %v1865
        %v1868 = vunpack.c.l.s4 1983009808
        %v1869 = vunpack.c.0.s8 %v1868
        %v1870 = vperm.slane %v1864, %v1869
        %v1872 = vunpack.c.l.s4 1983009808
        %v1873 = vunpack.c.0.s8 %v1872
        %v1874 = vperm.slane %v1866, %v1873
        %v1875 = vrot.slane %v1861, 4
        %v1876 = vsel %vm1161, %v1875, %v1855
        %v1877 = vrot.slane %v1855, 4
        %v1878 = vsel %vm1161, %v1861, %v1877
        %v1880 = vunpack.c.l.s4 1983009808
        %v1881 = vunpack.c.0.s8 %v1880
        %v1882 = vperm.slane %v1876, %v1881
        %v1884 = vunpack.c.l.s4 1983009808
        %v1885 = vunpack.c.0.s8 %v1884
        %v1886 = vperm.slane %v1878, %v1885
        %v1887 = vrot.slane %v1882, 4
        %v1888 = vsel %vm1161, %v1887, %v1870
        %v1889 = vrot.slane %v1870, 4
        %v1890 = vsel %vm1161, %v1882, %v1889
        %v1892 = vunpack.c.l.s4 1934713408
        %v1893 = vunpack.c.0.s8 %v1892
        %v1894 = vperm.slane %v1888, %v1893
        %v1896 = vunpack.c.l.s4 1934713408
        %v1897 = vunpack.c.0.s8 %v1896
        %v1898 = vperm.slane %v1890, %v1897
        %v1899 = vrot.slane %v1886, 4
        %v1900 = vsel %vm1161, %v1899, %v1874
        %v1901 = vrot.slane %v1874, 4
        %v1902 = vsel %vm1161, %v1886, %v1901
        %v1904 = vunpack.c.l.s4 1934713408
        %v1905 = vunpack.c.0.s8 %v1904
        %v1906 = vperm.slane %v1900, %v1905
        %v1908 = vunpack.c.l.s4 1934713408
        %v1909 = vunpack.c.0.s8 %v1908
        %v1910 = vperm.slane %v1902, %v1909
        %v1911 = vrot.slane %v1894, 4
        %v1912 = vsel %vm1161, 0.0, %v1911
        %v1913 = vrot.slane %v1898, 4
        %v1914 = vsel %vm1161, 0.0, %v1913
        %v1915 = vrot.slane %v1906, 4
        %v1916 = vsel %vm1161, 0.0, %v1915
        %v1917 = vrot.slane %v1910, 4
        %v1918 = vsel %vm1161, 0.0, %v1917
        %v1919 = vsel %vm1161, %v1913, %v1894
        %v1921 = vunpack.c.l.s4 1983009808
        %v1922 = vunpack.c.0.s8 %v1921
        %v1923 = vperm.slane %v1919, %v1922
        %v1924 = vrot.slane %v1914, 4
        %v1925 = vsel %vm1161, %v1924, %v1912
        %v1927 = vunpack.c.l.s4 1983009808
        %v1928 = vunpack.c.0.s8 %v1927
        %v1929 = vperm.slane %v1925, %v1928
        %v1930 = vsel %vm1161, %v1917, %v1906
        %v1932 = vunpack.c.l.s4 1983009808
        %v1933 = vunpack.c.0.s8 %v1932
        %v1934 = vperm.slane %v1930, %v1933
        %v1935 = vrot.slane %v1918, 4
        %v1936 = vsel %vm1161, %v1935, %v1916
        %v1938 = vunpack.c.l.s4 1983009808
        %v1939 = vunpack.c.0.s8 %v1938
        %v1940 = vperm.slane %v1936, %v1939
        %v1941 = vrot.slane %v1929, 4
        %v1942 = vsel %vm1161, %v1941, %v1923
        %v1943 = vrot.slane %v1923, 4
        %v1944 = vsel %vm1161, %v1929, %v1943
        %v1946 = vunpack.c.l.s4 1934713408
        %v1947 = vunpack.c.0.s8 %v1946
        %v1948 = vperm.slane %v1942, %v1947
        %v1950 = vunpack.c.l.s4 1934713408
        %v1951 = vunpack.c.0.s8 %v1950
        %v1952 = vperm.slane %v1944, %v1951
        %v1953 = vrot.slane %v1940, 4
        %v1954 = vsel %vm1161, %v1953, %v1934
        %v1955 = vrot.slane %v1934, 4
        %v1956 = vsel %vm1161, %v1940, %v1955
        %v1958 = vunpack.c.l.s4 1934713408
        %v1959 = vunpack.c.0.s8 %v1958
        %v1960 = vperm.slane %v1954, %v1959
        %v1962 = vunpack.c.l.s4 1934713408
        %v1963 = vunpack.c.0.s8 %v1962
        %v1964 = vperm.slane %v1956, %v1963
        %v1965 = vrot.slane %v1960, 4
        %v1966 = vsel %vm1161, %v1965, %v1948
        %v1967 = vrot.slane %v1948, 4
        %v1968 = vsel %vm1161, %v1960, %v1967
        %v1969 = vrot.slane %v1964, 4
        %v1970 = vsel %vm1161, %v1969, %v1952
        %v1971 = vrot.slane %v1952, 4
        %v1972 = vsel %vm1161, %v1964, %v1971
        %v1973 = vpack.c.bf16 %v1966, %v1966
        %v1974 = vpack.c.bf16 %v1968, %v1968
        %v1975 = vpack.c.bf16 %v1970, %v1970
        %v1976 = vpack.c.bf16 %v1972, %v1972
        %1978 = vrot.lane.b32.xlu0 %v1132, 96
        %v1979 = vpop.permute.xlu0 %1978
        %1981 = vrot.lane.b32.xlu0 %v1132, 64
        %v1982 = vpop.permute.xlu0 %1981
        %1984 = vrot.lane.b32.xlu0 %v1132, 32
        %v1985 = vpop.permute.xlu0 %1984
        %v1987 = vrot.slane %v1982, 4
        %v1988 = vsel %vm1161, %v1987, %v1132
        %v1989 = vrot.slane %v1132, 4
        %v1990 = vsel %vm1161, %v1982, %v1989
        %v1992 = vunpack.c.l.s4 1983009808
        %v1993 = vunpack.c.0.s8 %v1992
        %v1994 = vperm.slane %v1988, %v1993
        %v1996 = vunpack.c.l.s4 1983009808
        %v1997 = vunpack.c.0.s8 %v1996
        %v1998 = vperm.slane %v1990, %v1997
        %v1999 = vrot.slane %v1985, 4
        %v2000 = vsel %vm1161, %v1999, %v1979
        %v2001 = vrot.slane %v1979, 4
        %v2002 = vsel %vm1161, %v1985, %v2001
        %v2004 = vunpack.c.l.s4 1983009808
        %v2005 = vunpack.c.0.s8 %v2004
        %v2006 = vperm.slane %v2000, %v2005
        %v2008 = vunpack.c.l.s4 1983009808
        %v2009 = vunpack.c.0.s8 %v2008
        %v2010 = vperm.slane %v2002, %v2009
        %v2011 = vrot.slane %v2006, 4
        %v2012 = vsel %vm1161, %v2011, %v1994
        %v2013 = vrot.slane %v1994, 4
        %v2014 = vsel %vm1161, %v2006, %v2013
        %v2016 = vunpack.c.l.s4 1934713408
        %v2017 = vunpack.c.0.s8 %v2016
        %v2018 = vperm.slane %v2012, %v2017
        %v2020 = vunpack.c.l.s4 1934713408
        %v2021 = vunpack.c.0.s8 %v2020
        %v2022 = vperm.slane %v2014, %v2021
        %v2023 = vrot.slane %v2010, 4
        %v2024 = vsel %vm1161, %v2023, %v1998
        %v2025 = vrot.slane %v1998, 4
        %v2026 = vsel %vm1161, %v2010, %v2025
        %v2028 = vunpack.c.l.s4 1934713408
        %v2029 = vunpack.c.0.s8 %v2028
        %v2030 = vperm.slane %v2024, %v2029
        %v2032 = vunpack.c.l.s4 1934713408
        %v2033 = vunpack.c.0.s8 %v2032
        %v2034 = vperm.slane %v2026, %v2033
        %v2035 = vrot.slane %v2018, 4
        %v2036 = vsel %vm1161, 0.0, %v2035
        %v2037 = vrot.slane %v2022, 4
        %v2038 = vsel %vm1161, 0.0, %v2037
        %v2039 = vrot.slane %v2030, 4
        %v2040 = vsel %vm1161, 0.0, %v2039
        %v2041 = vrot.slane %v2034, 4
        %v2042 = vsel %vm1161, 0.0, %v2041
        %v2043 = vsel %vm1161, %v2037, %v2018
        %v2045 = vunpack.c.l.s4 1983009808
        %v2046 = vunpack.c.0.s8 %v2045
        %v2047 = vperm.slane %v2043, %v2046
        %v2048 = vrot.slane %v2038, 4
        %v2049 = vsel %vm1161, %v2048, %v2036
        %v2051 = vunpack.c.l.s4 1983009808
        %v2052 = vunpack.c.0.s8 %v2051
        %v2053 = vperm.slane %v2049, %v2052
        %v2054 = vsel %vm1161, %v2041, %v2030
        %v2056 = vunpack.c.l.s4 1983009808
        %v2057 = vunpack.c.0.s8 %v2056
        %v2058 = vperm.slane %v2054, %v2057
        %v2059 = vrot.slane %v2042, 4
        %v2060 = vsel %vm1161, %v2059, %v2040
        %v2062 = vunpack.c.l.s4 1983009808
        %v2063 = vunpack.c.0.s8 %v2062
        %v2064 = vperm.slane %v2060, %v2063
        %v2065 = vrot.slane %v2053, 4
        %v2066 = vsel %vm1161, %v2065, %v2047
        %v2067 = vrot.slane %v2047, 4
        %v2068 = vsel %vm1161, %v2053, %v2067
        %v2070 = vunpack.c.l.s4 1934713408
        %v2071 = vunpack.c.0.s8 %v2070
        %v2072 = vperm.slane %v2066, %v2071
        %v2074 = vunpack.c.l.s4 1934713408
        %v2075 = vunpack.c.0.s8 %v2074
        %v2076 = vperm.slane %v2068, %v2075
        %v2077 = vrot.slane %v2064, 4
        %v2078 = vsel %vm1161, %v2077, %v2058
        %v2079 = vrot.slane %v2058, 4
        %v2080 = vsel %vm1161, %v2064, %v2079
        %v2082 = vunpack.c.l.s4 1934713408
        %v2083 = vunpack.c.0.s8 %v2082
        %v2084 = vperm.slane %v2078, %v2083
        %v2086 = vunpack.c.l.s4 1934713408
        %v2087 = vunpack.c.0.s8 %v2086
        %v2088 = vperm.slane %v2080, %v2087
        %v2089 = vrot.slane %v2084, 4
        %v2090 = vsel %vm1161, %v2089, %v2072
        %v2091 = vrot.slane %v2072, 4
        %v2092 = vsel %vm1161, %v2084, %v2091
        %v2093 = vrot.slane %v2088, 4
        %v2094 = vsel %vm1161, %v2093, %v2076
        %v2095 = vrot.slane %v2076, 4
        %v2096 = vsel %vm1161, %v2088, %v2095
        %v2097 = vpack.c.bf16 %v2090, %v2090
        %v2098 = vpack.c.bf16 %v2092, %v2092
        %v2099 = vpack.c.bf16 %v2094, %v2094
        %v2100 = vpack.c.bf16 %v2096, %v2096
        %2102 = vrot.lane.b32.xlu0 %v1146, 96
        %v2103 = vpop.permute.xlu0 %2102
        %2105 = vrot.lane.b32.xlu0 %v1146, 64
        %v2106 = vpop.permute.xlu0 %2105
        %2108 = vrot.lane.b32.xlu0 %v1146, 32
        %v2109 = vpop.permute.xlu0 %2108
        %v2111 = vrot.slane %v2106, 4
        %v2112 = vsel %vm1161, %v2111, %v1146
        %v2113 = vrot.slane %v1146, 4
        %v2114 = vsel %vm1161, %v2106, %v2113
        %v2116 = vunpack.c.l.s4 1983009808
        %v2117 = vunpack.c.0.s8 %v2116
        %v2118 = vperm.slane %v2112, %v2117
        %v2120 = vunpack.c.l.s4 1983009808
        %v2121 = vunpack.c.0.s8 %v2120
        %v2122 = vperm.slane %v2114, %v2121
        %v2123 = vrot.slane %v2109, 4
        %v2124 = vsel %vm1161, %v2123, %v2103
        %v2125 = vrot.slane %v2103, 4
        %v2126 = vsel %vm1161, %v2109, %v2125
        %v2128 = vunpack.c.l.s4 1983009808
        %v2129 = vunpack.c.0.s8 %v2128
        %v2130 = vperm.slane %v2124, %v2129
        %v2132 = vunpack.c.l.s4 1983009808
        %v2133 = vunpack.c.0.s8 %v2132
        %v2134 = vperm.slane %v2126, %v2133
        %v2135 = vrot.slane %v2130, 4
        %v2136 = vsel %vm1161, %v2135, %v2118
        %v2137 = vrot.slane %v2118, 4
        %v2138 = vsel %vm1161, %v2130, %v2137
        %v2140 = vunpack.c.l.s4 1934713408
        %v2141 = vunpack.c.0.s8 %v2140
        %v2142 = vperm.slane %v2136, %v2141
        %v2144 = vunpack.c.l.s4 1934713408
        %v2145 = vunpack.c.0.s8 %v2144
        %v2146 = vperm.slane %v2138, %v2145
        %v2147 = vrot.slane %v2134, 4
        %v2148 = vsel %vm1161, %v2147, %v2122
        %v2149 = vrot.slane %v2122, 4
        %v2150 = vsel %vm1161, %v2134, %v2149
        %v2152 = vunpack.c.l.s4 1934713408
        %v2153 = vunpack.c.0.s8 %v2152
        %v2154 = vperm.slane %v2148, %v2153
        %v2156 = vunpack.c.l.s4 1934713408
        %v2157 = vunpack.c.0.s8 %v2156
        %v2158 = vperm.slane %v2150, %v2157
        %v2159 = vrot.slane %v2142, 4
        %v2160 = vsel %vm1161, 0.0, %v2159
        %v2161 = vrot.slane %v2146, 4
        %v2162 = vsel %vm1161, 0.0, %v2161
        %v2163 = vrot.slane %v2154, 4
        %v2164 = vsel %vm1161, 0.0, %v2163
        %v2165 = vrot.slane %v2158, 4
        %v2166 = vsel %vm1161, 0.0, %v2165
        %v2167 = vsel %vm1161, %v2161, %v2142
        %v2169 = vunpack.c.l.s4 1983009808
        %v2170 = vunpack.c.0.s8 %v2169
        %v2171 = vperm.slane %v2167, %v2170
        %v2172 = vrot.slane %v2162, 4
        %v2173 = vsel %vm1161, %v2172, %v2160
        %v2175 = vunpack.c.l.s4 1983009808
        %v2176 = vunpack.c.0.s8 %v2175
        %v2177 = vperm.slane %v2173, %v2176
        %v2178 = vsel %vm1161, %v2165, %v2154
        %v2180 = vunpack.c.l.s4 1983009808
        %v2181 = vunpack.c.0.s8 %v2180
        %v2182 = vperm.slane %v2178, %v2181
        %v2183 = vrot.slane %v2166, 4
        %v2184 = vsel %vm1161, %v2183, %v2164
        %v2186 = vunpack.c.l.s4 1983009808
        %v2187 = vunpack.c.0.s8 %v2186
        %v2188 = vperm.slane %v2184, %v2187
        %v2189 = vrot.slane %v2177, 4
        %v2190 = vsel %vm1161, %v2189, %v2171
        %v2191 = vrot.slane %v2171, 4
        %v2192 = vsel %vm1161, %v2177, %v2191
        %v2194 = vunpack.c.l.s4 1934713408
        %v2195 = vunpack.c.0.s8 %v2194
        %v2196 = vperm.slane %v2190, %v2195
        %v2198 = vunpack.c.l.s4 1934713408
        %v2199 = vunpack.c.0.s8 %v2198
        %v2200 = vperm.slane %v2192, %v2199
        %v2201 = vrot.slane %v2188, 4
        %v2202 = vsel %vm1161, %v2201, %v2182
        %v2203 = vrot.slane %v2182, 4
        %v2204 = vsel %vm1161, %v2188, %v2203
        %v2206 = vunpack.c.l.s4 1934713408
        %v2207 = vunpack.c.0.s8 %v2206
        %v2208 = vperm.slane %v2202, %v2207
        %v2210 = vunpack.c.l.s4 1934713408
        %v2211 = vunpack.c.0.s8 %v2210
        %v2212 = vperm.slane %v2204, %v2211
        %v2213 = vrot.slane %v2208, 4
        %v2214 = vsel %vm1161, %v2213, %v2196
        %v2215 = vrot.slane %v2196, 4
        %v2216 = vsel %vm1161, %v2208, %v2215
        %v2217 = vrot.slane %v2212, 4
        %v2218 = vsel %vm1161, %v2217, %v2200
        %v2219 = vrot.slane %v2200, 4
        %v2220 = vsel %vm1161, %v2212, %v2219
        %v2221 = vpack.c.bf16 %v2214, %v2214
        %v2222 = vpack.c.bf16 %v2216, %v2216
        %v2223 = vpack.c.bf16 %v2218, %v2218
        %v2224 = vpack.c.bf16 %v2220, %v2220
        %v2226 = vsel %vm1523, %v1973, 0
        %v2229 = vsel %vm1523, %v2097, 0
        %2231 = vmatpush.bf16.xpose.msra.mxu0 0
        %2232 = vmatpush.bf16.xpose.msra.mxu0 0
        %2233 = vmatpush.bf16.xpose.msra.mxu0 0
        %2234 = vmatpush.bf16.xpose.msra.mxu0 0
        %2235 = vmatpush.bf16.xpose.msra.mxu0 0
        %2236 = vmatpush.bf16.xpose.msra.mxu0 0
        %2237 = vmatpush.bf16.xpose.msra.mxu0 0
        %2238 = vmatpush.bf16.xpose.msra.mxu0 %v2229
        %2239 = vmatmul.bf16.gmra.mxu0 %v2226
        %v2240 = vpop.f32.mrf.mxu0
        %v2241 = vadd.f32 %v878, %v2240
        %v2242 = vpop.f32.mrf.mxu0
        %2243 = vdwg.mxu0
        %v2245 = vsel %vm1523, %v1974, 0
        %v2248 = vsel %vm1523, %v2098, 0
        %2250 = vmatpush.bf16.xpose.msra.mxu0 0
        %2251 = vmatpush.bf16.xpose.msra.mxu0 0
        %2252 = vmatpush.bf16.xpose.msra.mxu0 0
        %2253 = vmatpush.bf16.xpose.msra.mxu0 0
        %2254 = vmatpush.bf16.xpose.msra.mxu0 0
        %2255 = vmatpush.bf16.xpose.msra.mxu0 0
        %2256 = vmatpush.bf16.xpose.msra.mxu0 0
        %2257 = vmatpush.bf16.xpose.msra.mxu0 %v2248
        %2258 = vmatmul.bf16.gmra.mxu0 %v2245
        %v2259 = vpop.f32.mrf.mxu0
        %v2260 = vadd.f32 %v878, %v2259
        %v2261 = vpop.f32.mrf.mxu0
        %2262 = vdwg.mxu0
        %v2264 = vsel %vm1523, %v1975, 0
        %v2267 = vsel %vm1523, %v2099, 0
        %2269 = vmatpush.bf16.xpose.msra.mxu0 0
        %2270 = vmatpush.bf16.xpose.msra.mxu0 0
        %2271 = vmatpush.bf16.xpose.msra.mxu0 0
        %2272 = vmatpush.bf16.xpose.msra.mxu0 0
        %2273 = vmatpush.bf16.xpose.msra.mxu0 0
        %2274 = vmatpush.bf16.xpose.msra.mxu0 0
        %2275 = vmatpush.bf16.xpose.msra.mxu0 0
        %2276 = vmatpush.bf16.xpose.msra.mxu0 %v2267
        %2277 = vmatmul.bf16.gmra.mxu0 %v2264
        %v2278 = vpop.f32.mrf.mxu0
        %v2279 = vadd.f32 %v878, %v2278
        %v2280 = vpop.f32.mrf.mxu0
        %2281 = vdwg.mxu0
        %v2283 = vsel %vm1523, %v1976, 0
        %v2286 = vsel %vm1523, %v2100, 0
        %2288 = vmatpush.bf16.xpose.msra.mxu0 0
        %2289 = vmatpush.bf16.xpose.msra.mxu0 0
        %2290 = vmatpush.bf16.xpose.msra.mxu0 0
        %2291 = vmatpush.bf16.xpose.msra.mxu0 0
        %2292 = vmatpush.bf16.xpose.msra.mxu0 0
        %2293 = vmatpush.bf16.xpose.msra.mxu0 0
        %2294 = vmatpush.bf16.xpose.msra.mxu0 0
        %2295 = vmatpush.bf16.xpose.msra.mxu0 %v2286
        %2296 = vmatmul.bf16.gmra.mxu0 %v2283
        %v2297 = vpop.f32.mrf.mxu0
        %v2298 = vadd.f32 %v878, %v2297
        %v2299 = vpop.f32.mrf.mxu0
        %2300 = vdwg.mxu0
        %v2301 = vsel %vm1600, %v2241, -inf
        %2302 = vmax.xlane.f32.xlu0 %v2301
        %v2303 = vpop.xlane.xlu0 %2302
        %v2304 = vsel %vm1600, %v2260, -inf
        %2305 = vmax.xlane.f32.xlu0 %v2304
        %v2306 = vpop.xlane.xlu0 %2305
        %v2307 = vsel %vm1600, %v2279, -inf
        %2308 = vmax.xlane.f32.xlu0 %v2307
        %v2309 = vpop.xlane.xlu0 %2308
        %v2310 = vsel %vm1600, %v2298, -inf
        %2311 = vmax.xlane.f32.xlu0 %v2310
        %v2312 = vpop.xlane.xlu0 %2311
        %v2313 = vsub.f32 %v2241, %v2303
        %v2314 = vsub.f32 %v2260, %v2306
        %v2315 = vsub.f32 %v2279, %v2309
        %v2316 = vsub.f32 %v2298, %v2312
        %v2317 = vmul.f32 %v2313, 1.442695
        %v2318 = vpow.pop %v2317
        %v2319 = vmul.f32 %v2314, 1.442695
        %v2320 = vpow.pop %v2319
        %v2321 = vmul.f32 %v2315, 1.442695
        %v2322 = vpow.pop %v2321
        %v2323 = vmul.f32 %v2316, 1.442695
        %v2324 = vpow.pop %v2323
        %v2325 = vsel %vm1600, %v2318, 0.0
        %2326 = vadd.xlane.f32.xlu0 %v2325
        %v2327 = vpop.xlane.xlu0 %2326
        %v2328 = vsel %vm1600, %v2320, 0.0
        %2329 = vadd.xlane.f32.xlu0 %v2328
        %v2330 = vpop.xlane.xlu0 %2329
        %v2331 = vsel %vm1600, %v2322, 0.0
        %2332 = vadd.xlane.f32.xlu0 %v2331
        %v2333 = vpop.xlane.xlu0 %2332
        %v2334 = vsel %vm1600, %v2324, 0.0
        %2335 = vadd.xlane.f32.xlu0 %v2334
        %v2336 = vpop.xlane.xlu0 %2335
        %v2337 = vrcp.pop %v2327
        %v2338 = vrcp.pop %v2330
        %v2339 = vrcp.pop %v2333
        %v2340 = vrcp.pop %v2336
        %v2341 = vmul.f32 %v2318, %v2337
        %v2342 = vmul.f32 %v2320, %v2338
        %v2343 = vmul.f32 %v2322, %v2339
        %v2344 = vmul.f32 %v2324, %v2340
        %v2345 = vpack.c.bf16 %v2341, %v2341
        %v2346 = vpack.c.bf16 %v2342, %v2342
        %v2347 = vpack.c.bf16 %v2343, %v2343
        %v2348 = vpack.c.bf16 %v2344, %v2344
        %v2350 = vsel %vm1600, %v2345, 0
        %v2353 = vsel %vm1652, %v2221, 0
        %2355 = vmatpush.bf16.msra.mxu0 0
        %2356 = vmatpush.bf16.msra.mxu0 0
        %2357 = vmatpush.bf16.msra.mxu0 0
        %2358 = vmatpush.bf16.msra.mxu0 0
        %2359 = vmatpush.bf16.msra.mxu0 0
        %2360 = vmatpush.bf16.msra.mxu0 0
        %2361 = vmatpush.bf16.msra.mxu0 0
        %2362 = vmatpush.bf16.msra.mxu0 %v2353
        %2363 = vmatmul.bf16.gmra.mxu0 %v2350
        %v2364 = vpop.f32.mrf.mxu0
        %v2365 = vadd.f32 0.0, %v2364
        %v2366 = vpop.f32.mrf.mxu0
        %2367 = vdwg.mxu0
        %v2369 = vsel %vm1600, %v2346, 0
        %v2372 = vsel %vm1652, %v2222, 0
        %2374 = vmatpush.bf16.msra.mxu0 0
        %2375 = vmatpush.bf16.msra.mxu0 0
        %2376 = vmatpush.bf16.msra.mxu0 0
        %2377 = vmatpush.bf16.msra.mxu0 0
        %2378 = vmatpush.bf16.msra.mxu0 0
        %2379 = vmatpush.bf16.msra.mxu0 0
        %2380 = vmatpush.bf16.msra.mxu0 0
        %2381 = vmatpush.bf16.msra.mxu0 %v2372
        %2382 = vmatmul.bf16.gmra.mxu0 %v2369
        %v2383 = vpop.f32.mrf.mxu0
        %v2384 = vadd.f32 0.0, %v2383
        %v2385 = vpop.f32.mrf.mxu0
        %2386 = vdwg.mxu0
        %v2388 = vsel %vm1600, %v2347, 0
        %v2391 = vsel %vm1652, %v2223, 0
        %2393 = vmatpush.bf16.msra.mxu0 0
        %2394 = vmatpush.bf16.msra.mxu0 0
        %2395 = vmatpush.bf16.msra.mxu0 0
        %2396 = vmatpush.bf16.msra.mxu0 0
        %2397 = vmatpush.bf16.msra.mxu0 0
        %2398 = vmatpush.bf16.msra.mxu0 0
        %2399 = vmatpush.bf16.msra.mxu0 0
        %2400 = vmatpush.bf16.msra.mxu0 %v2391
        %2401 = vmatmul.bf16.gmra.mxu0 %v2388
        %v2402 = vpop.f32.mrf.mxu0
        %v2403 = vadd.f32 0.0, %v2402
        %v2404 = vpop.f32.mrf.mxu0
        %2405 = vdwg.mxu0
        %v2407 = vsel %vm1600, %v2348, 0
        %v2410 = vsel %vm1652, %v2224, 0
        %2412 = vmatpush.bf16.msra.mxu0 0
        %2413 = vmatpush.bf16.msra.mxu0 0
        %2414 = vmatpush.bf16.msra.mxu0 0
        %2415 = vmatpush.bf16.msra.mxu0 0
        %2416 = vmatpush.bf16.msra.mxu0 0
        %2417 = vmatpush.bf16.msra.mxu0 0
        %2418 = vmatpush.bf16.msra.mxu0 0
        %2419 = vmatpush.bf16.msra.mxu0 %v2410
        %2420 = vmatmul.bf16.gmra.mxu0 %v2407
        %v2421 = vpop.f32.mrf.mxu0
        %v2422 = vadd.f32 0.0, %v2421
        %v2423 = vpop.f32.mrf.mxu0
        %2424 = vdwg.mxu0
        %v2425 = vrot.slane %v2403, 4
        %v2426 = vsel %vm1161, %v2425, %v2365
        %v2427 = vrot.slane %v2365, 4
        %v2428 = vsel %vm1161, %v2403, %v2427
        %v2430 = vunpack.c.l.s4 1983009808
        %v2431 = vunpack.c.0.s8 %v2430
        %v2432 = vperm.slane %v2426, %v2431
        %v2434 = vunpack.c.l.s4 1983009808
        %v2435 = vunpack.c.0.s8 %v2434
        %v2436 = vperm.slane %v2428, %v2435
        %v2437 = vrot.slane %v2422, 4
        %v2438 = vsel %vm1161, %v2437, %v2384
        %v2439 = vrot.slane %v2384, 4
        %v2440 = vsel %vm1161, %v2422, %v2439
        %v2442 = vunpack.c.l.s4 1983009808
        %v2443 = vunpack.c.0.s8 %v2442
        %v2444 = vperm.slane %v2438, %v2443
        %v2446 = vunpack.c.l.s4 1983009808
        %v2447 = vunpack.c.0.s8 %v2446
        %v2448 = vperm.slane %v2440, %v2447
        %v2449 = vrot.slane %v2444, 4
        %v2450 = vsel %vm1161, %v2449, %v2432
        %v2451 = vrot.slane %v2432, 4
        %v2452 = vsel %vm1161, %v2444, %v2451
        %v2454 = vunpack.c.l.s4 1934713408
        %v2455 = vunpack.c.0.s8 %v2454
        %v2456 = vperm.slane %v2450, %v2455
        %v2458 = vunpack.c.l.s4 1934713408
        %v2459 = vunpack.c.0.s8 %v2458
        %v2460 = vperm.slane %v2452, %v2459
        %v2461 = vrot.slane %v2448, 4
        %v2462 = vsel %vm1161, %v2461, %v2436
        %v2463 = vrot.slane %v2436, 4
        %v2464 = vsel %vm1161, %v2448, %v2463
        %v2466 = vunpack.c.l.s4 1934713408
        %v2467 = vunpack.c.0.s8 %v2466
        %v2468 = vperm.slane %v2462, %v2467
        %v2470 = vunpack.c.l.s4 1934713408
        %v2471 = vunpack.c.0.s8 %v2470
        %v2472 = vperm.slane %v2464, %v2471
        %v2473 = vrot.slane %v2456, 4
        %v2474 = vsel %vm1161, 0.0, %v2473
        %v2475 = vrot.slane %v2460, 4
        %v2476 = vsel %vm1161, 0.0, %v2475
        %v2477 = vrot.slane %v2468, 4
        %v2478 = vsel %vm1161, 0.0, %v2477
        %v2479 = vrot.slane %v2472, 4
        %v2480 = vsel %vm1161, 0.0, %v2479
        %v2481 = vsel %vm1161, %v2475, %v2456
        %v2483 = vunpack.c.l.s4 1983009808
        %v2484 = vunpack.c.0.s8 %v2483
        %v2485 = vperm.slane %v2481, %v2484
        %v2486 = vrot.slane %v2476, 4
        %v2487 = vsel %vm1161, %v2486, %v2474
        %v2489 = vunpack.c.l.s4 1983009808
        %v2490 = vunpack.c.0.s8 %v2489
        %v2491 = vperm.slane %v2487, %v2490
        %v2492 = vsel %vm1161, %v2479, %v2468
        %v2494 = vunpack.c.l.s4 1983009808
        %v2495 = vunpack.c.0.s8 %v2494
        %v2496 = vperm.slane %v2492, %v2495
        %v2497 = vrot.slane %v2480, 4
        %v2498 = vsel %vm1161, %v2497, %v2478
        %v2500 = vunpack.c.l.s4 1983009808
        %v2501 = vunpack.c.0.s8 %v2500
        %v2502 = vperm.slane %v2498, %v2501
        %v2503 = vrot.slane %v2491, 4
        %v2504 = vsel %vm1161, %v2503, %v2485
        %v2505 = vrot.slane %v2485, 4
        %v2506 = vsel %vm1161, %v2491, %v2505
        %v2508 = vunpack.c.l.s4 1934713408
        %v2509 = vunpack.c.0.s8 %v2508
        %v2510 = vperm.slane %v2504, %v2509
        %v2512 = vunpack.c.l.s4 1934713408
        %v2513 = vunpack.c.0.s8 %v2512
        %v2514 = vperm.slane %v2506, %v2513
        %v2515 = vrot.slane %v2502, 4
        %v2516 = vsel %vm1161, %v2515, %v2496
        %v2517 = vrot.slane %v2496, 4
        %v2518 = vsel %vm1161, %v2502, %v2517
        %v2520 = vunpack.c.l.s4 1934713408
        %v2521 = vunpack.c.0.s8 %v2520
        %v2522 = vperm.slane %v2516, %v2521
        %v2524 = vunpack.c.l.s4 1934713408
        %v2525 = vunpack.c.0.s8 %v2524
        %v2526 = vperm.slane %v2518, %v2525
        %v2527 = vrot.slane %v2522, 4
        %v2528 = vsel %vm1161, %v2527, %v2510
        %v2529 = vrot.slane %v2510, 4
        %v2530 = vsel %vm1161, %v2522, %v2529
        %v2531 = vrot.slane %v2526, 4
        %v2532 = vsel %vm1161, %v2531, %v2514
        %v2533 = vrot.slane %v2514, 4
        %v2534 = vsel %vm1161, %v2526, %v2533
        %2536 = vrot.lane.b32.xlu0 %v2530, 32
        %v2537 = vpop.permute.xlu0 %2536
        %2540 = vrot.lane.b32.xlu0 %v2532, 64
        %v2541 = vpop.permute.xlu0 %2540
        %2544 = vrot.lane.b32.xlu0 %v2534, 96
        %v2545 = vpop.permute.xlu0 %2544
        %v2547 = vsel %vm1523, %v2528, %v2537
        %v2548 = vsel %vm1849, %v2547, %v2541
        %v2549 = vsel %vm1851, %v2548, %v2545
        %v2550 = vpack.c.bf16 %v2549, %v1852
        %v2551 = vld [vmem:[%s726] sm:$0xf]
        %v2552 = vld [vmem:[%s726 + $0x4] sm:$0xf]
        %v2553 = vld [vmem:[%s726 + $0x8] sm:$0xf]
        %v2554 = vld [vmem:[%s726 + $0xc] sm:$0xf]
        %v2555 = vld [vmem:[%s726 + $0x10] sm:$0xf]
        %v2556 = vld [vmem:[%s726 + $0x14] sm:$0xf]
        %v2557 = vld [vmem:[%s726 + $0x18] sm:$0xf]
        %v2558 = vld [vmem:[%s726 + $0x1c] sm:$0xf]
        %v2559 = vld [vmem:[%s726 + $0x20] sm:$0xf]
        %v2560 = vld [vmem:[%s726 + $0x24] sm:$0xf]
        %v2561 = vld [vmem:[%s726 + $0x28] sm:$0xf]
        %v2562 = vld [vmem:[%s726 + $0x2c] sm:$0xf]
        %v2563 = vld [vmem:[%s726 + $0x30] sm:$0xf]
        %v2564 = vld [vmem:[%s726 + $0x34] sm:$0xf]
        %v2565 = vld [vmem:[%s726 + $0x38] sm:$0xf]
        %v2566 = vld [vmem:[%s726 + $0x3c] sm:$0xf]
        %v2567 = vld [vmem:[%s735] sm:$0x1]
        %v2569 = vperm.slane %v2567, 0
        %v2587 = vunpack.c.l.b16 %v2551
        %v2588 = vunpack.c.l.b16 %v2552
        %v2589 = vunpack.c.l.b16 %v2553
        %v2590 = vunpack.c.l.b16 %v2554
        %v2591 = vunpack.c.l.b16 %v2555
        %v2592 = vunpack.c.l.b16 %v2556
        %v2593 = vunpack.c.l.b16 %v2557
        %v2594 = vunpack.c.l.b16 %v2558
        %v2595 = vunpack.c.l.b16 %v2559
        %v2596 = vunpack.c.l.b16 %v2560
        %v2597 = vunpack.c.l.b16 %v2561
        %v2598 = vunpack.c.l.b16 %v2562
        %v2599 = vunpack.c.l.b16 %v2563
        %v2600 = vunpack.c.l.b16 %v2564
        %v2601 = vunpack.c.l.b16 %v2565
        %v2602 = vunpack.c.l.b16 %v2566
        %v2603 = vpack.c.b16 %v2588, %v2587
        %v2604 = vpack.c.b16 %v2590, %v2589
        %v2605 = vpack.c.b16 %v2592, %v2591
        %v2606 = vpack.c.b16 %v2594, %v2593
        %v2607 = vpack.c.b16 %v2596, %v2595
        %v2608 = vpack.c.b16 %v2598, %v2597
        %v2609 = vpack.c.b16 %v2600, %v2599
        %v2610 = vpack.c.b16 %v2602, %v2601
        %2619 = vmatpush.bf16.msra.mxu0 %v2610
        %2620 = vmatpush.bf16.msra.mxu0 %v2609
        %2621 = vmatpush.bf16.msra.mxu0 %v2608
        %2622 = vmatpush.bf16.msra.mxu0 %v2607
        %2623 = vmatpush.bf16.msra.mxu0 %v2606
        %2624 = vmatpush.bf16.msra.mxu0 %v2605
        %2625 = vmatpush.bf16.msra.mxu0 %v2604
        %2626 = vmatpush.bf16.msra.mxu0 %v2603
        %2627 = vmatmul.bf16.gmra.mxu0 %v2550
        %v2628 = vpop.f32.mrf.mxu0
        %v2629 = vadd.f32 %v2569, %v2628
        %v2630 = vpop.f32.mrf.mxu0
        %v2631 = vadd.f32 %v2569, %v2630
        %2632 = vdwg.mxu0
        %v2633 = vadd.f32 %v876, %v2629
        %v2634 = vadd.f32 %v877, %v2631
        %v2635 = vld [vmem:[%s744] sm:$0x1]
        %v2636 = vld [vmem:[%s753] sm:$0x1]
        %2637 = vadd.xlane.f32.xlu0 %v2633
        %v2638 = vpop.xlane.xlu0 %2637
        %2639 = vadd.xlane.f32.xlu0 %v2634
        %v2640 = vpop.xlane.xlu0 %2639
        %v2641 = vmul.f32 %v2638, %v891
        %v2642 = vmul.f32 %v2640, %v891
        %v2643 = vsub.f32 %v2633, %v2641
        %v2644 = vsub.f32 %v2634, %v2642
        %v2645 = vmul.f32 %v2643, %v2643
        %v2646 = vmul.f32 %v2644, %v2644
        %2647 = vadd.xlane.f32.xlu0 %v2645
        %v2648 = vpop.xlane.xlu0 %2647
        %2649 = vadd.xlane.f32.xlu0 %v2646
        %v2650 = vpop.xlane.xlu0 %2649
        %v2651 = vmul.f32 %v2648, %v891
        %v2652 = vmul.f32 %v2650, %v891
        %v2653 = vadd.f32 %v2651, 1e-05
        %v2654 = vadd.f32 %v2652, 1e-05
        %v2655 = vrsqrt.pop %v2653
        %v2656 = vmul.f32 %v2655, %v2653
        %v2657 = vmul.f32 %v2656, %v2655
        %v2658 = vmul.f32 0.5, %v2657
        %v2659 = vsub.f32 1.5, %v2658
        %v2660 = vmul.f32 %v2655, %v2659
        %vm2661 = vweird.f32 %v2653
        %vm2662 = vweird.f32 %v2655
        %vm2663 = vmor %vm2661, %vm2662
        %v2664 = vsel %vm2663, %v2655, %v2660
        %v2665 = vrsqrt.pop %v2654
        %v2666 = vmul.f32 %v2665, %v2654
        %v2667 = vmul.f32 %v2666, %v2665
        %v2668 = vmul.f32 0.5, %v2667
        %v2669 = vsub.f32 1.5, %v2668
        %v2670 = vmul.f32 %v2665, %v2669
        %vm2671 = vweird.f32 %v2654
        %vm2672 = vweird.f32 %v2665
        %vm2673 = vmor %vm2671, %vm2672
        %v2674 = vsel %vm2673, %v2665, %v2670
        %v2675 = vmul.f32 %v2643, %v2664
        %v2676 = vmul.f32 %v2644, %v2674
        %v2678 = vperm.slane %v2635, 0
        %v2680 = vmul.f32 %v2675, %v2678
        %v2681 = vmul.f32 %v2676, %v2678
        %v2683 = vperm.slane %v2636, 0
        %v2685 = vadd.f32 %v2680, %v2683
        %v2686 = vadd.f32 %v2681, %v2683
        %v2687 = vpack.c.bf16 %v2685, %v2685
        %v2688 = vpack.c.bf16 %v2686, %v2686
        %v2689 = vld [vmem:[%s763] sm:$0xff]
        %v2690 = vld [vmem:[%s763 + $0x8] sm:$0xff]
        %v2691 = vld [vmem:[%s763 + $0x10] sm:$0xff]
        %v2692 = vld [vmem:[%s763 + $0x18] sm:$0xff]
        %v2693 = vld [vmem:[%s763 + $0x20] sm:$0xff]
        %v2694 = vld [vmem:[%s763 + $0x28] sm:$0xff]
        %v2695 = vld [vmem:[%s763 + $0x30] sm:$0xff]
        %v2696 = vld [vmem:[%s763 + $0x38] sm:$0xff]
        %v2697 = vld [vmem:[%s763 + $0x40] sm:$0xff]
        %v2698 = vld [vmem:[%s763 + $0x48] sm:$0xff]
        %v2699 = vld [vmem:[%s763 + $0x50] sm:$0xff]
        %v2700 = vld [vmem:[%s763 + $0x58] sm:$0xff]
        %v2701 = vld [vmem:[%s763 + $0x60] sm:$0xff]
        %v2702 = vld [vmem:[%s763 + $0x68] sm:$0xff]
        %v2703 = vld [vmem:[%s763 + $0x70] sm:$0xff]
        %v2704 = vld [vmem:[%s763 + $0x78] sm:$0xff]
        %v2705 = vld [vmem:[%s763 + $0x80] sm:$0xff]
        %v2706 = vld [vmem:[%s763 + $0x88] sm:$0xff]
        %v2707 = vld [vmem:[%s763 + $0x90] sm:$0xff]
        %v2708 = vld [vmem:[%s763 + $0x98] sm:$0xff]
        %v2709 = vld [vmem:[%s763 + $0xa0] sm:$0xff]
        %v2710 = vld [vmem:[%s763 + $0xa8] sm:$0xff]
        %v2711 = vld [vmem:[%s763 + $0xb0] sm:$0xff]
        %v2712 = vld [vmem:[%s763 + $0xb8] sm:$0xff]
        %v2713 = vld [vmem:[%s763 + $0xc0] sm:$0xff]
        %v2714 = vld [vmem:[%s763 + $0xc8] sm:$0xff]
        %v2715 = vld [vmem:[%s763 + $0xd0] sm:$0xff]
        %v2716 = vld [vmem:[%s763 + $0xd8] sm:$0xff]
        %v2717 = vld [vmem:[%s763 + $0xe0] sm:$0xff]
        %v2718 = vld [vmem:[%s763 + $0xe8] sm:$0xff]
        %v2719 = vld [vmem:[%s763 + $0xf0] sm:$0xff]
        %v2720 = vld [vmem:[%s763 + $0xf8] sm:$0xff]
        %v2721 = vld [vmem:[%s862] sm:$0xf]
        %v2723 = vperm.slane %v2721, 0
        %v2724 = vperm.slane %v2721, 1
        %v2725 = vperm.slane %v2721, 2
        %v2726 = vperm.slane %v2721, 3
        %v2733 = vunpack.c.l.b16 %v2687
        %v2734 = vunpack.c.l.b16 %v2688
        %v2735 = vpack.c.b16 %v2734, %v2733
        %v2769 = vunpack.c.l.b16 %v2689
        %v2770 = vunpack.c.h.b16 %v2689
        %v2771 = vunpack.c.l.b16 %v2690
        %v2772 = vunpack.c.h.b16 %v2690
        %v2773 = vunpack.c.l.b16 %v2691
        %v2774 = vunpack.c.h.b16 %v2691
        %v2775 = vunpack.c.l.b16 %v2692
        %v2776 = vunpack.c.h.b16 %v2692
        %v2777 = vunpack.c.l.b16 %v2693
        %v2778 = vunpack.c.h.b16 %v2693
        %v2779 = vunpack.c.l.b16 %v2694
        %v2780 = vunpack.c.h.b16 %v2694
        %v2781 = vunpack.c.l.b16 %v2695
        %v2782 = vunpack.c.h.b16 %v2695
        %v2783 = vunpack.c.l.b16 %v2696
        %v2784 = vunpack.c.h.b16 %v2696
        %v2785 = vunpack.c.l.b16 %v2697
        %v2786 = vunpack.c.h.b16 %v2697
        %v2787 = vunpack.c.l.b16 %v2698
        %v2788 = vunpack.c.h.b16 %v2698
        %v2789 = vunpack.c.l.b16 %v2699
        %v2790 = vunpack.c.h.b16 %v2699
        %v2791 = vunpack.c.l.b16 %v2700
        %v2792 = vunpack.c.h.b16 %v2700
        %v2793 = vunpack.c.l.b16 %v2701
        %v2794 = vunpack.c.h.b16 %v2701
        %v2795 = vunpack.c.l.b16 %v2702
        %v2796 = vunpack.c.h.b16 %v2702
        %v2797 = vunpack.c.l.b16 %v2703
        %v2798 = vunpack.c.h.b16 %v2703
        %v2799 = vunpack.c.l.b16 %v2704
        %v2800 = vunpack.c.h.b16 %v2704
        %v2801 = vunpack.c.l.b16 %v2705
        %v2802 = vunpack.c.h.b16 %v2705
        %v2803 = vunpack.c.l.b16 %v2706
        %v2804 = vunpack.c.h.b16 %v2706
        %v2805 = vunpack.c.l.b16 %v2707
        %v2806 = vunpack.c.h.b16 %v2707
        %v2807 = vunpack.c.l.b16 %v2708
        %v2808 = vunpack.c.h.b16 %v2708
        %v2809 = vunpack.c.l.b16 %v2709
        %v2810 = vunpack.c.h.b16 %v2709
        %v2811 = vunpack.c.l.b16 %v2710
        %v2812 = vunpack.c.h.b16 %v2710
        %v2813 = vunpack.c.l.b16 %v2711
        %v2814 = vunpack.c.h.b16 %v2711
        %v2815 = vunpack.c.l.b16 %v2712
        %v2816 = vunpack.c.h.b16 %v2712
        %v2817 = vunpack.c.l.b16 %v2713
        %v2818 = vunpack.c.h.b16 %v2713
        %v2819 = vunpack.c.l.b16 %v2714
        %v2820 = vunpack.c.h.b16 %v2714
        %v2821 = vunpack.c.l.b16 %v2715
        %v2822 = vunpack.c.h.b16 %v2715
        %v2823 = vunpack.c.l.b16 %v2716
        %v2824 = vunpack.c.h.b16 %v2716
        %v2825 = vunpack.c.l.b16 %v2717
        %v2826 = vunpack.c.h.b16 %v2717
        %v2827 = vunpack.c.l.b16 %v2718
        %v2828 = vunpack.c.h.b16 %v2718
        %v2829 = vunpack.c.l.b16 %v2719
        %v2830 = vunpack.c.h.b16 %v2719
        %v2831 = vunpack.c.l.b16 %v2720
        %v2832 = vunpack.c.h.b16 %v2720
        %v2833 = vpack.c.b16 %v2773, %v2769
        %v2834 = vpack.c.b16 %v2774, %v2770
        %v2835 = vpack.c.b16 %v2775, %v2771
        %v2836 = vpack.c.b16 %v2776, %v2772
        %v2837 = vpack.c.b16 %v2781, %v2777
        %v2838 = vpack.c.b16 %v2782, %v2778
        %v2839 = vpack.c.b16 %v2783, %v2779
        %v2840 = vpack.c.b16 %v2784, %v2780
        %v2841 = vpack.c.b16 %v2789, %v2785
        %v2842 = vpack.c.b16 %v2790, %v2786
        %v2843 = vpack.c.b16 %v2791, %v2787
        %v2844 = vpack.c.b16 %v2792, %v2788
        %v2845 = vpack.c.b16 %v2797, %v2793
        %v2846 = vpack.c.b16 %v2798, %v2794
        %v2847 = vpack.c.b16 %v2799, %v2795
        %v2848 = vpack.c.b16 %v2800, %v2796
        %v2849 = vpack.c.b16 %v2805, %v2801
        %v2850 = vpack.c.b16 %v2806, %v2802
        %v2851 = vpack.c.b16 %v2807, %v2803
        %v2852 = vpack.c.b16 %v2808, %v2804
        %v2853 = vpack.c.b16 %v2813, %v2809
        %v2854 = vpack.c.b16 %v2814, %v2810
        %v2855 = vpack.c.b16 %v2815, %v2811
        %v2856 = vpack.c.b16 %v2816, %v2812
        %v2857 = vpack.c.b16 %v2821, %v2817
        %v2858 = vpack.c.b16 %v2822, %v2818
        %v2859 = vpack.c.b16 %v2823, %v2819
        %v2860 = vpack.c.b16 %v2824, %v2820
        %v2861 = vpack.c.b16 %v2829, %v2825
        %v2862 = vpack.c.b16 %v2830, %v2826
        %v2863 = vpack.c.b16 %v2831, %v2827
        %v2864 = vpack.c.b16 %v2832, %v2828
        %2897 = vmatpush.bf16.msra.mxu0 %v2861
        %2898 = vmatpush.bf16.msra.mxu0 %v2857
        %2899 = vmatpush.bf16.msra.mxu0 %v2853
        %2900 = vmatpush.bf16.msra.mxu0 %v2849
        %2901 = vmatpush.bf16.msra.mxu0 %v2845
        %2902 = vmatpush.bf16.msra.mxu0 %v2841
        %2903 = vmatpush.bf16.msra.mxu0 %v2837
        %2904 = vmatpush.bf16.msra.mxu0 %v2833
        %2905 = vmatmul.bf16.gmra.mxu0 %v2735
        %v2906 = vpop.f32.mrf.mxu0
        %v2907 = vadd.f32 %v2723, %v2906
        %v2908 = vpop.f32.mrf.mxu0
        %v2909 = vadd.f32 %v2723, %v2908
        %2910 = vdwg.mxu0
        %2911 = vmatpush.bf16.msra.mxu0 %v2862
        %2912 = vmatpush.bf16.msra.mxu0 %v2858
        %2913 = vmatpush.bf16.msra.mxu0 %v2854
        %2914 = vmatpush.bf16.msra.mxu0 %v2850
        %2915 = vmatpush.bf16.msra.mxu0 %v2846
        %2916 = vmatpush.bf16.msra.mxu0 %v2842
        %2917 = vmatpush.bf16.msra.mxu0 %v2838
        %2918 = vmatpush.bf16.msra.mxu0 %v2834
        %2919 = vmatmul.bf16.gmra.mxu0 %v2735
        %v2920 = vpop.f32.mrf.mxu0
        %v2921 = vadd.f32 %v2724, %v2920
        %v2922 = vpop.f32.mrf.mxu0
        %v2923 = vadd.f32 %v2724, %v2922
        %2924 = vdwg.mxu0
        %2925 = vmatpush.bf16.msra.mxu0 %v2863
        %2926 = vmatpush.bf16.msra.mxu0 %v2859
        %2927 = vmatpush.bf16.msra.mxu0 %v2855
        %2928 = vmatpush.bf16.msra.mxu0 %v2851
        %2929 = vmatpush.bf16.msra.mxu0 %v2847
        %2930 = vmatpush.bf16.msra.mxu0 %v2843
        %2931 = vmatpush.bf16.msra.mxu0 %v2839
        %2932 = vmatpush.bf16.msra.mxu0 %v2835
        %2933 = vmatmul.bf16.gmra.mxu0 %v2735
        %v2934 = vpop.f32.mrf.mxu0
        %v2935 = vadd.f32 %v2725, %v2934
        %v2936 = vpop.f32.mrf.mxu0
        %v2937 = vadd.f32 %v2725, %v2936
        %2938 = vdwg.mxu0
        %2939 = vmatpush.bf16.msra.mxu0 %v2864
        %2940 = vmatpush.bf16.msra.mxu0 %v2860
        %2941 = vmatpush.bf16.msra.mxu0 %v2856
        %2942 = vmatpush.bf16.msra.mxu0 %v2852
        %2943 = vmatpush.bf16.msra.mxu0 %v2848
        %2944 = vmatpush.bf16.msra.mxu0 %v2844
        %2945 = vmatpush.bf16.msra.mxu0 %v2840
        %2946 = vmatpush.bf16.msra.mxu0 %v2836
        %2947 = vmatmul.bf16.gmra.mxu0 %v2735
        %v2948 = vpop.f32.mrf.mxu0
        %v2949 = vadd.f32 %v2726, %v2948
        %v2950 = vpop.f32.mrf.mxu0
        %v2951 = vadd.f32 %v2726, %v2950
        %2952 = vdwg.mxu0
        %v2953 = vmax.f32 %v2907, 0.0
        %v2954 = vmax.f32 %v2921, 0.0
        %v2955 = vmax.f32 %v2935, 0.0
        %v2956 = vmax.f32 %v2949, 0.0
        %v2957 = vmax.f32 %v2909, 0.0
        %v2958 = vmax.f32 %v2923, 0.0
        %v2959 = vmax.f32 %v2937, 0.0
        %v2960 = vmax.f32 %v2951, 0.0
        %v2961 = vpack.c.bf16 %v2957, %v2953
        %v2962 = vpack.c.bf16 %v2958, %v2954
        %v2963 = vpack.c.bf16 %v2959, %v2955
        %v2964 = vpack.c.bf16 %v2960, %v2956
        %v2965 = vld [vmem:[%s773] sm:$0xf]
        %v2966 = vld [vmem:[%s773 + $0x4] sm:$0xf]
        %v2967 = vld [vmem:[%s773 + $0x8] sm:$0xf]
        %v2968 = vld [vmem:[%s773 + $0xc] sm:$0xf]
        %v2969 = vld [vmem:[%s773 + $0x10] sm:$0xf]
        %v2970 = vld [vmem:[%s773 + $0x14] sm:$0xf]
        %v2971 = vld [vmem:[%s773 + $0x18] sm:$0xf]
        %v2972 = vld [vmem:[%s773 + $0x1c] sm:$0xf]
        %v2973 = vld [vmem:[%s773 + $0x20] sm:$0xf]
        %v2974 = vld [vmem:[%s773 + $0x24] sm:$0xf]
        %v2975 = vld [vmem:[%s773 + $0x28] sm:$0xf]
        %v2976 = vld [vmem:[%s773 + $0x2c] sm:$0xf]
        %v2977 = vld [vmem:[%s773 + $0x30] sm:$0xf]
        %v2978 = vld [vmem:[%s773 + $0x34] sm:$0xf]
        %v2979 = vld [vmem:[%s773 + $0x38] sm:$0xf]
        %v2980 = vld [vmem:[%s773 + $0x3c] sm:$0xf]
        %v2981 = vld [vmem:[%s773 + $0x40] sm:$0xf]
        %v2982 = vld [vmem:[%s773 + $0x44] sm:$0xf]
        %v2983 = vld [vmem:[%s773 + $0x48] sm:$0xf]
        %v2984 = vld [vmem:[%s773 + $0x4c] sm:$0xf]
        %v2985 = vld [vmem:[%s773 + $0x50] sm:$0xf]
        %v2986 = vld [vmem:[%s773 + $0x54] sm:$0xf]
        %v2987 = vld [vmem:[%s773 + $0x58] sm:$0xf]
        %v2988 = vld [vmem:[%s773 + $0x5c] sm:$0xf]
        %v2989 = vld [vmem:[%s773 + $0x60] sm:$0xf]
        %v2990 = vld [vmem:[%s773 + $0x64] sm:$0xf]
        %v2991 = vld [vmem:[%s773 + $0x68] sm:$0xf]
        %v2992 = vld [vmem:[%s773 + $0x6c] sm:$0xf]
        %v2993 = vld [vmem:[%s773 + $0x70] sm:$0xf]
        %v2994 = vld [vmem:[%s773 + $0x74] sm:$0xf]
        %v2995 = vld [vmem:[%s773 + $0x78] sm:$0xf]
        %v2996 = vld [vmem:[%s773 + $0x7c] sm:$0xf]
        %v2997 = vld [vmem:[%s773 + $0x80] sm:$0xf]
        %v2998 = vld [vmem:[%s773 + $0x84] sm:$0xf]
        %v2999 = vld [vmem:[%s773 + $0x88] sm:$0xf]
        %v3000 = vld [vmem:[%s773 + $0x8c] sm:$0xf]
        %v3001 = vld [vmem:[%s773 + $0x90] sm:$0xf]
        %v3002 = vld [vmem:[%s773 + $0x94] sm:$0xf]
        %v3003 = vld [vmem:[%s773 + $0x98] sm:$0xf]
        %v3004 = vld [vmem:[%s773 + $0x9c] sm:$0xf]
        %v3005 = vld [vmem:[%s773 + $0xa0] sm:$0xf]
        %v3006 = vld [vmem:[%s773 + $0xa4] sm:$0xf]
        %v3007 = vld [vmem:[%s773 + $0xa8] sm:$0xf]
        %v3008 = vld [vmem:[%s773 + $0xac] sm:$0xf]
        %v3009 = vld [vmem:[%s773 + $0xb0] sm:$0xf]
        %v3010 = vld [vmem:[%s773 + $0xb4] sm:$0xf]
        %v3011 = vld [vmem:[%s773 + $0xb8] sm:$0xf]
        %v3012 = vld [vmem:[%s773 + $0xbc] sm:$0xf]
        %v3013 = vld [vmem:[%s773 + $0xc0] sm:$0xf]
        %v3014 = vld [vmem:[%s773 + $0xc4] sm:$0xf]
        %v3015 = vld [vmem:[%s773 + $0xc8] sm:$0xf]
        %v3016 = vld [vmem:[%s773 + $0xcc] sm:$0xf]
        %v3017 = vld [vmem:[%s773 + $0xd0] sm:$0xf]
        %v3018 = vld [vmem:[%s773 + $0xd4] sm:$0xf]
        %v3019 = vld [vmem:[%s773 + $0xd8] sm:$0xf]
        %v3020 = vld [vmem:[%s773 + $0xdc] sm:$0xf]
        %v3021 = vld [vmem:[%s773 + $0xe0] sm:$0xf]
        %v3022 = vld [vmem:[%s773 + $0xe4] sm:$0xf]
        %v3023 = vld [vmem:[%s773 + $0xe8] sm:$0xf]
        %v3024 = vld [vmem:[%s773 + $0xec] sm:$0xf]
        %v3025 = vld [vmem:[%s773 + $0xf0] sm:$0xf]
        %v3026 = vld [vmem:[%s773 + $0xf4] sm:$0xf]
        %v3027 = vld [vmem:[%s773 + $0xf8] sm:$0xf]
        %v3028 = vld [vmem:[%s773 + $0xfc] sm:$0xf]
        %v3029 = vld [vmem:[%s865] sm:$0x1]
        %v3031 = vperm.slane %v3029, 0
        %v3097 = vunpack.c.l.b16 %v2965
        %v3098 = vunpack.c.l.b16 %v2966
        %v3099 = vunpack.c.l.b16 %v2967
        %v3100 = vunpack.c.l.b16 %v2968
        %v3101 = vunpack.c.l.b16 %v2969
        %v3102 = vunpack.c.l.b16 %v2970
        %v3103 = vunpack.c.l.b16 %v2971
        %v3104 = vunpack.c.l.b16 %v2972
        %v3105 = vunpack.c.l.b16 %v2973
        %v3106 = vunpack.c.l.b16 %v2974
        %v3107 = vunpack.c.l.b16 %v2975
        %v3108 = vunpack.c.l.b16 %v2976
        %v3109 = vunpack.c.l.b16 %v2977
        %v3110 = vunpack.c.l.b16 %v2978
        %v3111 = vunpack.c.l.b16 %v2979
        %v3112 = vunpack.c.l.b16 %v2980
        %v3113 = vunpack.c.l.b16 %v2981
        %v3114 = vunpack.c.l.b16 %v2982
        %v3115 = vunpack.c.l.b16 %v2983
        %v3116 = vunpack.c.l.b16 %v2984
        %v3117 = vunpack.c.l.b16 %v2985
        %v3118 = vunpack.c.l.b16 %v2986
        %v3119 = vunpack.c.l.b16 %v2987
        %v3120 = vunpack.c.l.b16 %v2988
        %v3121 = vunpack.c.l.b16 %v2989
        %v3122 = vunpack.c.l.b16 %v2990
        %v3123 = vunpack.c.l.b16 %v2991
        %v3124 = vunpack.c.l.b16 %v2992
        %v3125 = vunpack.c.l.b16 %v2993
        %v3126 = vunpack.c.l.b16 %v2994
        %v3127 = vunpack.c.l.b16 %v2995
        %v3128 = vunpack.c.l.b16 %v2996
        %v3129 = vunpack.c.l.b16 %v2997
        %v3130 = vunpack.c.l.b16 %v2998
        %v3131 = vunpack.c.l.b16 %v2999
        %v3132 = vunpack.c.l.b16 %v3000
        %v3133 = vunpack.c.l.b16 %v3001
        %v3134 = vunpack.c.l.b16 %v3002
        %v3135 = vunpack.c.l.b16 %v3003
        %v3136 = vunpack.c.l.b16 %v3004
        %v3137 = vunpack.c.l.b16 %v3005
        %v3138 = vunpack.c.l.b16 %v3006
        %v3139 = vunpack.c.l.b16 %v3007
        %v3140 = vunpack.c.l.b16 %v3008
        %v3141 = vunpack.c.l.b16 %v3009
        %v3142 = vunpack.c.l.b16 %v3010
        %v3143 = vunpack.c.l.b16 %v3011
        %v3144 = vunpack.c.l.b16 %v3012
        %v3145 = vunpack.c.l.b16 %v3013
        %v3146 = vunpack.c.l.b16 %v3014
        %v3147 = vunpack.c.l.b16 %v3015
        %v3148 = vunpack.c.l.b16 %v3016
        %v3149 = vunpack.c.l.b16 %v3017
        %v3150 = vunpack.c.l.b16 %v3018
        %v3151 = vunpack.c.l.b16 %v3019
        %v3152 = vunpack.c.l.b16 %v3020
        %v3153 = vunpack.c.l.b16 %v3021
        %v3154 = vunpack.c.l.b16 %v3022
        %v3155 = vunpack.c.l.b16 %v3023
        %v3156 = vunpack.c.l.b16 %v3024
        %v3157 = vunpack.c.l.b16 %v3025
        %v3158 = vunpack.c.l.b16 %v3026
        %v3159 = vunpack.c.l.b16 %v3027
        %v3160 = vunpack.c.l.b16 %v3028
        %v3161 = vpack.c.b16 %v3098, %v3097
        %v3162 = vpack.c.b16 %v3100, %v3099
        %v3163 = vpack.c.b16 %v3102, %v3101
        %v3164 = vpack.c.b16 %v3104, %v3103
        %v3165 = vpack.c.b16 %v3106, %v3105
        %v3166 = vpack.c.b16 %v3108, %v3107
        %v3167 = vpack.c.b16 %v3110, %v3109
        %v3168 = vpack.c.b16 %v3112, %v3111
        %v3169 = vpack.c.b16 %v3114, %v3113
        %v3170 = vpack.c.b16 %v3116, %v3115
        %v3171 = vpack.c.b16 %v3118, %v3117
        %v3172 = vpack.c.b16 %v3120, %v3119
        %v3173 = vpack.c.b16 %v3122, %v3121
        %v3174 = vpack.c.b16 %v3124, %v3123
        %v3175 = vpack.c.b16 %v3126, %v3125
        %v3176 = vpack.c.b16 %v3128, %v3127
        %v3177 = vpack.c.b16 %v3130, %v3129
        %v3178 = vpack.c.b16 %v3132, %v3131
        %v3179 = vpack.c.b16 %v3134, %v3133
        %v3180 = vpack.c.b16 %v3136, %v3135
        %v3181 = vpack.c.b16 %v3138, %v3137
        %v3182 = vpack.c.b16 %v3140, %v3139
        %v3183 = vpack.c.b16 %v3142, %v3141
        %v3184 = vpack.c.b16 %v3144, %v3143
        %v3185 = vpack.c.b16 %v3146, %v3145
        %v3186 = vpack.c.b16 %v3148, %v3147
        %v3187 = vpack.c.b16 %v3150, %v3149
        %v3188 = vpack.c.b16 %v3152, %v3151
        %v3189 = vpack.c.b16 %v3154, %v3153
        %v3190 = vpack.c.b16 %v3156, %v3155
        %v3191 = vpack.c.b16 %v3158, %v3157
        %v3192 = vpack.c.b16 %v3160, %v3159
        %3225 = vmatpush.bf16.msra.mxu0 %v3168
        %3226 = vmatpush.bf16.msra.mxu0 %v3167
        %3227 = vmatpush.bf16.msra.mxu0 %v3166
        %3228 = vmatpush.bf16.msra.mxu0 %v3165
        %3229 = vmatpush.bf16.msra.mxu0 %v3164
        %3230 = vmatpush.bf16.msra.mxu0 %v3163
        %3231 = vmatpush.bf16.msra.mxu0 %v3162
        %3232 = vmatpush.bf16.msra.mxu0 %v3161
        %3233 = vmatmul.bf16.gmra.mxu0 %v2961
        %v3234 = vpop.f32.mrf.mxu0
        %v3235 = vadd.f32 %v3031, %v3234
        %v3236 = vpop.f32.mrf.mxu0
        %v3237 = vadd.f32 %v3031, %v3236
        %3238 = vdwg.mxu0
        %3239 = vmatpush.bf16.msra.mxu0 %v3176
        %3240 = vmatpush.bf16.msra.mxu0 %v3175
        %3241 = vmatpush.bf16.msra.mxu0 %v3174
        %3242 = vmatpush.bf16.msra.mxu0 %v3173
        %3243 = vmatpush.bf16.msra.mxu0 %v3172
        %3244 = vmatpush.bf16.msra.mxu0 %v3171
        %3245 = vmatpush.bf16.msra.mxu0 %v3170
        %3246 = vmatpush.bf16.msra.mxu0 %v3169
        %3247 = vmatmul.bf16.gmra.mxu0 %v2962
        %v3248 = vpop.f32.mrf.mxu0
        %v3249 = vadd.f32 %v3235, %v3248
        %v3250 = vpop.f32.mrf.mxu0
        %v3251 = vadd.f32 %v3237, %v3250
        %3252 = vdwg.mxu0
        %3253 = vmatpush.bf16.msra.mxu0 %v3184
        %3254 = vmatpush.bf16.msra.mxu0 %v3183
        %3255 = vmatpush.bf16.msra.mxu0 %v3182
        %3256 = vmatpush.bf16.msra.mxu0 %v3181
        %3257 = vmatpush.bf16.msra.mxu0 %v3180
        %3258 = vmatpush.bf16.msra.mxu0 %v3179
        %3259 = vmatpush.bf16.msra.mxu0 %v3178
        %3260 = vmatpush.bf16.msra.mxu0 %v3177
        %3261 = vmatmul.bf16.gmra.mxu0 %v2963
        %v3262 = vpop.f32.mrf.mxu0
        %v3263 = vadd.f32 %v3249, %v3262
        %v3264 = vpop.f32.mrf.mxu0
        %v3265 = vadd.f32 %v3251, %v3264
        %3266 = vdwg.mxu0
        %3267 = vmatpush.bf16.msra.mxu0 %v3192
        %3268 = vmatpush.bf16.msra.mxu0 %v3191
        %3269 = vmatpush.bf16.msra.mxu0 %v3190
        %3270 = vmatpush.bf16.msra.mxu0 %v3189
        %3271 = vmatpush.bf16.msra.mxu0 %v3188
        %3272 = vmatpush.bf16.msra.mxu0 %v3187
        %3273 = vmatpush.bf16.msra.mxu0 %v3186
        %3274 = vmatpush.bf16.msra.mxu0 %v3185
        %3275 = vmatmul.bf16.gmra.mxu0 %v2964
        %v3276 = vpop.f32.mrf.mxu0
        %v3277 = vadd.f32 %v3263, %v3276
        %v3278 = vpop.f32.mrf.mxu0
        %v3279 = vadd.f32 %v3265, %v3278
        %3280 = vdwg.mxu0
        %v3281 = vadd.f32 %v2633, %v3277
        %v3282 = vadd.f32 %v2634, %v3279
        %3283 = vst [vmem:[#allocation2] sm:$0xff] %v3281
        %3284 = vst [vmem:[#allocation2 + $0x8] sm:$0xff] %v3282
        %p3285 = scmp.eq.s32.totalorder %s34, 1
        // Predicated region
        $region129: #{tpu_custom_call.1} parent=79 // pred_check
          %p3286 = pneg %p3285
        $region130: #{tpu_custom_call.1} parent=79 // pred_check_branch
          %3288 = sbr.rel (%p3286) target = $region132
        $region131: #{tpu_custom_call.1} parent=79 // pred_region
          %v3289 = vld [vmem:[%s13] sm:$0x1]
          %v3290 = vld [vmem:[%s14] sm:$0x1]
          %3291 = vadd.xlane.f32.xlu0 %v3281
          %v3292 = vpop.xlane.xlu0 %3291
          %3293 = vadd.xlane.f32.xlu0 %v3282
          %v3294 = vpop.xlane.xlu0 %3293
          %v3295 = vmul.f32 %v3292, %v891
          %v3296 = vmul.f32 %v3294, %v891
          %v3297 = vsub.f32 %v3281, %v3295
          %v3298 = vsub.f32 %v3282, %v3296
          %v3299 = vmul.f32 %v3297, %v3297
          %v3300 = vmul.f32 %v3298, %v3298
          %3301 = vadd.xlane.f32.xlu0 %v3299
          %v3302 = vpop.xlane.xlu0 %3301
          %3303 = vadd.xlane.f32.xlu0 %v3300
          %v3304 = vpop.xlane.xlu0 %3303
          %v3305 = vmul.f32 %v3302, %v891
          %v3306 = vmul.f32 %v3304, %v891
          %v3307 = vadd.f32 %v3305, 1e-05
          %v3308 = vadd.f32 %v3306, 1e-05
          %v3309 = vrsqrt.pop %v3307
          %v3310 = vmul.f32 %v3309, %v3307
          %v3311 = vmul.f32 %v3310, %v3309
          %v3312 = vmul.f32 0.5, %v3311
          %v3313 = vsub.f32 1.5, %v3312
          %v3314 = vmul.f32 %v3309, %v3313
          %vm3315 = vweird.f32 %v3307
          %vm3316 = vweird.f32 %v3309
          %vm3317 = vmor %vm3315, %vm3316
          %v3318 = vsel %vm3317, %v3309, %v3314
          %v3319 = vrsqrt.pop %v3308
          %v3320 = vmul.f32 %v3319, %v3308
          %v3321 = vmul.f32 %v3320, %v3319
          %v3322 = vmul.f32 0.5, %v3321
          %v3323 = vsub.f32 1.5, %v3322
          %v3324 = vmul.f32 %v3319, %v3323
          %vm3325 = vweird.f32 %v3308
          %vm3326 = vweird.f32 %v3319
          %vm3327 = vmor %vm3325, %vm3326
          %v3328 = vsel %vm3327, %v3319, %v3324
          %v3329 = vmul.f32 %v3297, %v3318
          %v3330 = vmul.f32 %v3298, %v3328
          %v3332 = vperm.slane %v3289, 0
          %v3334 = vmul.f32 %v3329, %v3332
          %v3335 = vmul.f32 %v3330, %v3332
          %v3337 = vperm.slane %v3290, 0
          %v3339 = vadd.f32 %v3334, %v3337
          %v3340 = vadd.f32 %v3335, %v3337
          %v3341 = vpack.c.bf16 %v3339, %v3339
          %v3342 = vpack.c.bf16 %v3340, %v3340
          %3343 = vst [vmem:[#allocation17] sm:$0xf] %v3341
          %3344 = vst [vmem:[#allocation17 + $0x4] sm:$0xf] %v3342
        $region132: #{tpu_custom_call.1} parent=79 // pred_fallthru
          _
        // Predicated region
        $region133: #{tpu_custom_call.1} parent=79 // pred_check
          %p3345 = pneg %p434
        $region134: #{tpu_custom_call.1} parent=79 // pred_check_branch
          %3347 = sbr.rel (%p3345) target = $region136
        $region135: #{tpu_custom_call.1} parent=79 // pred_region
          %s3348 = smul.u32 2, %s33
          %3350 = vsyncadd [#allocation5], 0
          %s3351 = smul.addr %s3348, 4
          %s3352 = scalar_lea.hbm %s15, %s3351
          %s3353 = sshll.u32 [#allocation17], 4
          %s3354 = int_to_ptr.vmem [resolvable:$true] %s3353
          %s3355 = sshll.u32 %s3352, 4
          %s3356 = int_to_ptr.hbm [resolvable:$true] %s3355
          %3361 = dma.vmem_to_hbm [thread:$0]  %s3354, 128, %s3356, [#allocation5], 64, 64, 4
        $region136: #{tpu_custom_call.1} parent=79 // pred_fallthru
          _
        // Predicated region
        $region137: #{tpu_custom_call.1} parent=79 // pred_check
          %p3362 = pneg %p434
        $region138: #{tpu_custom_call.1} parent=79 // pred_check_branch
          %3364 = sbr.rel (%p3362) target = $region140
        $region139: #{tpu_custom_call.1} parent=79 // pred_region
          %3366 = dma.done [#allocation5], 128
        $region140: #{tpu_custom_call.1} parent=79 // pred_fallthru
          _
      $region80: #{tpu_custom_call.1} parent=5 // pred_fallthru
        _
      %p3367 = scmp.le.s32.totalorder 2, %s24
      // Predicated region
      $region141: #{tpu_custom_call.1} parent=5 // pred_check
        %p3368 = pneg %p3367
      $region142: #{tpu_custom_call.1} parent=5 // pred_check_branch
        %3370 = sbr.rel (%p3368) target = $region144
      $region143: #{tpu_custom_call.1} parent=5 // pred_region
        %s3371 = ssub.s32 %s24, 2
      $region144: #{tpu_custom_call.1} parent=5 // pred_fallthru
        _
    $region6: #{tpu_custom_call.1} parent=1 // loop_footer
      %s28 = sadd.s32 1, %s24
    $region7: #{tpu_custom_call.1} parent=1 // loop_footer_branch
      %23 = sbr.rel target = $region3
    $region8: #{tpu_custom_call.1} parent=1 // loop_exit
      _
    %3372 = vsyncpa [#allocation4], 1
    %s3373 = scalar_lea.sflag [#allocation4], 1
    %3374 = vsyncpa %s3373, 1
    %3375 = vsyncpa [#allocation7], 1
    %3376 = vsyncpa [#allocation5], 1
    %s3377 = scalar_lea.sflag [#allocation5], 1
    %3378 = vsyncpa %s3377, 1

</llo_original>
